<compile_context>
chip_gen: v7x
topology: tpu7x:2x2x1
jax: 0.10.0
libtpu: 0.0.40
codegen_flags: <defaults>
</compile_context>

<pallas_src>
import jax
import jax.numpy as jnp
from jax import lax
from jax.experimental import pallas as pl
from jax.experimental.pallas import tpu as pltpu

LANE = 128
SUBLANE = 8
LPAD = 8          # sublane-aligned left halo column count for the h1 scratch


def _round_up(v, m):
    return (v + m - 1) // m * m


# ----------------------------------------------------------------------------
# Kernel: one image per grid step.  conv1 / conv2 via kw-folded shifted
# matmuls over row chunks, 1x1 shortcut matmul, bias adds, residual, ReLUs.
# ----------------------------------------------------------------------------
def _make_kernel(H, W, Ho, Wo, Cinp, Cpp, stride, has_shortcut, Wd, Whp,
                 row_chunks):
    s = stride
    bf16 = jnp.bfloat16

    def col0(kw):
        # Column offset of 3x3 tap `kw` in the stride-deinterleaved x layout:
        # padded column (wo*s + kw)  ->  deinterleaved column (kw%s)*Wd + kw//s + wo
        return (kw % s) * Wd + (kw // s)

    # Deinterleaved column offset of padded column (wo*s + 1)  (the shortcut tap).
    sc_col0 = (1 % s) * Wd + (1 // s)

    def kernel(x_ref, w1_ref, b1_ref, w2_ref, b2_ref, *rest):
        if has_shortcut:
            wsc_ref, bsc_ref, out_ref, h1pad_ref = rest
        else:
            out_ref, h1pad_ref = rest

        # ---- h1 padded scratch: re-zero only the halo strips (interior is
        #      fully overwritten below).  All strips are sublane-aligned bf16.
        h1pad_ref[0:1, :, :] = jnp.zeros((1, Whp, Cpp), bf16)
        h1pad_ref[Ho + 1:Ho + 2, :, :] = jnp.zeros((1, Whp, Cpp), bf16)
        h1pad_ref[:, 0:LPAD, :] = jnp.zeros((Ho + 2, LPAD, Cpp), bf16)
        h1pad_ref[:, LPAD + Wo:Whp, :] = jnp.zeros(
            (Ho + 2, Whp - LPAD - Wo, Cpp), bf16)

        # Pre-padded, column-deinterleaved input block (DMA'd with halo in
        # place).  One bf16 cast for the matmul operands; the f32 block is
        # kept only for the exact identity residual add.
        xp = x_ref[0]                                  # (H+2, s*Wd, Cinp) f32
        xb = xp.astype(bf16)

        # ---- conv1 (3x3, stride s, pad 1) + bn1 bias + relu, row-chunked ----
        for r0, tr in row_chunks:
            rows_x = (tr - 1) * s + 3
            xs = xb[r0 * s: r0 * s + rows_x]           # (rows_x, s*Wd, Cinp)
            a1 = jnp.concatenate(
                [xs[:, col0(kw): col0(kw) + Wo, :] for kw in range(3)],
                axis=-1)                               # (rows_x, Wo, 3*Cinp) bf16
            acc = jnp.zeros((tr * Wo, Cpp), jnp.float32)
            for kh in range(3):
                m = a1[kh: kh + (tr - 1) * s + 1: s].reshape(tr * Wo, 3 * Cinp)
                acc = acc + jnp.dot(m, w1_ref[kh],
                                    preferred_element_type=jnp.float32)
            h1 = jnp.maximum(acc + b1_ref[...], 0.0)   # bn1 (scale folded) + relu
            # dropout (p=0.5): eval-mode identity
            h1pad_ref[1 + r0: 1 + r0 + tr, LPAD:LPAD + Wo, :] = (
                h1.astype(bf16).reshape(tr, Wo, Cpp))  # aligned lane-dense store

        # ---- conv2 (3x3, stride 1, pad 1) + bn2 bias + shortcut + relu -------
        for r0, tr in row_chunks:
            hs = h1pad_ref[r0: r0 + tr + 2]            # (tr+2, Whp, Cpp) bf16
            a2 = jnp.concatenate(
                [hs[:, LPAD - 1 + kw: LPAD - 1 + kw + Wo, :] for kw in range(3)],
                axis=-1)                               # (tr+2, Wo, 3*Cpp) bf16
            acc = jnp.zeros((tr * Wo, Cpp), jnp.float32)
            for kh in range(3):
                m = a2[kh: kh + tr].reshape(tr * Wo, 3 * Cpp)
                acc = acc + jnp.dot(m, w2_ref[kh],
                                    preferred_element_type=jnp.float32)
            h2 = acc + b2_ref[...]                     # bn2 (scale folded)
            # dropout (p=0.5): eval-mode identity

            if has_shortcut:
                xsc = xb[1 + r0 * s: 1 + r0 * s + (tr - 1) * s + 1: s,
                         sc_col0: sc_col0 + Wo, :]     # (tr, Wo, Cinp) bf16
                sc = jnp.dot(xsc.reshape(tr * Wo, Cinp), wsc_ref[...],
                             preferred_element_type=jnp.float32) + bsc_ref[...]
            else:
                xsc = xp[1 + r0: 1 + r0 + tr, sc_col0: sc_col0 + Wo, :]
                sc = xsc.reshape(tr * Wo, Cinp)        # identity, exact f32

            out = jnp.maximum(h2 + sc, 0.0)
            out_ref[0, r0: r0 + tr, :, :] = out.reshape(tr, Wo, Cpp)

    return kernel


def _bn_fold(gamma, beta, mean, var, eps=1e-5):
    s = gamma / jnp.sqrt(var + eps)
    return s, beta - mean * s


# ----------------------------------------------------------------------------
# Wrapper: layout plumbing only (NCHW->NHWC, halo + channel padding, stride
# deinterleave, BN-scale folding into bf16 weights, kw-fold weight reshape).
# All FLOPs happen in-kernel.
# ----------------------------------------------------------------------------
def residual_block_forward(x_nchw, params, stride):
    x = jnp.transpose(x_nchw, (0, 2, 3, 1)).astype(jnp.float32)    # NHWC
    N, H, W, Cin = x.shape
    w1 = params["conv1_w"]                                         # (Cp, Cin, 3, 3)
    Cp = w1.shape[0]
    s = stride
    Ho = (H + 2 - 3) // s + 1
    Wo = (W + 2 - 3) // s + 1
    has_shortcut = (s != 1) or (Cin != Cp)

    Cinp = _round_up(Cin, LANE)                 # lane-dense channels
    Cpp = _round_up(Cp, LANE)
    Wd = _round_up(-(-(W + 2) // s), SUBLANE)   # per-parity deinterleaved width
    Wxp = s * Wd                                # total padded input width
    Whp = _round_up(LPAD + Wo + 1, SUBLANE)     # padded h1 scratch width

    # Pre-pad once in the wrapper (1-px conv halo + lane channel pad), then
    # deinterleave the W axis by the stride so every in-kernel kw tap is a
    # contiguous sublane slice.  The DMA lands the halo in place.
    xpad = jnp.pad(x, ((0, 0), (1, 1), (1, Wxp - W - 1), (0, Cinp - Cin)))
    xd = xpad.reshape(N, H + 2, Wd, s, Cinp)
    xd = jnp.transpose(xd, (0, 1, 3, 2, 4)).reshape(N, H + 2, Wxp, Cinp)

    s1, b1 = _bn_fold(params["bn1_gamma"], params["bn1_beta"],
                      params["bn1_mean"], params["bn1_var"])
    s2, b2 = _bn_fold(params["bn2_gamma"], params["bn2_beta"],
                      params["bn2_mean"], params["bn2_var"])

    def prep_w3x3(w_oihw, scale, ci_p, co_p):
        # OIHW -> HWIO, fold BN scale into output channels, zero-pad channels,
        # fold the kw taps into the contraction dim: (3, 3*ci_p, co_p) bf16.
        w = jnp.transpose(w_oihw, (2, 3, 1, 0)) * scale
        ci, co = w.shape[2], w.shape[3]
        w = jnp.pad(w, ((0, 0), (0, 0), (0, ci_p - ci), (0, co_p - co)))
        return w.reshape(3, 3 * ci_p, co_p).astype(jnp.bfloat16)

    def prep_b(b, co_p):
        return jnp.pad(b, (0, co_p - b.shape[0])).reshape(1, co_p).astype(jnp.float32)

    w1_k = prep_w3x3(w1, s1, Cinp, Cpp)
    b1_k = prep_b(b1, Cpp)
    w2_k = prep_w3x3(params["conv2_w"], s2, Cpp, Cpp)
    b2_k = prep_b(b2, Cpp)

    inputs = [xd, w1_k, b1_k, w2_k, b2_k]
    in_specs = [
        pl.BlockSpec((1, H + 2, Wxp, Cinp), lambda n: (n, 0, 0, 0)),
        pl.BlockSpec((3, 3 * Cinp, Cpp), lambda n: (0, 0, 0)),
        pl.BlockSpec((1, Cpp), lambda n: (0, 0)),
        pl.BlockSpec((3, 3 * Cpp, Cpp), lambda n: (0, 0, 0)),
        pl.BlockSpec((1, Cpp), lambda n: (0, 0)),
    ]
    if has_shortcut:
        ssc, bsc = _bn_fold(params["sc_bn_gamma"], params["sc_bn_beta"],
                            params["sc_bn_mean"], params["sc_bn_var"])
        wsc = jnp.transpose(params["sc_conv_w"], (2, 3, 1, 0))[0, 0] * ssc   # (Cin, Cp)
        wsc_k = jnp.pad(wsc, ((0, Cinp - Cin), (0, Cpp - Cp))).astype(jnp.bfloat16)
        bsc_k = prep_b(bsc, Cpp)
        inputs += [wsc_k, bsc_k]
        in_specs += [pl.BlockSpec((Cinp, Cpp), lambda n: (0, 0)),
                     pl.BlockSpec((1, Cpp), lambda n: (0, 0))]

    # Row-chunking: bound the per-chunk matmul M (and hence the a1/a2 concat
    # and f32 accumulator footprint) to ~512 rows.
    TR = max(1, min(Ho, max(1, 512 // max(Wo, 1))))
    row_chunks = tuple((r0, min(TR, Ho - r0)) for r0 in range(0, Ho, TR))

    # Explicit VMEM budget (double-buffered blocks + scratch + compiler temps),
    # floored at 32 MiB and capped at 64 MiB so it is valid on v5e/v6e/v7x.
    est = 0
    est += 2 * (H + 2) * Wxp * Cinp * 4                 # x block (f32)
    est += 2 * Ho * Wo * Cpp * 4                        # out block (f32)
    est += 2 * (3 * 3 * Cinp * Cpp * 2 + Cpp * 4)       # w1 + b1
    est += 2 * (3 * 3 * Cpp * Cpp * 2 + Cpp * 4)        # w2 + b2
    if has_shortcut:
        est += 2 * (Cinp * Cpp * 2 + Cpp * 4)           # wsc + bsc
    est += (Ho + 2) * Whp * Cpp * 2                     # bf16 h1 scratch
    est += (H + 2) * Wxp * Cinp * 2                     # bf16 copy of x (temp)
    mchunk = TR * Wo
    est += 3 * ((mchunk + 2 * Wo) * 3 * max(Cinp, Cpp) * 2 + mchunk * Cpp * 4)
    vmem_limit = int(min(max(2 * est, 32 << 20), 64 << 20))

    kernel = _make_kernel(H, W, Ho, Wo, Cinp, Cpp, s, has_shortcut, Wd, Whp,
                          row_chunks)
    out = pl.pallas_call(
        kernel,
        out_shape=jax.ShapeDtypeStruct((N, Ho, Wo, Cpp), jnp.float32),
        grid_spec=pltpu.PrefetchScalarGridSpec(
            num_scalar_prefetch=0,
            grid=(N,),
            in_specs=in_specs,
            out_specs=pl.BlockSpec((1, Ho, Wo, Cpp), lambda n: (n, 0, 0, 0)),
            scratch_shapes=[
                pltpu.VMEM((Ho + 2, Whp, Cpp), jnp.bfloat16),   # padded h1
            ],
        ),
        compiler_params=pltpu.CompilerParams(
            dimension_semantics=("parallel",),
            vmem_limit_bytes=vmem_limit),
    )(*inputs)
    out = out[:, :, :, :Cp]                      # drop channel padding
    return jnp.transpose(out, (0, 3, 1, 2))      # back to NCHW (comparison only)


# ----------------------------------------------------------------------------
# Deterministic synthetic parameters (shapes from ResidualBlock.__init__).
# ----------------------------------------------------------------------------
def init_params(key, in_planes, planes, stride):
    ks = jax.random.split(key, 16)
    p = {
        "conv1_w": jax.random.normal(ks[0], (planes, in_planes, 3, 3)) * 0.1,
        "bn1_gamma": jax.random.uniform(ks[1], (planes,), minval=0.5, maxval=1.5),
        "bn1_beta": jax.random.normal(ks[2], (planes,)) * 0.1,
        "bn1_mean": jax.random.normal(ks[3], (planes,)) * 0.1,
        "bn1_var": jax.random.uniform(ks[4], (planes,), minval=0.5, maxval=1.5),
        "conv2_w": jax.random.normal(ks[5], (planes, planes, 3, 3)) * 0.1,
        "bn2_gamma": jax.random.uniform(ks[6], (planes,), minval=0.5, maxval=1.5),
        "bn2_beta": jax.random.normal(ks[7], (planes,)) * 0.1,
        "bn2_mean": jax.random.normal(ks[8], (planes,)) * 0.1,
        "bn2_var": jax.random.uniform(ks[9], (planes,), minval=0.5, maxval=1.5),
    }
    if stride != 1 or in_planes != planes:
        p.update({
            "sc_conv_w": jax.random.normal(ks[10], (planes, in_planes, 1, 1)) * 0.1,
            "sc_bn_gamma": jax.random.uniform(ks[11], (planes,), minval=0.5, maxval=1.5),
            "sc_bn_beta": jax.random.normal(ks[12], (planes,)) * 0.1,
            "sc_bn_mean": jax.random.normal(ks[13], (planes,)) * 0.1,
            "sc_bn_var": jax.random.uniform(ks[14], (planes,), minval=0.5, maxval=1.5),
        })
    return p


# ----------------------------------------------------------------------------
# Pure-JAX reference (eval-mode) for correctness check.
# ----------------------------------------------------------------------------
def reference_forward(x_nchw, params, stride):
    x = jnp.transpose(x_nchw, (0, 2, 3, 1)).astype(jnp.float32)
    Cin = x.shape[-1]
    Cp = params["conv1_w"].shape[0]

    def conv(v, w, s, pad):
        return lax.conv_general_dilated(
            v, jnp.transpose(w, (2, 3, 1, 0)), (s, s), pad,
            dimension_numbers=("NHWC", "HWIO", "NHWC"))

    def bn(v, pre):
        g, b = params[pre + "_gamma"], params[pre + "_beta"]
        m, var = params[pre + "_mean"], params[pre + "_var"]
        return (v - m) / jnp.sqrt(var + 1e-5) * g + b

    h = jax.nn.relu(bn(conv(x, params["conv1_w"], stride, ((1, 1), (1, 1))), "bn1"))
    h = bn(conv(h, params["conv2_w"], 1, ((1, 1), (1, 1))), "bn2")
    if stride != 1 or Cin != Cp:
        sc = bn(conv(x, params["sc_conv_w"], stride, ((0, 0), (0, 0))), "sc_bn")
    else:
        sc = x
    out = jax.nn.relu(h + sc)
    return jnp.transpose(out, (0, 3, 1, 2))


if __name__ == "__main__":
    key = jax.random.PRNGKey(0)
    k_x, k_p1, k_p2, k_p3 = jax.random.split(key, 4)
    N, Cin, H, W = 2, 4, 16, 16
    x = jax.random.normal(k_x, (N, Cin, H, W), jnp.float32)

    TOL = 2e-2   # bf16 matmul operands -> ~1e-2-scale rounding vs f32 reference

    # Case 1: projection shortcut (in_planes != planes), stride 1
    planes, stride = 8, 1
    params = init_params(k_p1, Cin, planes, stride)
    out = jax.block_until_ready(residual_block_forward(x, params, stride))
    ref = reference_forward(x, params, stride)
    assert out.shape == (N, planes, H, W), out.shape
    err = float(jnp.max(jnp.abs(out - ref)))
    if not (err < TOL):
        raise AssertionError(f"projection-shortcut mismatch: max abs err {err}")

    # Case 2: identity shortcut (in_planes == planes, stride 1)
    planes2, stride2 = 4, 1
    params2 = init_params(k_p2, Cin, planes2, stride2)
    out2 = jax.block_until_ready(residual_block_forward(x, params2, stride2))
    ref2 = reference_forward(x, params2, stride2)
    assert out2.shape == (N, planes2, H, W), out2.shape
    err2 = float(jnp.max(jnp.abs(out2 - ref2)))
    if not (err2 < TOL):
        raise AssertionError(f"identity-shortcut mismatch: max abs err {err2}")

    # Case 3: strided projection shortcut (stride 2) — exercises the
    # column-deinterleaved stride path.
    planes3, stride3 = 8, 2
    params3 = init_params(k_p3, Cin, planes3, stride3)
    out3 = jax.block_until_ready(residual_block_forward(x, params3, stride3))
    ref3 = reference_forward(x, params3, stride3)
    assert out3.shape == (N, planes3, H // 2, W // 2), out3.shape
    err3 = float(jnp.max(jnp.abs(out3 - ref3)))
    if not (err3 < TOL):
        raise AssertionError(f"strided-shortcut mismatch: max abs err {err3}")

    print("KERNEL_OK")
</pallas_src>

<mosaic_0001>
module attributes {stable_mosaic.version = 11 : i64} {
  func.func @kernel(%arg0: i32, %arg1: memref<1x18x24x128xf32, #tpu.memory_space<vmem>>, %arg2: memref<3x384x128xbf16, #tpu.memory_space<vmem>>, %arg3: memref<1x128xf32, #tpu.memory_space<vmem>>, %arg4: memref<3x384x128xbf16, #tpu.memory_space<vmem>>, %arg5: memref<1x128xf32, #tpu.memory_space<vmem>>, %arg6: memref<128x128xbf16, #tpu.memory_space<vmem>>, %arg7: memref<1x128xf32, #tpu.memory_space<vmem>>, %arg8: memref<1x16x16x128xf32, #tpu.memory_space<vmem>>, %arg9: memref<18x32x128xbf16, #tpu.memory_space<vmem>>) attributes {dimension_semantics = [#tpu.dimension_semantics<parallel>], iteration_bounds = array<i64: 2>, scalar_prefetch = 0 : i64, scratch_operands = 1 : i64, tpu.core_type = #tpu.core_type<tc>, window_params = [{transform_indices = @transform_0, window_bounds = array<i64: 1, 18, 24, 128>}, {pipeline_mode = #tpu.pipeline_mode<synchronous>, transform_indices = @transform_1, window_bounds = array<i64: 3, 384, 128>}, {pipeline_mode = #tpu.pipeline_mode<synchronous>, transform_indices = @transform_2, window_bounds = array<i64: 1, 128>}, {pipeline_mode = #tpu.pipeline_mode<synchronous>, transform_indices = @transform_3, window_bounds = array<i64: 3, 384, 128>}, {pipeline_mode = #tpu.pipeline_mode<synchronous>, transform_indices = @transform_4, window_bounds = array<i64: 1, 128>}, {pipeline_mode = #tpu.pipeline_mode<synchronous>, transform_indices = @transform_5, window_bounds = array<i64: 128, 128>}, {pipeline_mode = #tpu.pipeline_mode<synchronous>, transform_indices = @transform_6, window_bounds = array<i64: 1, 128>}, {transform_indices = @transform_7, window_bounds = array<i64: 1, 16, 16, 128>}]} {
    %cst = arith.constant 0.000000e+00 : bf16
    %0 = vector.broadcast %cst : bf16 to vector<1x32x128xbf16>
    %c0 = arith.constant 0 : index
    %c0_0 = arith.constant 0 : index
    %c0_1 = arith.constant 0 : index
    %1 = vector.load %arg9[%c0, %c0_0, %c0_1] : memref<18x32x128xbf16, #tpu.memory_space<vmem>>, vector<1x32x128xbf16>
    tpu.vector_store %arg9[%c0, %c0_0, %c0_1], %0 {strides = array<i32>} : memref<18x32x128xbf16, #tpu.memory_space<vmem>>, vector<1x32x128xbf16>,
    %cst_2 = arith.constant 0.000000e+00 : bf16
    %2 = vector.broadcast %cst_2 : bf16 to vector<1x32x128xbf16>
    %c17 = arith.constant 17 : index
    %c0_3 = arith.constant 0 : index
    %c0_4 = arith.constant 0 : index
    %3 = vector.load %arg9[%c17, %c0_3, %c0_4] : memref<18x32x128xbf16, #tpu.memory_space<vmem>>, vector<1x32x128xbf16>
    tpu.vector_store %arg9[%c17, %c0_3, %c0_4], %2 {strides = array<i32>} : memref<18x32x128xbf16, #tpu.memory_space<vmem>>, vector<1x32x128xbf16>,
    %cst_5 = arith.constant 0.000000e+00 : bf16
    %4 = vector.broadcast %cst_5 : bf16 to vector<18x8x128xbf16>
    %c0_6 = arith.constant 0 : index
    %c0_7 = arith.constant 0 : index
    %c0_8 = arith.constant 0 : index
    %5 = vector.load %arg9[%c0_6, %c0_7, %c0_8] : memref<18x32x128xbf16, #tpu.memory_space<vmem>>, vector<18x8x128xbf16>
    tpu.vector_store %arg9[%c0_6, %c0_7, %c0_8], %4 {strides = array<i32>} : memref<18x32x128xbf16, #tpu.memory_space<vmem>>, vector<18x8x128xbf16>,
    %cst_9 = arith.constant 0.000000e+00 : bf16
    %6 = vector.broadcast %cst_9 : bf16 to vector<18x8x128xbf16>
    %c0_10 = arith.constant 0 : index
    %c24 = arith.constant 24 : index
    %c0_11 = arith.constant 0 : index
    %7 = vector.load %arg9[%c0_10, %c24, %c0_11] : memref<18x32x128xbf16, #tpu.memory_space<vmem>>, vector<18x8x128xbf16>
    tpu.vector_store %arg9[%c0_10, %c24, %c0_11], %6 {strides = array<i32>} : memref<18x32x128xbf16, #tpu.memory_space<vmem>>, vector<18x8x128xbf16>,
    %c0_12 = arith.constant 0 : index
    %c0_13 = arith.constant 0 : index
    %c0_14 = arith.constant 0 : index
    %c0_15 = arith.constant 0 : index
    %8 = vector.load %arg1[%c0_12, %c0_13, %c0_14, %c0_15] : memref<1x18x24x128xf32, #tpu.memory_space<vmem>>, vector<1x18x24x128xf32>
    %9 = vector.shape_cast %8 : vector<1x18x24x128xf32> to vector<18x24x128xf32>
    %10 = arith.truncf %9 : vector<18x24x128xf32> to vector<18x24x128xbf16>
    %11 = vector.extract_strided_slice %10 {offsets = [0, 0, 0], sizes = [18, 16, 128], strides = [1, 1, 1]} : vector<18x24x128xbf16> to vector<18x16x128xbf16>
    %12 = vector.extract_strided_slice %10 {offsets = [0, 1, 0], sizes = [18, 16, 128], strides = [1, 1, 1]} : vector<18x24x128xbf16> to vector<18x16x128xbf16>
    %13 = vector.extract_strided_slice %10 {offsets = [0, 2, 0], sizes = [18, 16, 128], strides = [1, 1, 1]} : vector<18x24x128xbf16> to vector<18x16x128xbf16>
    %14 = tpu.concatenate %11, %12, %13 in 2 : vector<18x16x128xbf16>, vector<18x16x128xbf16>, vector<18x16x128xbf16> -> vector<18x16x384xbf16>
    %cst_16 = arith.constant 0.000000e+00 : f32
    %15 = vector.broadcast %cst_16 : f32 to vector<256x128xf32>
    %16 = vector.extract_strided_slice %14 {offsets = [0, 0, 0], sizes = [16, 16, 384], strides = [1, 1, 1]} : vector<18x16x384xbf16> to vector<16x16x384xbf16>
    %17 = vector.shape_cast %16 : vector<16x16x384xbf16> to vector<256x384xbf16>
    %c0_17 = arith.constant 0 : index
    %c0_18 = arith.constant 0 : index
    %c0_19 = arith.constant 0 : index
    %18 = vector.load %arg2[%c0_17, %c0_18, %c0_19] : memref<3x384x128xbf16, #tpu.memory_space<vmem>>, vector<1x384x128xbf16>
    %19 = vector.shape_cast %18 : vector<1x384x128xbf16> to vector<384x128xbf16>
    %cst_20 = arith.constant dense<0.000000e+00> : vector<256x128xf32>
    %20 = tpu.matmul %17, %19, %cst_20 {dimension_numbers = #tpu.dot_dimension_numbers<[1], [0], [0], [1], [0, 0, 1, 1], [], []>} : vector<256x384xbf16>, vector<384x128xbf16>, vector<256x128xf32> -> vector<256x128xf32>
    %21 = arith.addf %15, %20 : vector<256x128xf32>
    %22 = vector.extract_strided_slice %14 {offsets = [1, 0, 0], sizes = [16, 16, 384], strides = [1, 1, 1]} : vector<18x16x384xbf16> to vector<16x16x384xbf16>
    %23 = vector.shape_cast %22 : vector<16x16x384xbf16> to vector<256x384xbf16>
    %c1 = arith.constant 1 : index
    %c0_21 = arith.constant 0 : index
    %c0_22 = arith.constant 0 : index
    %24 = vector.load %arg2[%c1, %c0_21, %c0_22] : memref<3x384x128xbf16, #tpu.memory_space<vmem>>, vector<1x384x128xbf16>
    %25 = vector.shape_cast %24 : vector<1x384x128xbf16> to vector<384x128xbf16>
    %cst_23 = arith.constant dense<0.000000e+00> : vector<256x128xf32>
    %26 = tpu.matmul %23, %25, %cst_23 {dimension_numbers = #tpu.dot_dimension_numbers<[1], [0], [0], [1], [0, 0, 1, 1], [], []>} : vector<256x384xbf16>, vector<384x128xbf16>, vector<256x128xf32> -> vector<256x128xf32>
    %27 = arith.addf %21, %26 : vector<256x128xf32>
    %28 = vector.extract_strided_slice %14 {offsets = [2, 0, 0], sizes = [16, 16, 384], strides = [1, 1, 1]} : vector<18x16x384xbf16> to vector<16x16x384xbf16>
    %29 = vector.shape_cast %28 : vector<16x16x384xbf16> to vector<256x384xbf16>
    %c2 = arith.constant 2 : index
    %c0_24 = arith.constant 0 : index
    %c0_25 = arith.constant 0 : index
    %30 = vector.load %arg2[%c2, %c0_24, %c0_25] : memref<3x384x128xbf16, #tpu.memory_space<vmem>>, vector<1x384x128xbf16>
    %31 = vector.shape_cast %30 : vector<1x384x128xbf16> to vector<384x128xbf16>
    %cst_26 = arith.constant dense<0.000000e+00> : vector<256x128xf32>
    %32 = tpu.matmul %29, %31, %cst_26 {dimension_numbers = #tpu.dot_dimension_numbers<[1], [0], [0], [1], [0, 0, 1, 1], [], []>} : vector<256x384xbf16>, vector<384x128xbf16>, vector<256x128xf32> -> vector<256x128xf32>
    %33 = arith.addf %27, %32 : vector<256x128xf32>
    %c0_27 = arith.constant 0 : index
    %c0_28 = arith.constant 0 : index
    %34 = vector.load %arg3[%c0_27, %c0_28] : memref<1x128xf32, #tpu.memory_space<vmem>>, vector<1x128xf32>
    %35 = vector.broadcast %34 : vector<1x128xf32> to vector<256x128xf32>
    %36 = arith.addf %33, %35 : vector<256x128xf32>
    %cst_29 = arith.constant 0.000000e+00 : f32
    %37 = vector.broadcast %cst_29 : f32 to vector<256x128xf32>
    %38 = arith.maximumf %36, %37 : vector<256x128xf32>
    %39 = arith.truncf %38 : vector<256x128xf32> to vector<256x128xbf16>
    %40 = vector.shape_cast %39 : vector<256x128xbf16> to vector<16x16x128xbf16>
    %c1_30 = arith.constant 1 : index
    %c8 = arith.constant 8 : index
    %c0_31 = arith.constant 0 : index
    %41 = vector.load %arg9[%c1_30, %c8, %c0_31] : memref<18x32x128xbf16, #tpu.memory_space<vmem>>, vector<16x16x128xbf16>
    tpu.vector_store %arg9[%c1_30, %c8, %c0_31], %40 {strides = array<i32>} : memref<18x32x128xbf16, #tpu.memory_space<vmem>>, vector<16x16x128xbf16>,
    %c0_32 = arith.constant 0 : index
    %c0_33 = arith.constant 0 : index
    %c0_34 = arith.constant 0 : index
    %42 = vector.load %arg9[%c0_32, %c0_33, %c0_34] : memref<18x32x128xbf16, #tpu.memory_space<vmem>>, vector<18x32x128xbf16>
    %43 = vector.extract_strided_slice %42 {offsets = [0, 7, 0], sizes = [18, 16, 128], strides = [1, 1, 1]} : vector<18x32x128xbf16> to vector<18x16x128xbf16>
    %44 = vector.extract_strided_slice %42 {offsets = [0, 8, 0], sizes = [18, 16, 128], strides = [1, 1, 1]} : vector<18x32x128xbf16> to vector<18x16x128xbf16>
    %45 = vector.extract_strided_slice %42 {offsets = [0, 9, 0], sizes = [18, 16, 128], strides = [1, 1, 1]} : vector<18x32x128xbf16> to vector<18x16x128xbf16>
    %46 = tpu.concatenate %43, %44, %45 in 2 : vector<18x16x128xbf16>, vector<18x16x128xbf16>, vector<18x16x128xbf16> -> vector<18x16x384xbf16>
    %cst_35 = arith.constant 0.000000e+00 : f32
    %47 = vector.broadcast %cst_35 : f32 to vector<256x128xf32>
    %48 = vector.extract_strided_slice %46 {offsets = [0, 0, 0], sizes = [16, 16, 384], strides = [1, 1, 1]} : vector<18x16x384xbf16> to vector<16x16x384xbf16>
    %49 = vector.shape_cast %48 : vector<16x16x384xbf16> to vector<256x384xbf16>
    %c0_36 = arith.constant 0 : index
    %c0_37 = arith.constant 0 : index
    %c0_38 = arith.constant 0 : index
    %50 = vector.load %arg4[%c0_36, %c0_37, %c0_38] : memref<3x384x128xbf16, #tpu.memory_space<vmem>>, vector<1x384x128xbf16>
    %51 = vector.shape_cast %50 : vector<1x384x128xbf16> to vector<384x128xbf16>
    %cst_39 = arith.constant dense<0.000000e+00> : vector<256x128xf32>
    %52 = tpu.matmul %49, %51, %cst_39 {dimension_numbers = #tpu.dot_dimension_numbers<[1], [0], [0], [1], [0, 0, 1, 1], [], []>} : vector<256x384xbf16>, vector<384x128xbf16>, vector<256x128xf32> -> vector<256x128xf32>
    %53 = arith.addf %47, %52 : vector<256x128xf32>
    %54 = vector.extract_strided_slice %46 {offsets = [1, 0, 0], sizes = [16, 16, 384], strides = [1, 1, 1]} : vector<18x16x384xbf16> to vector<16x16x384xbf16>
    %55 = vector.shape_cast %54 : vector<16x16x384xbf16> to vector<256x384xbf16>
    %c1_40 = arith.constant 1 : index
    %c0_41 = arith.constant 0 : index
    %c0_42 = arith.constant 0 : index
    %56 = vector.load %arg4[%c1_40, %c0_41, %c0_42] : memref<3x384x128xbf16, #tpu.memory_space<vmem>>, vector<1x384x128xbf16>
    %57 = vector.shape_cast %56 : vector<1x384x128xbf16> to vector<384x128xbf16>
    %cst_43 = arith.constant dense<0.000000e+00> : vector<256x128xf32>
    %58 = tpu.matmul %55, %57, %cst_43 {dimension_numbers = #tpu.dot_dimension_numbers<[1], [0], [0], [1], [0, 0, 1, 1], [], []>} : vector<256x384xbf16>, vector<384x128xbf16>, vector<256x128xf32> -> vector<256x128xf32>
    %59 = arith.addf %53, %58 : vector<256x128xf32>
    %60 = vector.extract_strided_slice %46 {offsets = [2, 0, 0], sizes = [16, 16, 384], strides = [1, 1, 1]} : vector<18x16x384xbf16> to vector<16x16x384xbf16>
    %61 = vector.shape_cast %60 : vector<16x16x384xbf16> to vector<256x384xbf16>
    %c2_44 = arith.constant 2 : index
    %c0_45 = arith.constant 0 : index
    %c0_46 = arith.constant 0 : index
    %62 = vector.load %arg4[%c2_44, %c0_45, %c0_46] : memref<3x384x128xbf16, #tpu.memory_space<vmem>>, vector<1x384x128xbf16>
    %63 = vector.shape_cast %62 : vector<1x384x128xbf16> to vector<384x128xbf16>
    %cst_47 = arith.constant dense<0.000000e+00> : vector<256x128xf32>
    %64 = tpu.matmul %61, %63, %cst_47 {dimension_numbers = #tpu.dot_dimension_numbers<[1], [0], [0], [1], [0, 0, 1, 1], [], []>} : vector<256x384xbf16>, vector<384x128xbf16>, vector<256x128xf32> -> vector<256x128xf32>
    %65 = arith.addf %59, %64 : vector<256x128xf32>
    %c0_48 = arith.constant 0 : index
    %c0_49 = arith.constant 0 : index
    %66 = vector.load %arg5[%c0_48, %c0_49] : memref<1x128xf32, #tpu.memory_space<vmem>>, vector<1x128xf32>
    %67 = vector.broadcast %66 : vector<1x128xf32> to vector<256x128xf32>
    %68 = arith.addf %65, %67 : vector<256x128xf32>
    %69 = vector.extract_strided_slice %10 {offsets = [1, 1, 0], sizes = [16, 16, 128], strides = [1, 1, 1]} : vector<18x24x128xbf16> to vector<16x16x128xbf16>
    %70 = vector.shape_cast %69 : vector<16x16x128xbf16> to vector<256x128xbf16>
    %c0_50 = arith.constant 0 : index
    %c0_51 = arith.constant 0 : index
    %71 = vector.load %arg6[%c0_50, %c0_51] : memref<128x128xbf16, #tpu.memory_space<vmem>>, vector<128x128xbf16>
    %cst_52 = arith.constant dense<0.000000e+00> : vector<256x128xf32>
    %72 = tpu.matmul %70, %71, %cst_52 {dimension_numbers = #tpu.dot_dimension_numbers<[1], [0], [0], [1], [0, 0, 1, 1], [], []>} : vector<256x128xbf16>, vector<128x128xbf16>, vector<256x128xf32> -> vector<256x128xf32>
    %c0_53 = arith.constant 0 : index
    %c0_54 = arith.constant 0 : index
    %73 = vector.load %arg7[%c0_53, %c0_54] : memref<1x128xf32, #tpu.memory_space<vmem>>, vector<1x128xf32>
    %74 = vector.broadcast %73 : vector<1x128xf32> to vector<256x128xf32>
    %75 = arith.addf %72, %74 : vector<256x128xf32>
    %76 = arith.addf %68, %75 : vector<256x128xf32>
    %cst_55 = arith.constant 0.000000e+00 : f32
    %77 = vector.broadcast %cst_55 : f32 to vector<256x128xf32>
    %78 = arith.maximumf %76, %77 : vector<256x128xf32>
    %79 = vector.shape_cast %78 : vector<256x128xf32> to vector<16x16x128xf32>
    %c0_56 = arith.constant 0 : index
    %c0_57 = arith.constant 0 : index
    %c0_58 = arith.constant 0 : index
    %c0_59 = arith.constant 0 : index
    %80 = vector.load %arg8[%c0_56, %c0_57, %c0_58, %c0_59] : memref<1x16x16x128xf32, #tpu.memory_space<vmem>>, vector<1x16x16x128xf32>
    %81 = vector.shape_cast %80 : vector<1x16x16x128xf32> to vector<16x16x128xf32>
    %82 = vector.shape_cast %79 : vector<16x16x128xf32> to vector<1x16x16x128xf32>
    tpu.vector_store %arg8[%c0_56, %c0_57, %c0_58, %c0_59], %82 {strides = array<i32>} : memref<1x16x16x128xf32, #tpu.memory_space<vmem>>, vector<1x16x16x128xf32>,
    return
  }
  func.func @transform_0(%arg0: i32) -> (i32, i32, i32, i32) {
    %c0_i32 = arith.constant 0 : i32
    %c0_i32_0 = arith.constant 0 : i32
    %c0_i32_1 = arith.constant 0 : i32
    %c0_i32_2 = arith.constant 0 : i32
    return %arg0, %c0_i32, %c0_i32_0, %c0_i32_1 : i32, i32, i32, i32
  }
  func.func @transform_1(%arg0: i32) -> (i32, i32, i32) {
    %c0_i32 = arith.constant 0 : i32
    %c0_i32_0 = arith.constant 0 : i32
    %c0_i32_1 = arith.constant 0 : i32
    %c0_i32_2 = arith.constant 0 : i32
    return %c0_i32, %c0_i32_0, %c0_i32_1 : i32, i32, i32
  }
  func.func @transform_2(%arg0: i32) -> (i32, i32) {
    %c0_i32 = arith.constant 0 : i32
    %c0_i32_0 = arith.constant 0 : i32
    %c0_i32_1 = arith.constant 0 : i32
    return %c0_i32, %c0_i32_0 : i32, i32
  }
  func.func @transform_3(%arg0: i32) -> (i32, i32, i32) {
    %c0_i32 = arith.constant 0 : i32
    %c0_i32_0 = arith.constant 0 : i32
    %c0_i32_1 = arith.constant 0 : i32
    %c0_i32_2 = arith.constant 0 : i32
    return %c0_i32, %c0_i32_0, %c0_i32_1 : i32, i32, i32
  }
  func.func @transform_4(%arg0: i32) -> (i32, i32) {
    %c0_i32 = arith.constant 0 : i32
    %c0_i32_0 = arith.constant 0 : i32
    %c0_i32_1 = arith.constant 0 : i32
    return %c0_i32, %c0_i32_0 : i32, i32
  }
  func.func @transform_5(%arg0: i32) -> (i32, i32) {
    %c0_i32 = arith.constant 0 : i32
    %c0_i32_0 = arith.constant 0 : i32
    %c0_i32_1 = arith.constant 0 : i32
    return %c0_i32, %c0_i32_0 : i32, i32
  }
  func.func @transform_6(%arg0: i32) -> (i32, i32) {
    %c0_i32 = arith.constant 0 : i32
    %c0_i32_0 = arith.constant 0 : i32
    %c0_i32_1 = arith.constant 0 : i32
    return %c0_i32, %c0_i32_0 : i32, i32
  }
  func.func @transform_7(%arg0: i32) -> (i32, i32, i32, i32) {
    %c0_i32 = arith.constant 0 : i32
    %c0_i32_0 = arith.constant 0 : i32
    %c0_i32_1 = arith.constant 0 : i32
    %c0_i32_2 = arith.constant 0 : i32
    return %arg0, %c0_i32, %c0_i32_0, %c0_i32_1 : i32, i32, i32, i32
  }
}

</mosaic_0001>

<llo_original>
// kernel: tpu_custom_call.1
$region0: #{tpu_custom_call.1}
  #allocation0 [shape = 'u32[]', space=smem, size = 0x4, offset = 0x4, fixed_abs, tag = 'smem constant byte address 0x4 - core index']
  #allocation1 [shape = 'u32[144,128]{1,0:T(1,128)}', space=vmem, size = 0x12000, scoped, tag = 'internal scratch']
  #allocation2 [shape = 'bf16[18,32,128]{2,1,0:T(16,128)(2,1)}', space=vmem, size = 0x24000, scoped, tag = 'scratch operand']
  %s0 = inlined_call_operand.hbm [shape: f32[2,18,24,128], index: 0, kind: input, shape index: {}]
  %s1 = inlined_call_operand.hbm [shape: bf16[3,384,128], index: 1, kind: input, shape index: {}]
  %s2 = inlined_call_operand.vmem [shape: f32[1,128], index: 2, kind: input, shape index: {}]
  %s3 = inlined_call_operand.hbm [shape: bf16[3,384,128], index: 3, kind: input, shape index: {}]
  %s4 = inlined_call_operand.vmem [shape: f32[1,128], index: 4, kind: input, shape index: {}]
  %s5 = inlined_call_operand.hbm [shape: bf16[128,128], index: 5, kind: input, shape index: {}]
  %s6 = inlined_call_operand.vmem [shape: f32[1,128], index: 6, kind: input, shape index: {}]
  %s7 = inlined_call_operand.hbm [shape: f32[2,16,16,128], index: 7, kind: output, shape index: {}]
  %s8 = sld [smem:[#allocation0]]
  $region77: #{tpu_custom_call.1} parent=0
    _
  %s10 = ssub.s32 1, %s8
  %s11 = scalar_select 0, %s10, %s8
  $region1: #{tpu_custom_call.1} parent=0
    #allocation3 [shape = 'u8[442368]{0}', space=vmem, size = 0x6c000, scoped, tag = 'input window, operand 0']
    #allocation4 [shape = 's32[2]{0}', space=sflag, size = 0x8, scoped, tag = 'scoped memory for tpu_custom_call.1']
    #allocation5 [shape = 's32[2]{0}', space=sflag, size = 0x8, scoped, tag = 'scoped memory for tpu_custom_call.1']
    #allocation6 [shape = 'u8[294912]{0}', space=vmem, size = 0x48000, scoped, tag = 'input window, operand 1, single buffered']
    #allocation7 [shape = 's32[1]{0}', space=sflag, size = 0x4, scoped, tag = 'scoped memory for tpu_custom_call.1']
    #allocation8 [shape = 'u8[294912]{0}', space=vmem, size = 0x48000, scoped, tag = 'input window, operand 3, single buffered']
    #allocation9 [shape = 'u8[32768]{0}', space=vmem, size = 0x8000, scoped, tag = 'input window, operand 5, single buffered']
    #allocation10 [shape = 's32[1]{0}', space=sflag, size = 0x4, scoped, tag = 'scoped memory for tpu_custom_call.1']
    #allocation11 [shape = 'u8[262144]{0}', space=vmem, size = 0x40000, scoped, tag = 'output window, operand 0']
    %12 = vsyncpa [#allocation4], 0
    %s13 = scalar_lea.sflag [#allocation4], 1
    %14 = vsyncpa %s13, 0
    %15 = vsyncpa [#allocation7], 0
    %16 = vsyncpa [#allocation10], 0
    %17 = vsyncpa [#allocation5], 0
    %s18 = scalar_lea.sflag [#allocation5], 1
    %19 = vsyncpa %s18, 0
    loop: start=0, step=1, limit=4
    $region2: #{tpu_custom_call.1} parent=1 // loop_pre_header
      _
    $region3: #{tpu_custom_call.1} parent=1 // loop_header
      %s21 = sphi 0, %s25
      %p22 = scmp.ge.s32.totalorder %s21, 4
      %s31 = sphi 0, %s33
      %s34 = sphi 0, %s31
      %s35 = sphi 0, %s34
      %s51 = sphi 0, %s35
      %s55 = sphi 0, %s55
      %s57 = sphi 0, %s55
      %s58 = sphi 0, %s57
      %s72 = sphi 0, %s58
      %s76 = sphi 0, %s76
      %s78 = sphi 0, %s76
      %s79 = sphi 0, %s78
      %s93 = sphi 0, %s79
      %s97 = sphi 0, %s97
      %s99 = sphi 0, %s97
      %s100 = sphi 0, %s99
      %s114 = sphi 0, %s100
      %s118 = sphi 0, %s118
      %s120 = sphi 0, %s118
      %s121 = sphi 0, %s120
      %s135 = sphi 0, %s121
      %s139 = sphi 0, %s139
      %s141 = sphi 0, %s139
      %s142 = sphi 0, %s141
      %s156 = sphi 0, %s142
      %s160 = sphi 0, %s160
      %s162 = sphi 0, %s160
      %s163 = sphi 0, %s162
      %s177 = sphi 0, %s163
      %s183 = sphi 0, %s185
      %s186 = sphi 0, %s183
      %s187 = sphi 0, %s186
      %s203 = sphi 0, %s187
    $region4: #{tpu_custom_call.1} parent=1 // loop_header_branch
      %24 = sbr.rel (%p22) target = $region8
    $region5: #{tpu_custom_call.1} parent=1 // loop_body
      %s26 = ssub.s32 %s21, 1
      %s27 = ssub.s32 %s21, 2
      %s28 = sadd.s32 %s21, 1
      %s29 = ssub.s32 %s21, %s28
      %p30 = scmp.eq.s32.totalorder %s29, 0
      %s32 = sadd.s32 %s31, 1
      %s33 = scalar_select %p30, %s31, %s32
      %p36 = pneg %p30
      %p37 = scmp.eq.s32.totalorder %s21, 1
      %p38 = por %p36, %p37
      %p39 = scmp.ne.s32.totalorder %s31, %s34
      %p40 = scmp.eq.s32.totalorder %s21, 0
      %p41 = por %p39, %p40
      %p42 = scmp.ne.s32.totalorder %s31, %s34
      %p43 = scmp.eq.s32.totalorder %s26, 1
      %p44 = por %p42, %p43
      %p45 = scmp.ne.s32.totalorder %s34, %s35
      %p46 = scmp.eq.s32.totalorder %s26, 0
      %p47 = por %p45, %p46
      %p48 = scmp.ne.s32.totalorder %s34, %s35
      %p49 = scmp.eq.s32.totalorder %s27, 1
      %p50 = por %p48, %p49
      %p52 = scmp.ne.s32.totalorder %s35, %s51
      %p53 = scmp.eq.s32.totalorder %s27, 0
      %p54 = por %p52, %p53
      %s56 = sadd.s32 %s55, 1
      %p59 = scmp.eq.s32.totalorder %s21, 1
      %p60 = scmp.ne.s32.totalorder %s55, %s57
      %p61 = scmp.eq.s32.totalorder %s21, 0
      %p62 = por %p60, %p61
      %p63 = scmp.ne.s32.totalorder %s55, %s57
      %p64 = scmp.eq.s32.totalorder %s26, 1
      %p65 = por %p63, %p64
      %p66 = scmp.ne.s32.totalorder %s57, %s58
      %p67 = scmp.eq.s32.totalorder %s26, 0
      %p68 = por %p66, %p67
      %p69 = scmp.ne.s32.totalorder %s57, %s58
      %p70 = scmp.eq.s32.totalorder %s27, 1
      %p71 = por %p69, %p70
      %p73 = scmp.ne.s32.totalorder %s58, %s72
      %p74 = scmp.eq.s32.totalorder %s27, 0
      %p75 = por %p73, %p74
      %s77 = sadd.s32 %s76, 1
      %p80 = scmp.eq.s32.totalorder %s21, 1
      %p81 = scmp.ne.s32.totalorder %s76, %s78
      %p82 = scmp.eq.s32.totalorder %s21, 0
      %p83 = por %p81, %p82
      %p84 = scmp.ne.s32.totalorder %s76, %s78
      %p85 = scmp.eq.s32.totalorder %s26, 1
      %p86 = por %p84, %p85
      %p87 = scmp.ne.s32.totalorder %s78, %s79
      %p88 = scmp.eq.s32.totalorder %s26, 0
      %p89 = por %p87, %p88
      %p90 = scmp.ne.s32.totalorder %s78, %s79
      %p91 = scmp.eq.s32.totalorder %s27, 1
      %p92 = por %p90, %p91
      %p94 = scmp.ne.s32.totalorder %s79, %s93
      %p95 = scmp.eq.s32.totalorder %s27, 0
      %p96 = por %p94, %p95
      %s98 = sadd.s32 %s97, 1
      %p101 = scmp.eq.s32.totalorder %s21, 1
      %p102 = scmp.ne.s32.totalorder %s97, %s99
      %p103 = scmp.eq.s32.totalorder %s21, 0
      %p104 = por %p102, %p103
      %p105 = scmp.ne.s32.totalorder %s97, %s99
      %p106 = scmp.eq.s32.totalorder %s26, 1
      %p107 = por %p105, %p106
      %p108 = scmp.ne.s32.totalorder %s99, %s100
      %p109 = scmp.eq.s32.totalorder %s26, 0
      %p110 = por %p108, %p109
      %p111 = scmp.ne.s32.totalorder %s99, %s100
      %p112 = scmp.eq.s32.totalorder %s27, 1
      %p113 = por %p111, %p112
      %p115 = scmp.ne.s32.totalorder %s100, %s114
      %p116 = scmp.eq.s32.totalorder %s27, 0
      %p117 = por %p115, %p116
      %s119 = sadd.s32 %s118, 1
      %p122 = scmp.eq.s32.totalorder %s21, 1
      %p123 = scmp.ne.s32.totalorder %s118, %s120
      %p124 = scmp.eq.s32.totalorder %s21, 0
      %p125 = por %p123, %p124
      %p126 = scmp.ne.s32.totalorder %s118, %s120
      %p127 = scmp.eq.s32.totalorder %s26, 1
      %p128 = por %p126, %p127
      %p129 = scmp.ne.s32.totalorder %s120, %s121
      %p130 = scmp.eq.s32.totalorder %s26, 0
      %p131 = por %p129, %p130
      %p132 = scmp.ne.s32.totalorder %s120, %s121
      %p133 = scmp.eq.s32.totalorder %s27, 1
      %p134 = por %p132, %p133
      %p136 = scmp.ne.s32.totalorder %s121, %s135
      %p137 = scmp.eq.s32.totalorder %s27, 0
      %p138 = por %p136, %p137
      %s140 = sadd.s32 %s139, 1
      %p143 = scmp.eq.s32.totalorder %s21, 1
      %p144 = scmp.ne.s32.totalorder %s139, %s141
      %p145 = scmp.eq.s32.totalorder %s21, 0
      %p146 = por %p144, %p145
      %p147 = scmp.ne.s32.totalorder %s139, %s141
      %p148 = scmp.eq.s32.totalorder %s26, 1
      %p149 = por %p147, %p148
      %p150 = scmp.ne.s32.totalorder %s141, %s142
      %p151 = scmp.eq.s32.totalorder %s26, 0
      %p152 = por %p150, %p151
      %p153 = scmp.ne.s32.totalorder %s141, %s142
      %p154 = scmp.eq.s32.totalorder %s27, 1
      %p155 = por %p153, %p154
      %p157 = scmp.ne.s32.totalorder %s142, %s156
      %p158 = scmp.eq.s32.totalorder %s27, 0
      %p159 = por %p157, %p158
      %s161 = sadd.s32 %s160, 1
      %p164 = scmp.eq.s32.totalorder %s21, 1
      %p165 = scmp.ne.s32.totalorder %s160, %s162
      %p166 = scmp.eq.s32.totalorder %s21, 0
      %p167 = por %p165, %p166
      %p168 = scmp.ne.s32.totalorder %s160, %s162
      %p169 = scmp.eq.s32.totalorder %s26, 1
      %p170 = por %p168, %p169
      %p171 = scmp.ne.s32.totalorder %s162, %s163
      %p172 = scmp.eq.s32.totalorder %s26, 0
      %p173 = por %p171, %p172
      %p174 = scmp.ne.s32.totalorder %s162, %s163
      %p175 = scmp.eq.s32.totalorder %s27, 1
      %p176 = por %p174, %p175
      %p178 = scmp.ne.s32.totalorder %s163, %s177
      %p179 = scmp.eq.s32.totalorder %s27, 0
      %p180 = por %p178, %p179
      %s181 = ssub.s32 %s21, %s28
      %p182 = scmp.eq.s32.totalorder %s181, 0
      %s184 = sadd.s32 %s183, 1
      %s185 = scalar_select %p182, %s183, %s184
      %p188 = pneg %p182
      %p189 = scmp.eq.s32.totalorder %s21, 1
      %p190 = por %p188, %p189
      %p191 = scmp.ne.s32.totalorder %s183, %s186
      %p192 = scmp.eq.s32.totalorder %s21, 0
      %p193 = por %p191, %p192
      %p194 = scmp.ne.s32.totalorder %s183, %s186
      %p195 = scmp.eq.s32.totalorder %s26, 1
      %p196 = por %p194, %p195
      %p197 = scmp.ne.s32.totalorder %s186, %s187
      %p198 = scmp.eq.s32.totalorder %s26, 0
      %p199 = por %p197, %p198
      %p200 = scmp.ne.s32.totalorder %s186, %s187
      %p201 = scmp.eq.s32.totalorder %s27, 1
      %p202 = por %p200, %p201
      %p204 = scmp.ne.s32.totalorder %s187, %s203
      %p205 = scmp.eq.s32.totalorder %s27, 0
      %p206 = por %p204, %p205
      %p207 = scmp.le.s32.totalorder 1, %s21
      %p208 = scmp.lt.s32.totalorder %s21, 3
      %p209 = pnand %p207, %p208
      %p210 = pneg %p209
      // Predicated region
      $region9: #{tpu_custom_call.1} parent=5 // pred_check
        _
      $region10: #{tpu_custom_call.1} parent=5 // pred_check_branch
        %212 = sbr.rel (%p209) target = $region12
      $region11: #{tpu_custom_call.1} parent=5 // pred_region
        %s213 = ssub.s32 %s21, 1
        // Predicated region
        $region13: #{tpu_custom_call.1} parent=11 // pred_check
          %p214 = pneg %p68
        $region14: #{tpu_custom_call.1} parent=11 // pred_check_branch
          %216 = sbr.rel (%p214) target = $region16
        $region15: #{tpu_custom_call.1} parent=11 // pred_region
          %s218 = ssub.s32 9216, 9216
          %219 = vsyncadd [#allocation7], %s218
          %s220 = sshll.u32 [#allocation6], 4
          %s221 = int_to_ptr.vmem [resolvable:$true] %s220
          %226 = dma.hbm_to_vmem [thread:$0]  %s1, 9216, %s221, [#allocation7], 64, 64, 4
        $region16: #{tpu_custom_call.1} parent=11 // pred_fallthru
          _
        // Predicated region
        $region17: #{tpu_custom_call.1} parent=11 // pred_check
          %p227 = pneg %p89
        $region18: #{tpu_custom_call.1} parent=11 // pred_check_branch
          %229 = sbr.rel (%p227) target = $region20
        $region19: #{tpu_custom_call.1} parent=11 // pred_region
          _
        $region20: #{tpu_custom_call.1} parent=11 // pred_fallthru
          _
        // Predicated region
        $region21: #{tpu_custom_call.1} parent=11 // pred_check
          %p230 = pneg %p110
        $region22: #{tpu_custom_call.1} parent=11 // pred_check_branch
          %232 = sbr.rel (%p230) target = $region24
        $region23: #{tpu_custom_call.1} parent=11 // pred_region
          %s234 = ssub.s32 9216, 9216
          %235 = vsyncadd [#allocation7], %s234
          %s236 = sshll.u32 [#allocation8], 4
          %s237 = int_to_ptr.vmem [resolvable:$true] %s236
          %242 = dma.hbm_to_vmem [thread:$0]  %s3, 9216, %s237, [#allocation7], 64, 64, 4
        $region24: #{tpu_custom_call.1} parent=11 // pred_fallthru
          _
        // Predicated region
        $region25: #{tpu_custom_call.1} parent=11 // pred_check
          %p243 = pneg %p131
        $region26: #{tpu_custom_call.1} parent=11 // pred_check_branch
          %245 = sbr.rel (%p243) target = $region28
        $region27: #{tpu_custom_call.1} parent=11 // pred_region
          _
        $region28: #{tpu_custom_call.1} parent=11 // pred_fallthru
          _
        // Predicated region
        $region29: #{tpu_custom_call.1} parent=11 // pred_check
          %p246 = pneg %p152
        $region30: #{tpu_custom_call.1} parent=11 // pred_check_branch
          %248 = sbr.rel (%p246) target = $region32
        $region31: #{tpu_custom_call.1} parent=11 // pred_region
          %s250 = ssub.s32 1024, 1024
          %251 = vsyncadd [#allocation10], %s250
          %s252 = sshll.u32 [#allocation9], 4
          %s253 = int_to_ptr.vmem [resolvable:$true] %s252
          %258 = dma.hbm_to_vmem [thread:$0]  %s5, 1024, %s253, [#allocation10], 64, 64, 4
        $region32: #{tpu_custom_call.1} parent=11 // pred_fallthru
          _
        // Predicated region
        $region33: #{tpu_custom_call.1} parent=11 // pred_check
          %p259 = pneg %p173
        $region34: #{tpu_custom_call.1} parent=11 // pred_check_branch
          %261 = sbr.rel (%p259) target = $region36
        $region35: #{tpu_custom_call.1} parent=11 // pred_region
          _
        $region36: #{tpu_custom_call.1} parent=11 // pred_fallthru
          _
      $region12: #{tpu_custom_call.1} parent=5 // pred_fallthru
        _
      %p262 = scmp.lt.s32.totalorder %s21, 2
      // Predicated region
      $region37: #{tpu_custom_call.1} parent=5 // pred_check
        %p263 = pneg %p262
      $region38: #{tpu_custom_call.1} parent=5 // pred_check_branch
        %265 = sbr.rel (%p263) target = $region40
      $region39: #{tpu_custom_call.1} parent=5 // pred_region
        // Predicated region
        $region41: #{tpu_custom_call.1} parent=39 // pred_check
          %p266 = pneg %p41
        $region42: #{tpu_custom_call.1} parent=39 // pred_check_branch
          %268 = sbr.rel (%p266) target = $region44
        $region43: #{tpu_custom_call.1} parent=39 // pred_region
          %s269 = sand.u32 %s31, 1
          %s270 = scalar_lea.sflag [#allocation4], %s269
          %s271 = sand.u32 %s31, 1
          %s272 = smul.addr %s271, 432
          %s273 = scalar_lea.vmem [#allocation3], %s272
          %s275 = ssub.s32 6912, 6912
          %276 = vsyncadd %s270, %s275
          %s277 = smul.addr %s21, 54
          %s278 = smul.addr %s277, 128
          %s279 = scalar_lea.hbm %s0, %s278
          %s280 = sshll.u32 %s273, 4
          %s281 = int_to_ptr.vmem [resolvable:$true] %s280
          %286 = dma.hbm_to_vmem [thread:$0]  %s279, 6912, %s281, %s270, 128, 128, 8
        $region44: #{tpu_custom_call.1} parent=39 // pred_fallthru
          _
      $region40: #{tpu_custom_call.1} parent=5 // pred_fallthru
        _
      %p287 = scmp.le.s32.totalorder 1, %s21
      %p288 = scmp.lt.s32.totalorder %s21, 3
      %p289 = pnand %p287, %p288
      %p290 = pneg %p289
      // Predicated region
      $region45: #{tpu_custom_call.1} parent=5 // pred_check
        _
      $region46: #{tpu_custom_call.1} parent=5 // pred_check_branch
        %292 = sbr.rel (%p289) target = $region48
      $region47: #{tpu_custom_call.1} parent=5 // pred_region
        %s293 = ssub.s32 %s21, 1
        %s294 = sand.u32 %s34, 1
        %s295 = scalar_lea.sflag [#allocation4], %s294
        %s296 = sand.u32 %s34, 1
        %s297 = smul.addr %s296, 432
        %s298 = scalar_lea.vmem [#allocation3], %s297
        // Predicated region
        $region49: #{tpu_custom_call.1} parent=47 // pred_check
          %p299 = pneg %p47
        $region50: #{tpu_custom_call.1} parent=47 // pred_check_branch
          %301 = sbr.rel (%p299) target = $region52
        $region51: #{tpu_custom_call.1} parent=47 // pred_region
          %302 = dma.done %s295, 6912
        $region52: #{tpu_custom_call.1} parent=47 // pred_fallthru
          _
        // Predicated region
        $region53: #{tpu_custom_call.1} parent=47 // pred_check
          %p303 = pneg %p68
        $region54: #{tpu_custom_call.1} parent=47 // pred_check_branch
          %305 = sbr.rel (%p303) target = $region56
        $region55: #{tpu_custom_call.1} parent=47 // pred_region
          %306 = dma.done [#allocation7], 9216
        $region56: #{tpu_custom_call.1} parent=47 // pred_fallthru
          _
        // Predicated region
        $region57: #{tpu_custom_call.1} parent=47 // pred_check
          %p307 = pneg %p110
        $region58: #{tpu_custom_call.1} parent=47 // pred_check_branch
          %309 = sbr.rel (%p307) target = $region60
        $region59: #{tpu_custom_call.1} parent=47 // pred_region
          %310 = dma.done [#allocation7], 9216
        $region60: #{tpu_custom_call.1} parent=47 // pred_fallthru
          _
        // Predicated region
        $region61: #{tpu_custom_call.1} parent=47 // pred_check
          %p311 = pneg %p152
        $region62: #{tpu_custom_call.1} parent=47 // pred_check_branch
          %313 = sbr.rel (%p311) target = $region64
        $region63: #{tpu_custom_call.1} parent=47 // pred_region
          %314 = dma.done [#allocation10], 1024
        $region64: #{tpu_custom_call.1} parent=47 // pred_fallthru
          _
        %s315 = sand.u32 %s34, 1
        %s316 = scalar_lea.sflag [#allocation4], %s315
        %s317 = sand.u32 %s34, 1
        %s318 = smul.addr %s317, 432
        %s319 = scalar_lea.vmem [#allocation3], %s318
        %p320 = pneg %p47
        %p321 = pneg %p44
        %p322 = pneg %p68
        %p323 = pneg %p65
        %p324 = pneg %p89
        %p325 = pneg %p86
        %p326 = pneg %p110
        %p327 = pneg %p107
        %p328 = pneg %p131
        %p329 = pneg %p128
        %p330 = pneg %p152
        %p331 = pneg %p149
        %p332 = pneg %p173
        %p333 = pneg %p170
        %p334 = pneg %p199
        %p335 = pneg %p196
        %s336 = sand.u32 %s186, 1
        %s337 = scalar_lea.sflag [#allocation5], %s336
        %s338 = sand.u32 %s186, 1
        %s339 = smul.addr %s338, 256
        %s340 = scalar_lea.vmem [#allocation11], %s339
        %342 = vst [vmem:[#allocation2] sm:$0xff] 0
        %343 = vst [vmem:[#allocation2 + $0x8] sm:$0xff] 0
        %s344 = scalar_lea.vmem [#allocation2], 272
        %345 = vst [vmem:[%s344] sm:$0xff] 0
        %346 = vst [vmem:[%s344 + $0x8] sm:$0xff] 0
        %347 = vst [vmem:[#allocation2] sm:$0xf] 0
        %348 = vst [vmem:[#allocation2 + $0x10] sm:$0xf] 0
        %349 = vst [vmem:[#allocation2 + $0x20] sm:$0xf] 0
        %350 = vst [vmem:[#allocation2 + $0x30] sm:$0xf] 0
        %351 = vst [vmem:[#allocation2 + $0x40] sm:$0xf] 0
        %352 = vst [vmem:[#allocation2 + $0x50] sm:$0xf] 0
        %353 = vst [vmem:[#allocation2 + $0x60] sm:$0xf] 0
        %354 = vst [vmem:[#allocation2 + $0x70] sm:$0xf] 0
        %355 = vst [vmem:[#allocation2 + $0x80] sm:$0xf] 0
        %356 = vst [vmem:[#allocation2 + $0x90] sm:$0xf] 0
        %357 = vst [vmem:[#allocation2 + $0xa0] sm:$0xf] 0
        %358 = vst [vmem:[#allocation2 + $0xb0] sm:$0xf] 0
        %359 = vst [vmem:[#allocation2 + $0xc0] sm:$0xf] 0
        %360 = vst [vmem:[#allocation2 + $0xd0] sm:$0xf] 0
        %361 = vst [vmem:[#allocation2 + $0xe0] sm:$0xf] 0
        %362 = vst [vmem:[#allocation2 + $0xf0] sm:$0xf] 0
        %363 = vst [vmem:[#allocation2 + $0x100] sm:$0xf] 0
        %364 = vst [vmem:[#allocation2 + $0x110] sm:$0xf] 0
        %365 = vst [vmem:[#allocation2 + $0x8] sm:$0xf0] 0
        %366 = vst [vmem:[#allocation2 + $0x18] sm:$0xf0] 0
        %367 = vst [vmem:[#allocation2 + $0x28] sm:$0xf0] 0
        %368 = vst [vmem:[#allocation2 + $0x38] sm:$0xf0] 0
        %369 = vst [vmem:[#allocation2 + $0x48] sm:$0xf0] 0
        %370 = vst [vmem:[#allocation2 + $0x58] sm:$0xf0] 0
        %371 = vst [vmem:[#allocation2 + $0x68] sm:$0xf0] 0
        %372 = vst [vmem:[#allocation2 + $0x78] sm:$0xf0] 0
        %373 = vst [vmem:[#allocation2 + $0x88] sm:$0xf0] 0
        %374 = vst [vmem:[#allocation2 + $0x98] sm:$0xf0] 0
        %375 = vst [vmem:[#allocation2 + $0xa8] sm:$0xf0] 0
        %376 = vst [vmem:[#allocation2 + $0xb8] sm:$0xf0] 0
        %377 = vst [vmem:[#allocation2 + $0xc8] sm:$0xf0] 0
        %378 = vst [vmem:[#allocation2 + $0xd8] sm:$0xf0] 0
        %379 = vst [vmem:[#allocation2 + $0xe8] sm:$0xf0] 0
        %380 = vst [vmem:[#allocation2 + $0xf8] sm:$0xf0] 0
        %381 = vst [vmem:[#allocation2 + $0x108] sm:$0xf0] 0
        %382 = vst [vmem:[#allocation2 + $0x118] sm:$0xf0] 0
        %v383 = vld [vmem:[%s298] sm:$0xff]
        %v384 = vld [vmem:[%s298 + $0x8] sm:$0xff]
        %v385 = vld [vmem:[%s298 + $0x10] sm:$0xff]
        %v386 = vld [vmem:[%s298 + $0x18] sm:$0xff]
        %v387 = vld [vmem:[%s298 + $0x20] sm:$0xff]
        %v388 = vld [vmem:[%s298 + $0x28] sm:$0xff]
        %v389 = vld [vmem:[%s298 + $0x30] sm:$0xff]
        %v390 = vld [vmem:[%s298 + $0x38] sm:$0xff]
        %v391 = vld [vmem:[%s298 + $0x40] sm:$0xff]
        %v392 = vld [vmem:[%s298 + $0x48] sm:$0xff]
        %v393 = vld [vmem:[%s298 + $0x50] sm:$0xff]
        %v394 = vld [vmem:[%s298 + $0x58] sm:$0xff]
        %v395 = vld [vmem:[%s298 + $0x60] sm:$0xff]
        %v396 = vld [vmem:[%s298 + $0x68] sm:$0xff]
        %v397 = vld [vmem:[%s298 + $0x70] sm:$0xff]
        %v398 = vld [vmem:[%s298 + $0x78] sm:$0xff]
        %v399 = vld [vmem:[%s298 + $0x80] sm:$0xff]
        %v400 = vld [vmem:[%s298 + $0x88] sm:$0xff]
        %v401 = vld [vmem:[%s298 + $0x90] sm:$0xff]
        %v402 = vld [vmem:[%s298 + $0x98] sm:$0xff]
        %v403 = vld [vmem:[%s298 + $0xa0] sm:$0xff]
        %v404 = vld [vmem:[%s298 + $0xa8] sm:$0xff]
        %v405 = vld [vmem:[%s298 + $0xb0] sm:$0xff]
        %v406 = vld [vmem:[%s298 + $0xb8] sm:$0xff]
        %v407 = vld [vmem:[%s298 + $0xc0] sm:$0xff]
        %v408 = vld [vmem:[%s298 + $0xc8] sm:$0xff]
        %v409 = vld [vmem:[%s298 + $0xd0] sm:$0xff]
        %v410 = vld [vmem:[%s298 + $0xd8] sm:$0xff]
        %v411 = vld [vmem:[%s298 + $0xe0] sm:$0xff]
        %v412 = vld [vmem:[%s298 + $0xe8] sm:$0xff]
        %v413 = vld [vmem:[%s298 + $0xf0] sm:$0xff]
        %v414 = vld [vmem:[%s298 + $0xf8] sm:$0xff]
        %v415 = vld [vmem:[%s298 + $0x100] sm:$0xff]
        %v416 = vld [vmem:[%s298 + $0x108] sm:$0xff]
        %v417 = vld [vmem:[%s298 + $0x110] sm:$0xff]
        %v418 = vld [vmem:[%s298 + $0x118] sm:$0xff]
        %v419 = vld [vmem:[%s298 + $0x120] sm:$0xff]
        %v420 = vld [vmem:[%s298 + $0x128] sm:$0xff]
        %v421 = vld [vmem:[%s298 + $0x130] sm:$0xff]
        %v422 = vld [vmem:[%s298 + $0x138] sm:$0xff]
        %v423 = vld [vmem:[%s298 + $0x140] sm:$0xff]
        %v424 = vld [vmem:[%s298 + $0x148] sm:$0xff]
        %v425 = vld [vmem:[%s298 + $0x150] sm:$0xff]
        %v426 = vld [vmem:[%s298 + $0x158] sm:$0xff]
        %v427 = vld [vmem:[%s298 + $0x160] sm:$0xff]
        %v428 = vld [vmem:[%s298 + $0x168] sm:$0xff]
        %v429 = vld [vmem:[%s298 + $0x170] sm:$0xff]
        %v430 = vld [vmem:[%s298 + $0x178] sm:$0xff]
        %v431 = vld [vmem:[%s298 + $0x180] sm:$0xff]
        %v432 = vld [vmem:[%s298 + $0x188] sm:$0xff]
        %v433 = vld [vmem:[%s298 + $0x190] sm:$0xff]
        %v434 = vld [vmem:[%s298 + $0x198] sm:$0xff]
        %v435 = vld [vmem:[%s298 + $0x1a0] sm:$0xff]
        %v436 = vld [vmem:[%s298 + $0x1a8] sm:$0xff]
        %v437 = vpack.c.bf16 %v384, %v383
        %v438 = vpack.c.bf16 %v385, %v385
        %v439 = vpack.c.bf16 %v387, %v386
        %v440 = vpack.c.bf16 %v388, %v388
        %v441 = vpack.c.bf16 %v390, %v389
        %v442 = vpack.c.bf16 %v391, %v391
        %v443 = vpack.c.bf16 %v393, %v392
        %v444 = vpack.c.bf16 %v394, %v394
        %v445 = vpack.c.bf16 %v396, %v395
        %v446 = vpack.c.bf16 %v397, %v397
        %v447 = vpack.c.bf16 %v399, %v398
        %v448 = vpack.c.bf16 %v400, %v400
        %v449 = vpack.c.bf16 %v402, %v401
        %v450 = vpack.c.bf16 %v403, %v403
        %v451 = vpack.c.bf16 %v405, %v404
        %v452 = vpack.c.bf16 %v406, %v406
        %v453 = vpack.c.bf16 %v408, %v407
        %v454 = vpack.c.bf16 %v409, %v409
        %v455 = vpack.c.bf16 %v411, %v410
        %v456 = vpack.c.bf16 %v412, %v412
        %v457 = vpack.c.bf16 %v414, %v413
        %v458 = vpack.c.bf16 %v415, %v415
        %v459 = vpack.c.bf16 %v417, %v416
        %v460 = vpack.c.bf16 %v418, %v418
        %v461 = vpack.c.bf16 %v420, %v419
        %v462 = vpack.c.bf16 %v421, %v421
        %v463 = vpack.c.bf16 %v423, %v422
        %v464 = vpack.c.bf16 %v424, %v424
        %v465 = vpack.c.bf16 %v426, %v425
        %v466 = vpack.c.bf16 %v427, %v427
        %v467 = vpack.c.bf16 %v429, %v428
        %v468 = vpack.c.bf16 %v430, %v430
        %v469 = vpack.c.bf16 %v432, %v431
        %v470 = vpack.c.bf16 %v433, %v433
        %v471 = vpack.c.bf16 %v435, %v434
        %v472 = vpack.c.bf16 %v436, %v436
        %vm473 = vsmask.f32 7424
        %v475 = vshrl.u32 %v437, 16
        %v477 = vshll.u32 %v437, 16
        %v479 = vrot.slane %v477, 1
        %v480 = vor.u32 %v475, %v479
        %v482 = vshll.u32 %v438, 16
        %v484 = vrot.slane %v482, 1
        %v485 = vsel %vm473, %v480, %v484
        %v487 = vshrl.u32 %v439, 16
        %v489 = vshll.u32 %v439, 16
        %v491 = vrot.slane %v489, 1
        %v492 = vor.u32 %v487, %v491
        %v494 = vshll.u32 %v440, 16
        %v496 = vrot.slane %v494, 1
        %v497 = vsel %vm473, %v492, %v496
        %v499 = vshrl.u32 %v441, 16
        %v501 = vshll.u32 %v441, 16
        %v503 = vrot.slane %v501, 1
        %v504 = vor.u32 %v499, %v503
        %v506 = vshll.u32 %v442, 16
        %v508 = vrot.slane %v506, 1
        %v509 = vsel %vm473, %v504, %v508
        %v511 = vshrl.u32 %v443, 16
        %v513 = vshll.u32 %v443, 16
        %v515 = vrot.slane %v513, 1
        %v516 = vor.u32 %v511, %v515
        %v518 = vshll.u32 %v444, 16
        %v520 = vrot.slane %v518, 1
        %v521 = vsel %vm473, %v516, %v520
        %v523 = vshrl.u32 %v445, 16
        %v525 = vshll.u32 %v445, 16
        %v527 = vrot.slane %v525, 1
        %v528 = vor.u32 %v523, %v527
        %v530 = vshll.u32 %v446, 16
        %v532 = vrot.slane %v530, 1
        %v533 = vsel %vm473, %v528, %v532
        %v535 = vshrl.u32 %v447, 16
        %v537 = vshll.u32 %v447, 16
        %v539 = vrot.slane %v537, 1
        %v540 = vor.u32 %v535, %v539
        %v542 = vshll.u32 %v448, 16
        %v544 = vrot.slane %v542, 1
        %v545 = vsel %vm473, %v540, %v544
        %v547 = vshrl.u32 %v449, 16
        %v549 = vshll.u32 %v449, 16
        %v551 = vrot.slane %v549, 1
        %v552 = vor.u32 %v547, %v551
        %v554 = vshll.u32 %v450, 16
        %v556 = vrot.slane %v554, 1
        %v557 = vsel %vm473, %v552, %v556
        %v559 = vshrl.u32 %v451, 16
        %v561 = vshll.u32 %v451, 16
        %v563 = vrot.slane %v561, 1
        %v564 = vor.u32 %v559, %v563
        %v566 = vshll.u32 %v452, 16
        %v568 = vrot.slane %v566, 1
        %v569 = vsel %vm473, %v564, %v568
        %v571 = vshrl.u32 %v453, 16
        %v573 = vshll.u32 %v453, 16
        %v575 = vrot.slane %v573, 1
        %v576 = vor.u32 %v571, %v575
        %v578 = vshll.u32 %v454, 16
        %v580 = vrot.slane %v578, 1
        %v581 = vsel %vm473, %v576, %v580
        %v583 = vshrl.u32 %v455, 16
        %v585 = vshll.u32 %v455, 16
        %v587 = vrot.slane %v585, 1
        %v588 = vor.u32 %v583, %v587
        %v590 = vshll.u32 %v456, 16
        %v592 = vrot.slane %v590, 1
        %v593 = vsel %vm473, %v588, %v592
        %v595 = vshrl.u32 %v457, 16
        %v597 = vshll.u32 %v457, 16
        %v599 = vrot.slane %v597, 1
        %v600 = vor.u32 %v595, %v599
        %v602 = vshll.u32 %v458, 16
        %v604 = vrot.slane %v602, 1
        %v605 = vsel %vm473, %v600, %v604
        %v607 = vshrl.u32 %v459, 16
        %v609 = vshll.u32 %v459, 16
        %v611 = vrot.slane %v609, 1
        %v612 = vor.u32 %v607, %v611
        %v614 = vshll.u32 %v460, 16
        %v616 = vrot.slane %v614, 1
        %v617 = vsel %vm473, %v612, %v616
        %v619 = vshrl.u32 %v461, 16
        %v621 = vshll.u32 %v461, 16
        %v623 = vrot.slane %v621, 1
        %v624 = vor.u32 %v619, %v623
        %v626 = vshll.u32 %v462, 16
        %v628 = vrot.slane %v626, 1
        %v629 = vsel %vm473, %v624, %v628
        %v631 = vshrl.u32 %v463, 16
        %v633 = vshll.u32 %v463, 16
        %v635 = vrot.slane %v633, 1
        %v636 = vor.u32 %v631, %v635
        %v638 = vshll.u32 %v464, 16
        %v640 = vrot.slane %v638, 1
        %v641 = vsel %vm473, %v636, %v640
        %v643 = vshrl.u32 %v465, 16
        %v645 = vshll.u32 %v465, 16
        %v647 = vrot.slane %v645, 1
        %v648 = vor.u32 %v643, %v647
        %v650 = vshll.u32 %v466, 16
        %v652 = vrot.slane %v650, 1
        %v653 = vsel %vm473, %v648, %v652
        %v655 = vshrl.u32 %v467, 16
        %v657 = vshll.u32 %v467, 16
        %v659 = vrot.slane %v657, 1
        %v660 = vor.u32 %v655, %v659
        %v662 = vshll.u32 %v468, 16
        %v664 = vrot.slane %v662, 1
        %v665 = vsel %vm473, %v660, %v664
        %v667 = vshrl.u32 %v469, 16
        %v669 = vshll.u32 %v469, 16
        %v671 = vrot.slane %v669, 1
        %v672 = vor.u32 %v667, %v671
        %v674 = vshll.u32 %v470, 16
        %v676 = vrot.slane %v674, 1
        %v677 = vsel %vm473, %v672, %v676
        %v679 = vshrl.u32 %v471, 16
        %v681 = vshll.u32 %v471, 16
        %v683 = vrot.slane %v681, 1
        %v684 = vor.u32 %v679, %v683
        %v686 = vshll.u32 %v472, 16
        %v688 = vrot.slane %v686, 1
        %v689 = vsel %vm473, %v684, %v688
        %vm744 = vcmask 1046528
        %v745 = vrot.slane %v437, 1
        %v746 = vrot.slane %v438, 1
        %v747 = vsel %vm744, %v745, %v746
        %v748 = vrot.slane %v439, 1
        %v749 = vrot.slane %v440, 1
        %v750 = vsel %vm744, %v748, %v749
        %v751 = vrot.slane %v441, 1
        %v752 = vrot.slane %v442, 1
        %v753 = vsel %vm744, %v751, %v752
        %v754 = vrot.slane %v443, 1
        %v755 = vrot.slane %v444, 1
        %v756 = vsel %vm744, %v754, %v755
        %v757 = vrot.slane %v445, 1
        %v758 = vrot.slane %v446, 1
        %v759 = vsel %vm744, %v757, %v758
        %v760 = vrot.slane %v447, 1
        %v761 = vrot.slane %v448, 1
        %v762 = vsel %vm744, %v760, %v761
        %v763 = vrot.slane %v449, 1
        %v764 = vrot.slane %v450, 1
        %v765 = vsel %vm744, %v763, %v764
        %v766 = vrot.slane %v451, 1
        %v767 = vrot.slane %v452, 1
        %v768 = vsel %vm744, %v766, %v767
        %v769 = vrot.slane %v453, 1
        %v770 = vrot.slane %v454, 1
        %v771 = vsel %vm744, %v769, %v770
        %v772 = vrot.slane %v455, 1
        %v773 = vrot.slane %v456, 1
        %v774 = vsel %vm744, %v772, %v773
        %v775 = vrot.slane %v457, 1
        %v776 = vrot.slane %v458, 1
        %v777 = vsel %vm744, %v775, %v776
        %v778 = vrot.slane %v459, 1
        %v779 = vrot.slane %v460, 1
        %v780 = vsel %vm744, %v778, %v779
        %v781 = vrot.slane %v461, 1
        %v782 = vrot.slane %v462, 1
        %v783 = vsel %vm744, %v781, %v782
        %v784 = vrot.slane %v463, 1
        %v785 = vrot.slane %v464, 1
        %v786 = vsel %vm744, %v784, %v785
        %v787 = vrot.slane %v465, 1
        %v788 = vrot.slane %v466, 1
        %v789 = vsel %vm744, %v787, %v788
        %v790 = vrot.slane %v467, 1
        %v791 = vrot.slane %v468, 1
        %v792 = vsel %vm744, %v790, %v791
        %v793 = vrot.slane %v469, 1
        %v794 = vrot.slane %v470, 1
        %v795 = vsel %vm744, %v793, %v794
        %v796 = vrot.slane %v471, 1
        %v797 = vrot.slane %v472, 1
        %v798 = vsel %vm744, %v796, %v797
        %v817 = vld [vmem:[#allocation6] sm:$0xf]
        %v818 = vld [vmem:[#allocation6 + $0x4] sm:$0xf]
        %v819 = vld [vmem:[#allocation6 + $0x8] sm:$0xf]
        %v820 = vld [vmem:[#allocation6 + $0xc] sm:$0xf]
        %v821 = vld [vmem:[#allocation6 + $0x10] sm:$0xf]
        %v822 = vld [vmem:[#allocation6 + $0x14] sm:$0xf]
        %v823 = vld [vmem:[#allocation6 + $0x18] sm:$0xf]
        %v824 = vld [vmem:[#allocation6 + $0x1c] sm:$0xf]
        %v825 = vld [vmem:[#allocation6 + $0x20] sm:$0xf]
        %v826 = vld [vmem:[#allocation6 + $0x24] sm:$0xf]
        %v827 = vld [vmem:[#allocation6 + $0x28] sm:$0xf]
        %v828 = vld [vmem:[#allocation6 + $0x2c] sm:$0xf]
        %v829 = vld [vmem:[#allocation6 + $0x30] sm:$0xf]
        %v830 = vld [vmem:[#allocation6 + $0x34] sm:$0xf]
        %v831 = vld [vmem:[#allocation6 + $0x38] sm:$0xf]
        %v832 = vld [vmem:[#allocation6 + $0x3c] sm:$0xf]
        %v833 = vld [vmem:[#allocation6 + $0x40] sm:$0xf]
        %v834 = vld [vmem:[#allocation6 + $0x44] sm:$0xf]
        %v835 = vld [vmem:[#allocation6 + $0x48] sm:$0xf]
        %v836 = vld [vmem:[#allocation6 + $0x4c] sm:$0xf]
        %v837 = vld [vmem:[#allocation6 + $0x50] sm:$0xf]
        %v838 = vld [vmem:[#allocation6 + $0x54] sm:$0xf]
        %v839 = vld [vmem:[#allocation6 + $0x58] sm:$0xf]
        %v840 = vld [vmem:[#allocation6 + $0x5c] sm:$0xf]
        %v841 = vld [vmem:[#allocation6 + $0x60] sm:$0xf]
        %v842 = vld [vmem:[#allocation6 + $0x64] sm:$0xf]
        %v843 = vld [vmem:[#allocation6 + $0x68] sm:$0xf]
        %v844 = vld [vmem:[#allocation6 + $0x6c] sm:$0xf]
        %v845 = vld [vmem:[#allocation6 + $0x70] sm:$0xf]
        %v846 = vld [vmem:[#allocation6 + $0x74] sm:$0xf]
        %v847 = vld [vmem:[#allocation6 + $0x78] sm:$0xf]
        %v848 = vld [vmem:[#allocation6 + $0x7c] sm:$0xf]
        %v849 = vld [vmem:[#allocation6 + $0x80] sm:$0xf]
        %v850 = vld [vmem:[#allocation6 + $0x84] sm:$0xf]
        %v851 = vld [vmem:[#allocation6 + $0x88] sm:$0xf]
        %v852 = vld [vmem:[#allocation6 + $0x8c] sm:$0xf]
        %v853 = vld [vmem:[#allocation6 + $0x90] sm:$0xf]
        %v854 = vld [vmem:[#allocation6 + $0x94] sm:$0xf]
        %v855 = vld [vmem:[#allocation6 + $0x98] sm:$0xf]
        %v856 = vld [vmem:[#allocation6 + $0x9c] sm:$0xf]
        %v857 = vld [vmem:[#allocation6 + $0xa0] sm:$0xf]
        %v858 = vld [vmem:[#allocation6 + $0xa4] sm:$0xf]
        %v859 = vld [vmem:[#allocation6 + $0xa8] sm:$0xf]
        %v860 = vld [vmem:[#allocation6 + $0xac] sm:$0xf]
        %v861 = vld [vmem:[#allocation6 + $0xb0] sm:$0xf]
        %v862 = vld [vmem:[#allocation6 + $0xb4] sm:$0xf]
        %v863 = vld [vmem:[#allocation6 + $0xb8] sm:$0xf]
        %v864 = vld [vmem:[#allocation6 + $0xbc] sm:$0xf]
        %s865 = scalar_lea.vmem [#allocation6], 192
        %v866 = vld [vmem:[%s865] sm:$0xf]
        %v867 = vld [vmem:[%s865 + $0x4] sm:$0xf]
        %v868 = vld [vmem:[%s865 + $0x8] sm:$0xf]
        %v869 = vld [vmem:[%s865 + $0xc] sm:$0xf]
        %v870 = vld [vmem:[%s865 + $0x10] sm:$0xf]
        %v871 = vld [vmem:[%s865 + $0x14] sm:$0xf]
        %v872 = vld [vmem:[%s865 + $0x18] sm:$0xf]
        %v873 = vld [vmem:[%s865 + $0x1c] sm:$0xf]
        %v874 = vld [vmem:[%s865 + $0x20] sm:$0xf]
        %v875 = vld [vmem:[%s865 + $0x24] sm:$0xf]
        %v876 = vld [vmem:[%s865 + $0x28] sm:$0xf]
        %v877 = vld [vmem:[%s865 + $0x2c] sm:$0xf]
        %v878 = vld [vmem:[%s865 + $0x30] sm:$0xf]
        %v879 = vld [vmem:[%s865 + $0x34] sm:$0xf]
        %v880 = vld [vmem:[%s865 + $0x38] sm:$0xf]
        %v881 = vld [vmem:[%s865 + $0x3c] sm:$0xf]
        %v882 = vld [vmem:[%s865 + $0x40] sm:$0xf]
        %v883 = vld [vmem:[%s865 + $0x44] sm:$0xf]
        %v884 = vld [vmem:[%s865 + $0x48] sm:$0xf]
        %v885 = vld [vmem:[%s865 + $0x4c] sm:$0xf]
        %v886 = vld [vmem:[%s865 + $0x50] sm:$0xf]
        %v887 = vld [vmem:[%s865 + $0x54] sm:$0xf]
        %v888 = vld [vmem:[%s865 + $0x58] sm:$0xf]
        %v889 = vld [vmem:[%s865 + $0x5c] sm:$0xf]
        %v890 = vld [vmem:[%s865 + $0x60] sm:$0xf]
        %v891 = vld [vmem:[%s865 + $0x64] sm:$0xf]
        %v892 = vld [vmem:[%s865 + $0x68] sm:$0xf]
        %v893 = vld [vmem:[%s865 + $0x6c] sm:$0xf]
        %v894 = vld [vmem:[%s865 + $0x70] sm:$0xf]
        %v895 = vld [vmem:[%s865 + $0x74] sm:$0xf]
        %v896 = vld [vmem:[%s865 + $0x78] sm:$0xf]
        %v897 = vld [vmem:[%s865 + $0x7c] sm:$0xf]
        %v898 = vld [vmem:[%s865 + $0x80] sm:$0xf]
        %v899 = vld [vmem:[%s865 + $0x84] sm:$0xf]
        %v900 = vld [vmem:[%s865 + $0x88] sm:$0xf]
        %v901 = vld [vmem:[%s865 + $0x8c] sm:$0xf]
        %v902 = vld [vmem:[%s865 + $0x90] sm:$0xf]
        %v903 = vld [vmem:[%s865 + $0x94] sm:$0xf]
        %v904 = vld [vmem:[%s865 + $0x98] sm:$0xf]
        %v905 = vld [vmem:[%s865 + $0x9c] sm:$0xf]
        %v906 = vld [vmem:[%s865 + $0xa0] sm:$0xf]
        %v907 = vld [vmem:[%s865 + $0xa4] sm:$0xf]
        %v908 = vld [vmem:[%s865 + $0xa8] sm:$0xf]
        %v909 = vld [vmem:[%s865 + $0xac] sm:$0xf]
        %v910 = vld [vmem:[%s865 + $0xb0] sm:$0xf]
        %v911 = vld [vmem:[%s865 + $0xb4] sm:$0xf]
        %v912 = vld [vmem:[%s865 + $0xb8] sm:$0xf]
        %v913 = vld [vmem:[%s865 + $0xbc] sm:$0xf]
        %v962 = vunpack.c.l.b16 %v866
        %v963 = vunpack.c.l.b16 %v867
        %v964 = vunpack.c.l.b16 %v868
        %v965 = vunpack.c.l.b16 %v869
        %v966 = vunpack.c.l.b16 %v870
        %v967 = vunpack.c.l.b16 %v871
        %v968 = vunpack.c.l.b16 %v872
        %v969 = vunpack.c.l.b16 %v873
        %v970 = vunpack.c.l.b16 %v874
        %v971 = vunpack.c.l.b16 %v875
        %v972 = vunpack.c.l.b16 %v876
        %v973 = vunpack.c.l.b16 %v877
        %v974 = vunpack.c.l.b16 %v878
        %v975 = vunpack.c.l.b16 %v879
        %v976 = vunpack.c.l.b16 %v880
        %v977 = vunpack.c.l.b16 %v881
        %v978 = vunpack.c.l.b16 %v882
        %v979 = vunpack.c.l.b16 %v883
        %v980 = vunpack.c.l.b16 %v884
        %v981 = vunpack.c.l.b16 %v885
        %v982 = vunpack.c.l.b16 %v886
        %v983 = vunpack.c.l.b16 %v887
        %v984 = vunpack.c.l.b16 %v888
        %v985 = vunpack.c.l.b16 %v889
        %v986 = vunpack.c.l.b16 %v890
        %v987 = vunpack.c.l.b16 %v891
        %v988 = vunpack.c.l.b16 %v892
        %v989 = vunpack.c.l.b16 %v893
        %v990 = vunpack.c.l.b16 %v894
        %v991 = vunpack.c.l.b16 %v895
        %v992 = vunpack.c.l.b16 %v896
        %v993 = vunpack.c.l.b16 %v897
        %v994 = vunpack.c.l.b16 %v898
        %v995 = vunpack.c.l.b16 %v899
        %v996 = vunpack.c.l.b16 %v900
        %v997 = vunpack.c.l.b16 %v901
        %v998 = vunpack.c.l.b16 %v902
        %v999 = vunpack.c.l.b16 %v903
        %v1000 = vunpack.c.l.b16 %v904
        %v1001 = vunpack.c.l.b16 %v905
        %v1002 = vunpack.c.l.b16 %v906
        %v1003 = vunpack.c.l.b16 %v907
        %v1004 = vunpack.c.l.b16 %v908
        %v1005 = vunpack.c.l.b16 %v909
        %v1006 = vunpack.c.l.b16 %v910
        %v1007 = vunpack.c.l.b16 %v911
        %v1008 = vunpack.c.l.b16 %v912
        %v1009 = vunpack.c.l.b16 %v913
        %v1010 = vpack.c.b16 %v963, %v962
        %v1011 = vpack.c.b16 %v965, %v964
        %v1012 = vpack.c.b16 %v967, %v966
        %v1013 = vpack.c.b16 %v969, %v968
        %v1014 = vpack.c.b16 %v971, %v970
        %v1015 = vpack.c.b16 %v973, %v972
        %v1016 = vpack.c.b16 %v975, %v974
        %v1017 = vpack.c.b16 %v977, %v976
        %v1018 = vpack.c.b16 %v979, %v978
        %v1019 = vpack.c.b16 %v981, %v980
        %v1020 = vpack.c.b16 %v983, %v982
        %v1021 = vpack.c.b16 %v985, %v984
        %v1022 = vpack.c.b16 %v987, %v986
        %v1023 = vpack.c.b16 %v989, %v988
        %v1024 = vpack.c.b16 %v991, %v990
        %v1025 = vpack.c.b16 %v993, %v992
        %v1026 = vpack.c.b16 %v995, %v994
        %v1027 = vpack.c.b16 %v997, %v996
        %v1028 = vpack.c.b16 %v999, %v998
        %v1029 = vpack.c.b16 %v1001, %v1000
        %v1030 = vpack.c.b16 %v1003, %v1002
        %v1031 = vpack.c.b16 %v1005, %v1004
        %v1032 = vpack.c.b16 %v1007, %v1006
        %v1033 = vpack.c.b16 %v1009, %v1008
        %1058 = vmatprep.subr.bf16.mxu0 0
        %1059 = vmatpush1.bf16.msra.mxu0 %v1010
        %1060 = vmatprep.subr.bf16.mxu0 0
        %1061 = vmatpush1.bf16.msra.mxu0 %v1011
        %1062 = vmatprep.subr.bf16.mxu0 0
        %1063 = vmatpush1.bf16.msra.mxu0 %v1012
        %1064 = vmatprep.subr.bf16.mxu0 0
        %1065 = vmatpush1.bf16.msra.mxu0 %v1013
        %1066 = vmatprep.subr.bf16.mxu0 0
        %1067 = vmatpush1.bf16.msra.mxu0 %v1014
        %1068 = vmatprep.subr.bf16.mxu0 0
        %1069 = vmatpush1.bf16.msra.mxu0 %v1015
        %1070 = vmatprep.subr.bf16.mxu0 0
        %1071 = vmatpush1.bf16.msra.mxu0 %v1016
        %1072 = vmatprep.subr.bf16.mxu0 0
        %1073 = vmatpush1.bf16.msra.mxu0 %v1017
        %1074 = vmatprep.subr.bf16.mxu0 0
        %1075 = vmatpush1.bf16.msra.mxu0 %v1018
        %1076 = vmatprep.subr.bf16.mxu0 0
        %1077 = vmatpush1.bf16.msra.mxu0 %v1019
        %1078 = vmatprep.subr.bf16.mxu0 0
        %1079 = vmatpush1.bf16.msra.mxu0 %v1020
        %1080 = vmatprep.subr.bf16.mxu0 0
        %1081 = vmatpush1.bf16.msra.mxu0 %v1021
        %1082 = vmatprep.subr.bf16.mxu0 0
        %1083 = vmatpush1.bf16.msra.mxu0 %v1022
        %1084 = vmatprep.subr.bf16.mxu0 0
        %1085 = vmatpush1.bf16.msra.mxu0 %v1023
        %1086 = vmatprep.subr.bf16.mxu0 0
        %1087 = vmatpush1.bf16.msra.mxu0 %v1024
        %1088 = vmatprep.subr.bf16.mxu0 0
        %1089 = vmatpush1.bf16.msra.mxu0 %v1025
        %1090 = vmatprep.mubr.bf16.mxu0 %v497
        %1091 = vmatmul.mubr.bf16.gmra.mrb[0].mxu0 %v439
        %v1092 = vpop.f32.mrb[0].mxu0
        %v1093 = vadd.f32 0.0, %v1092
        %v1094 = vpop.f32.mrb[0].mxu0
        %v1095 = vpop.f32.mrb[0].mxu0
        %v1096 = vadd.f32 0.0, %v1095
        %v1097 = vpop.f32.mrb[0].mxu0
        %1098 = vmatprep.mubr.bf16.mxu0 %v509
        %1099 = vmatmul.mubr.bf16.gmra.mrb[0].mxu0 %v441
        %v1100 = vpop.f32.mrb[0].mxu0
        %v1101 = vadd.f32 0.0, %v1100
        %v1102 = vpop.f32.mrb[0].mxu0
        %v1103 = vpop.f32.mrb[0].mxu0
        %v1104 = vadd.f32 0.0, %v1103
        %v1105 = vpop.f32.mrb[0].mxu0
        %1106 = vmatprep.mubr.bf16.mxu0 %v521
        %1107 = vmatmul.mubr.bf16.gmra.mrb[0].mxu0 %v443
        %v1108 = vpop.f32.mrb[0].mxu0
        %v1109 = vadd.f32 0.0, %v1108
        %v1110 = vpop.f32.mrb[0].mxu0
        %v1111 = vpop.f32.mrb[0].mxu0
        %v1112 = vadd.f32 0.0, %v1111
        %v1113 = vpop.f32.mrb[0].mxu0
        %1114 = vmatprep.mubr.bf16.mxu0 %v533
        %1115 = vmatmul.mubr.bf16.gmra.mrb[0].mxu0 %v445
        %v1116 = vpop.f32.mrb[0].mxu0
        %v1117 = vadd.f32 0.0, %v1116
        %v1118 = vpop.f32.mrb[0].mxu0
        %v1119 = vpop.f32.mrb[0].mxu0
        %v1120 = vadd.f32 0.0, %v1119
        %v1121 = vpop.f32.mrb[0].mxu0
        %1122 = vmatprep.mubr.bf16.mxu0 %v545
        %1123 = vmatmul.mubr.bf16.gmra.mrb[0].mxu0 %v447
        %v1124 = vpop.f32.mrb[0].mxu0
        %v1125 = vadd.f32 0.0, %v1124
        %v1126 = vpop.f32.mrb[0].mxu0
        %v1127 = vpop.f32.mrb[0].mxu0
        %v1128 = vadd.f32 0.0, %v1127
        %v1129 = vpop.f32.mrb[0].mxu0
        %1130 = vmatprep.mubr.bf16.mxu0 %v557
        %1131 = vmatmul.mubr.bf16.gmra.mrb[0].mxu0 %v449
        %v1132 = vpop.f32.mrb[0].mxu0
        %v1133 = vadd.f32 0.0, %v1132
        %v1134 = vpop.f32.mrb[0].mxu0
        %v1135 = vpop.f32.mrb[0].mxu0
        %v1136 = vadd.f32 0.0, %v1135
        %v1137 = vpop.f32.mrb[0].mxu0
        %1138 = vmatprep.mubr.bf16.mxu0 %v569
        %1139 = vmatmul.mubr.bf16.gmra.mrb[0].mxu0 %v451
        %v1140 = vpop.f32.mrb[0].mxu0
        %v1141 = vadd.f32 0.0, %v1140
        %v1142 = vpop.f32.mrb[0].mxu0
        %v1143 = vpop.f32.mrb[0].mxu0
        %v1144 = vadd.f32 0.0, %v1143
        %v1145 = vpop.f32.mrb[0].mxu0
        %1146 = vmatprep.mubr.bf16.mxu0 %v581
        %1147 = vmatmul.mubr.bf16.gmra.mrb[0].mxu0 %v453
        %v1148 = vpop.f32.mrb[0].mxu0
        %v1149 = vadd.f32 0.0, %v1148
        %v1150 = vpop.f32.mrb[0].mxu0
        %v1151 = vpop.f32.mrb[0].mxu0
        %v1152 = vadd.f32 0.0, %v1151
        %v1153 = vpop.f32.mrb[0].mxu0
        %1154 = vmatprep.mubr.bf16.mxu0 %v593
        %1155 = vmatmul.mubr.bf16.gmra.mrb[0].mxu0 %v455
        %v1156 = vpop.f32.mrb[0].mxu0
        %v1157 = vadd.f32 0.0, %v1156
        %v1158 = vpop.f32.mrb[0].mxu0
        %v1159 = vpop.f32.mrb[0].mxu0
        %v1160 = vadd.f32 0.0, %v1159
        %v1161 = vpop.f32.mrb[0].mxu0
        %1162 = vmatprep.mubr.bf16.mxu0 %v605
        %1163 = vmatmul.mubr.bf16.gmra.mrb[0].mxu0 %v457
        %v1164 = vpop.f32.mrb[0].mxu0
        %v1165 = vadd.f32 0.0, %v1164
        %v1166 = vpop.f32.mrb[0].mxu0
        %v1167 = vpop.f32.mrb[0].mxu0
        %v1168 = vadd.f32 0.0, %v1167
        %v1169 = vpop.f32.mrb[0].mxu0
        %1170 = vmatprep.mubr.bf16.mxu0 %v617
        %1171 = vmatmul.mubr.bf16.gmra.mrb[0].mxu0 %v459
        %v1172 = vpop.f32.mrb[0].mxu0
        %v1173 = vadd.f32 0.0, %v1172
        %v1174 = vpop.f32.mrb[0].mxu0
        %v1175 = vpop.f32.mrb[0].mxu0
        %v1176 = vadd.f32 0.0, %v1175
        %v1177 = vpop.f32.mrb[0].mxu0
        %1178 = vmatprep.mubr.bf16.mxu0 %v629
        %1179 = vmatmul.mubr.bf16.gmra.mrb[0].mxu0 %v461
        %v1180 = vpop.f32.mrb[0].mxu0
        %v1181 = vadd.f32 0.0, %v1180
        %v1182 = vpop.f32.mrb[0].mxu0
        %v1183 = vpop.f32.mrb[0].mxu0
        %v1184 = vadd.f32 0.0, %v1183
        %v1185 = vpop.f32.mrb[0].mxu0
        %1186 = vmatprep.mubr.bf16.mxu0 %v641
        %1187 = vmatmul.mubr.bf16.gmra.mrb[0].mxu0 %v463
        %v1188 = vpop.f32.mrb[0].mxu0
        %v1189 = vadd.f32 0.0, %v1188
        %v1190 = vpop.f32.mrb[0].mxu0
        %v1191 = vpop.f32.mrb[0].mxu0
        %v1192 = vadd.f32 0.0, %v1191
        %v1193 = vpop.f32.mrb[0].mxu0
        %1194 = vmatprep.mubr.bf16.mxu0 %v653
        %1195 = vmatmul.mubr.bf16.gmra.mrb[0].mxu0 %v465
        %v1196 = vpop.f32.mrb[0].mxu0
        %v1197 = vadd.f32 0.0, %v1196
        %v1198 = vpop.f32.mrb[0].mxu0
        %v1199 = vpop.f32.mrb[0].mxu0
        %v1200 = vadd.f32 0.0, %v1199
        %v1201 = vpop.f32.mrb[0].mxu0
        %1202 = vmatprep.mubr.bf16.mxu0 %v665
        %1203 = vmatmul.mubr.bf16.gmra.mrb[0].mxu0 %v467
        %v1204 = vpop.f32.mrb[0].mxu0
        %v1205 = vadd.f32 0.0, %v1204
        %v1206 = vpop.f32.mrb[0].mxu0
        %v1207 = vpop.f32.mrb[0].mxu0
        %v1208 = vadd.f32 0.0, %v1207
        %v1209 = vpop.f32.mrb[0].mxu0
        %1210 = vmatprep.mubr.bf16.mxu0 %v677
        %1211 = vmatmul.mubr.bf16.gmra.mrb[0].mxu0 %v469
        %v1212 = vpop.f32.mrb[0].mxu0
        %v1213 = vadd.f32 0.0, %v1212
        %v1214 = vpop.f32.mrb[0].mxu0
        %v1215 = vpop.f32.mrb[0].mxu0
        %v1216 = vadd.f32 0.0, %v1215
        %v1217 = vpop.f32.mrb[0].mxu0
        %1218 = vdwg.mxu0
        %1219 = vmatprep.subr.bf16.mxu0 0
        %1220 = vmatpush1.bf16.msra.mxu0 %v1026
        %1221 = vmatprep.subr.bf16.mxu0 0
        %1222 = vmatpush1.bf16.msra.mxu0 %v1027
        %1223 = vmatprep.subr.bf16.mxu0 0
        %1224 = vmatpush1.bf16.msra.mxu0 %v1028
        %1225 = vmatprep.subr.bf16.mxu0 0
        %1226 = vmatpush1.bf16.msra.mxu0 %v1029
        %1227 = vmatprep.subr.bf16.mxu0 0
        %1228 = vmatpush1.bf16.msra.mxu0 %v1030
        %1229 = vmatprep.subr.bf16.mxu0 0
        %1230 = vmatpush1.bf16.msra.mxu0 %v1031
        %1231 = vmatprep.subr.bf16.mxu0 0
        %1232 = vmatpush1.bf16.msra.mxu0 %v1032
        %1233 = vmatprep.subr.bf16.mxu0 0
        %1234 = vmatpush1.bf16.msra.mxu0 %v1033
        %1235 = vmatprep.subr.bf16.mxu0 0
        %1236 = vmatpush1.bf16.msra.mxu0 0
        %1237 = vmatprep.subr.bf16.mxu0 0
        %1238 = vmatpush1.bf16.msra.mxu0 0
        %1239 = vmatprep.subr.bf16.mxu0 0
        %1240 = vmatpush1.bf16.msra.mxu0 0
        %1241 = vmatprep.subr.bf16.mxu0 0
        %1242 = vmatpush1.bf16.msra.mxu0 0
        %1243 = vmatprep.subr.bf16.mxu0 0
        %1244 = vmatpush1.bf16.msra.mxu0 0
        %1245 = vmatprep.subr.bf16.mxu0 0
        %1246 = vmatpush1.bf16.msra.mxu0 0
        %1247 = vmatprep.subr.bf16.mxu0 0
        %1248 = vmatpush1.bf16.msra.mxu0 0
        %1249 = vmatprep.subr.bf16.mxu0 0
        %1250 = vmatpush1.bf16.msra.mxu0 0
        %1251 = vmatprep.mubr.bf16.mxu0 0
        %1252 = vmatmul.mubr.bf16.gmra.mrb[0].mxu0 %v750
        %v1253 = vpop.f32.mrb[0].mxu0
        %v1254 = vadd.f32 %v1093, %v1253
        %v1255 = vpop.f32.mrb[0].mxu0
        %v1256 = vpop.f32.mrb[0].mxu0
        %v1257 = vadd.f32 %v1096, %v1256
        %v1258 = vpop.f32.mrb[0].mxu0
        %1259 = vmatprep.mubr.bf16.mxu0 0
        %1260 = vmatmul.mubr.bf16.gmra.mrb[0].mxu0 %v753
        %v1261 = vpop.f32.mrb[0].mxu0
        %v1262 = vadd.f32 %v1101, %v1261
        %v1263 = vpop.f32.mrb[0].mxu0
        %v1264 = vpop.f32.mrb[0].mxu0
        %v1265 = vadd.f32 %v1104, %v1264
        %v1266 = vpop.f32.mrb[0].mxu0
        %1267 = vmatprep.mubr.bf16.mxu0 0
        %1268 = vmatmul.mubr.bf16.gmra.mrb[0].mxu0 %v756
        %v1269 = vpop.f32.mrb[0].mxu0
        %v1270 = vadd.f32 %v1109, %v1269
        %v1271 = vpop.f32.mrb[0].mxu0
        %v1272 = vpop.f32.mrb[0].mxu0
        %v1273 = vadd.f32 %v1112, %v1272
        %v1274 = vpop.f32.mrb[0].mxu0
        %1275 = vmatprep.mubr.bf16.mxu0 0
        %1276 = vmatmul.mubr.bf16.gmra.mrb[0].mxu0 %v759
        %v1277 = vpop.f32.mrb[0].mxu0
        %v1278 = vadd.f32 %v1117, %v1277
        %v1279 = vpop.f32.mrb[0].mxu0
        %v1280 = vpop.f32.mrb[0].mxu0
        %v1281 = vadd.f32 %v1120, %v1280
        %v1282 = vpop.f32.mrb[0].mxu0
        %1283 = vmatprep.mubr.bf16.mxu0 0
        %1284 = vmatmul.mubr.bf16.gmra.mrb[0].mxu0 %v762
        %v1285 = vpop.f32.mrb[0].mxu0
        %v1286 = vadd.f32 %v1125, %v1285
        %v1287 = vpop.f32.mrb[0].mxu0
        %v1288 = vpop.f32.mrb[0].mxu0
        %v1289 = vadd.f32 %v1128, %v1288
        %v1290 = vpop.f32.mrb[0].mxu0
        %1291 = vmatprep.mubr.bf16.mxu0 0
        %1292 = vmatmul.mubr.bf16.gmra.mrb[0].mxu0 %v765
        %v1293 = vpop.f32.mrb[0].mxu0
        %v1294 = vadd.f32 %v1133, %v1293
        %v1295 = vpop.f32.mrb[0].mxu0
        %v1296 = vpop.f32.mrb[0].mxu0
        %v1297 = vadd.f32 %v1136, %v1296
        %v1298 = vpop.f32.mrb[0].mxu0
        %1299 = vmatprep.mubr.bf16.mxu0 0
        %1300 = vmatmul.mubr.bf16.gmra.mrb[0].mxu0 %v768
        %v1301 = vpop.f32.mrb[0].mxu0
        %v1302 = vadd.f32 %v1141, %v1301
        %v1303 = vpop.f32.mrb[0].mxu0
        %v1304 = vpop.f32.mrb[0].mxu0
        %v1305 = vadd.f32 %v1144, %v1304
        %v1306 = vpop.f32.mrb[0].mxu0
        %1307 = vmatprep.mubr.bf16.mxu0 0
        %1308 = vmatmul.mubr.bf16.gmra.mrb[0].mxu0 %v771
        %v1309 = vpop.f32.mrb[0].mxu0
        %v1310 = vadd.f32 %v1149, %v1309
        %v1311 = vpop.f32.mrb[0].mxu0
        %v1312 = vpop.f32.mrb[0].mxu0
        %v1313 = vadd.f32 %v1152, %v1312
        %v1314 = vpop.f32.mrb[0].mxu0
        %1315 = vmatprep.mubr.bf16.mxu0 0
        %1316 = vmatmul.mubr.bf16.gmra.mrb[0].mxu0 %v774
        %v1317 = vpop.f32.mrb[0].mxu0
        %v1318 = vadd.f32 %v1157, %v1317
        %v1319 = vpop.f32.mrb[0].mxu0
        %v1320 = vpop.f32.mrb[0].mxu0
        %v1321 = vadd.f32 %v1160, %v1320
        %v1322 = vpop.f32.mrb[0].mxu0
        %1323 = vmatprep.mubr.bf16.mxu0 0
        %1324 = vmatmul.mubr.bf16.gmra.mrb[0].mxu0 %v777
        %v1325 = vpop.f32.mrb[0].mxu0
        %v1326 = vadd.f32 %v1165, %v1325
        %v1327 = vpop.f32.mrb[0].mxu0
        %v1328 = vpop.f32.mrb[0].mxu0
        %v1329 = vadd.f32 %v1168, %v1328
        %v1330 = vpop.f32.mrb[0].mxu0
        %1331 = vmatprep.mubr.bf16.mxu0 0
        %1332 = vmatmul.mubr.bf16.gmra.mrb[0].mxu0 %v780
        %v1333 = vpop.f32.mrb[0].mxu0
        %v1334 = vadd.f32 %v1173, %v1333
        %v1335 = vpop.f32.mrb[0].mxu0
        %v1336 = vpop.f32.mrb[0].mxu0
        %v1337 = vadd.f32 %v1176, %v1336
        %v1338 = vpop.f32.mrb[0].mxu0
        %1339 = vmatprep.mubr.bf16.mxu0 0
        %1340 = vmatmul.mubr.bf16.gmra.mrb[0].mxu0 %v783
        %v1341 = vpop.f32.mrb[0].mxu0
        %v1342 = vadd.f32 %v1181, %v1341
        %v1343 = vpop.f32.mrb[0].mxu0
        %v1344 = vpop.f32.mrb[0].mxu0
        %v1345 = vadd.f32 %v1184, %v1344
        %v1346 = vpop.f32.mrb[0].mxu0
        %1347 = vmatprep.mubr.bf16.mxu0 0
        %1348 = vmatmul.mubr.bf16.gmra.mrb[0].mxu0 %v786
        %v1349 = vpop.f32.mrb[0].mxu0
        %v1350 = vadd.f32 %v1189, %v1349
        %v1351 = vpop.f32.mrb[0].mxu0
        %v1352 = vpop.f32.mrb[0].mxu0
        %v1353 = vadd.f32 %v1192, %v1352
        %v1354 = vpop.f32.mrb[0].mxu0
        %1355 = vmatprep.mubr.bf16.mxu0 0
        %1356 = vmatmul.mubr.bf16.gmra.mrb[0].mxu0 %v789
        %v1357 = vpop.f32.mrb[0].mxu0
        %v1358 = vadd.f32 %v1197, %v1357
        %v1359 = vpop.f32.mrb[0].mxu0
        %v1360 = vpop.f32.mrb[0].mxu0
        %v1361 = vadd.f32 %v1200, %v1360
        %v1362 = vpop.f32.mrb[0].mxu0
        %1363 = vmatprep.mubr.bf16.mxu0 0
        %1364 = vmatmul.mubr.bf16.gmra.mrb[0].mxu0 %v792
        %v1365 = vpop.f32.mrb[0].mxu0
        %v1366 = vadd.f32 %v1205, %v1365
        %v1367 = vpop.f32.mrb[0].mxu0
        %v1368 = vpop.f32.mrb[0].mxu0
        %v1369 = vadd.f32 %v1208, %v1368
        %v1370 = vpop.f32.mrb[0].mxu0
        %1371 = vmatprep.mubr.bf16.mxu0 0
        %1372 = vmatmul.mubr.bf16.gmra.mrb[0].mxu0 %v795
        %v1373 = vpop.f32.mrb[0].mxu0
        %v1374 = vadd.f32 %v1213, %v1373
        %v1375 = vpop.f32.mrb[0].mxu0
        %v1376 = vpop.f32.mrb[0].mxu0
        %v1377 = vadd.f32 %v1216, %v1376
        %v1378 = vpop.f32.mrb[0].mxu0
        %1379 = vdwg.mxu0
        %v1428 = vunpack.c.l.b16 %v817
        %v1429 = vunpack.c.l.b16 %v818
        %v1430 = vunpack.c.l.b16 %v819
        %v1431 = vunpack.c.l.b16 %v820
        %v1432 = vunpack.c.l.b16 %v821
        %v1433 = vunpack.c.l.b16 %v822
        %v1434 = vunpack.c.l.b16 %v823
        %v1435 = vunpack.c.l.b16 %v824
        %v1436 = vunpack.c.l.b16 %v825
        %v1437 = vunpack.c.l.b16 %v826
        %v1438 = vunpack.c.l.b16 %v827
        %v1439 = vunpack.c.l.b16 %v828
        %v1440 = vunpack.c.l.b16 %v829
        %v1441 = vunpack.c.l.b16 %v830
        %v1442 = vunpack.c.l.b16 %v831
        %v1443 = vunpack.c.l.b16 %v832
        %v1444 = vunpack.c.l.b16 %v833
        %v1445 = vunpack.c.l.b16 %v834
        %v1446 = vunpack.c.l.b16 %v835
        %v1447 = vunpack.c.l.b16 %v836
        %v1448 = vunpack.c.l.b16 %v837
        %v1449 = vunpack.c.l.b16 %v838
        %v1450 = vunpack.c.l.b16 %v839
        %v1451 = vunpack.c.l.b16 %v840
        %v1452 = vunpack.c.l.b16 %v841
        %v1453 = vunpack.c.l.b16 %v842
        %v1454 = vunpack.c.l.b16 %v843
        %v1455 = vunpack.c.l.b16 %v844
        %v1456 = vunpack.c.l.b16 %v845
        %v1457 = vunpack.c.l.b16 %v846
        %v1458 = vunpack.c.l.b16 %v847
        %v1459 = vunpack.c.l.b16 %v848
        %v1460 = vunpack.c.l.b16 %v849
        %v1461 = vunpack.c.l.b16 %v850
        %v1462 = vunpack.c.l.b16 %v851
        %v1463 = vunpack.c.l.b16 %v852
        %v1464 = vunpack.c.l.b16 %v853
        %v1465 = vunpack.c.l.b16 %v854
        %v1466 = vunpack.c.l.b16 %v855
        %v1467 = vunpack.c.l.b16 %v856
        %v1468 = vunpack.c.l.b16 %v857
        %v1469 = vunpack.c.l.b16 %v858
        %v1470 = vunpack.c.l.b16 %v859
        %v1471 = vunpack.c.l.b16 %v860
        %v1472 = vunpack.c.l.b16 %v861
        %v1473 = vunpack.c.l.b16 %v862
        %v1474 = vunpack.c.l.b16 %v863
        %v1475 = vunpack.c.l.b16 %v864
        %v1476 = vpack.c.b16 %v1429, %v1428
        %v1477 = vpack.c.b16 %v1431, %v1430
        %v1478 = vpack.c.b16 %v1433, %v1432
        %v1479 = vpack.c.b16 %v1435, %v1434
        %v1480 = vpack.c.b16 %v1437, %v1436
        %v1481 = vpack.c.b16 %v1439, %v1438
        %v1482 = vpack.c.b16 %v1441, %v1440
        %v1483 = vpack.c.b16 %v1443, %v1442
        %v1484 = vpack.c.b16 %v1445, %v1444
        %v1485 = vpack.c.b16 %v1447, %v1446
        %v1486 = vpack.c.b16 %v1449, %v1448
        %v1487 = vpack.c.b16 %v1451, %v1450
        %v1488 = vpack.c.b16 %v1453, %v1452
        %v1489 = vpack.c.b16 %v1455, %v1454
        %v1490 = vpack.c.b16 %v1457, %v1456
        %v1491 = vpack.c.b16 %v1459, %v1458
        %v1492 = vpack.c.b16 %v1461, %v1460
        %v1493 = vpack.c.b16 %v1463, %v1462
        %v1494 = vpack.c.b16 %v1465, %v1464
        %v1495 = vpack.c.b16 %v1467, %v1466
        %v1496 = vpack.c.b16 %v1469, %v1468
        %v1497 = vpack.c.b16 %v1471, %v1470
        %v1498 = vpack.c.b16 %v1473, %v1472
        %v1499 = vpack.c.b16 %v1475, %v1474
        %1524 = vmatprep.subr.bf16.mxu0 0
        %1525 = vmatpush1.bf16.msra.mxu0 %v1476
        %1526 = vmatprep.subr.bf16.mxu0 0
        %1527 = vmatpush1.bf16.msra.mxu0 %v1477
        %1528 = vmatprep.subr.bf16.mxu0 0
        %1529 = vmatpush1.bf16.msra.mxu0 %v1478
        %1530 = vmatprep.subr.bf16.mxu0 0
        %1531 = vmatpush1.bf16.msra.mxu0 %v1479
        %1532 = vmatprep.subr.bf16.mxu0 0
        %1533 = vmatpush1.bf16.msra.mxu0 %v1480
        %1534 = vmatprep.subr.bf16.mxu0 0
        %1535 = vmatpush1.bf16.msra.mxu0 %v1481
        %1536 = vmatprep.subr.bf16.mxu0 0
        %1537 = vmatpush1.bf16.msra.mxu0 %v1482
        %1538 = vmatprep.subr.bf16.mxu0 0
        %1539 = vmatpush1.bf16.msra.mxu0 %v1483
        %1540 = vmatprep.subr.bf16.mxu0 0
        %1541 = vmatpush1.bf16.msra.mxu0 %v1484
        %1542 = vmatprep.subr.bf16.mxu0 0
        %1543 = vmatpush1.bf16.msra.mxu0 %v1485
        %1544 = vmatprep.subr.bf16.mxu0 0
        %1545 = vmatpush1.bf16.msra.mxu0 %v1486
        %1546 = vmatprep.subr.bf16.mxu0 0
        %1547 = vmatpush1.bf16.msra.mxu0 %v1487
        %1548 = vmatprep.subr.bf16.mxu0 0
        %1549 = vmatpush1.bf16.msra.mxu0 %v1488
        %1550 = vmatprep.subr.bf16.mxu0 0
        %1551 = vmatpush1.bf16.msra.mxu0 %v1489
        %1552 = vmatprep.subr.bf16.mxu0 0
        %1553 = vmatpush1.bf16.msra.mxu0 %v1490
        %1554 = vmatprep.subr.bf16.mxu0 0
        %1555 = vmatpush1.bf16.msra.mxu0 %v1491
        %1556 = vmatprep.mubr.bf16.mxu0 %v485
        %1557 = vmatmul.mubr.bf16.gmra.mrb[0].mxu0 %v437
        %v1558 = vpop.f32.mrb[0].mxu0
        %v1559 = vadd.f32 %v1254, %v1558
        %v1560 = vpop.f32.mrb[0].mxu0
        %v1561 = vpop.f32.mrb[0].mxu0
        %v1562 = vadd.f32 %v1257, %v1561
        %v1563 = vpop.f32.mrb[0].mxu0
        %1564 = vmatprep.mubr.bf16.mxu0 %v497
        %1565 = vmatmul.mubr.bf16.gmra.mrb[0].mxu0 %v439
        %v1566 = vpop.f32.mrb[0].mxu0
        %v1567 = vadd.f32 %v1262, %v1566
        %v1568 = vpop.f32.mrb[0].mxu0
        %v1569 = vpop.f32.mrb[0].mxu0
        %v1570 = vadd.f32 %v1265, %v1569
        %v1571 = vpop.f32.mrb[0].mxu0
        %1572 = vmatprep.mubr.bf16.mxu0 %v509
        %1573 = vmatmul.mubr.bf16.gmra.mrb[0].mxu0 %v441
        %v1574 = vpop.f32.mrb[0].mxu0
        %v1575 = vadd.f32 %v1270, %v1574
        %v1576 = vpop.f32.mrb[0].mxu0
        %v1577 = vpop.f32.mrb[0].mxu0
        %v1578 = vadd.f32 %v1273, %v1577
        %v1579 = vpop.f32.mrb[0].mxu0
        %1580 = vmatprep.mubr.bf16.mxu0 %v521
        %1581 = vmatmul.mubr.bf16.gmra.mrb[0].mxu0 %v443
        %v1582 = vpop.f32.mrb[0].mxu0
        %v1583 = vadd.f32 %v1278, %v1582
        %v1584 = vpop.f32.mrb[0].mxu0
        %v1585 = vpop.f32.mrb[0].mxu0
        %v1586 = vadd.f32 %v1281, %v1585
        %v1587 = vpop.f32.mrb[0].mxu0
        %1588 = vmatprep.mubr.bf16.mxu0 %v533
        %1589 = vmatmul.mubr.bf16.gmra.mrb[0].mxu0 %v445
        %v1590 = vpop.f32.mrb[0].mxu0
        %v1591 = vadd.f32 %v1286, %v1590
        %v1592 = vpop.f32.mrb[0].mxu0
        %v1593 = vpop.f32.mrb[0].mxu0
        %v1594 = vadd.f32 %v1289, %v1593
        %v1595 = vpop.f32.mrb[0].mxu0
        %1596 = vmatprep.mubr.bf16.mxu0 %v545
        %1597 = vmatmul.mubr.bf16.gmra.mrb[0].mxu0 %v447
        %v1598 = vpop.f32.mrb[0].mxu0
        %v1599 = vadd.f32 %v1294, %v1598
        %v1600 = vpop.f32.mrb[0].mxu0
        %v1601 = vpop.f32.mrb[0].mxu0
        %v1602 = vadd.f32 %v1297, %v1601
        %v1603 = vpop.f32.mrb[0].mxu0
        %1604 = vmatprep.mubr.bf16.mxu0 %v557
        %1605 = vmatmul.mubr.bf16.gmra.mrb[0].mxu0 %v449
        %v1606 = vpop.f32.mrb[0].mxu0
        %v1607 = vadd.f32 %v1302, %v1606
        %v1608 = vpop.f32.mrb[0].mxu0
        %v1609 = vpop.f32.mrb[0].mxu0
        %v1610 = vadd.f32 %v1305, %v1609
        %v1611 = vpop.f32.mrb[0].mxu0
        %1612 = vmatprep.mubr.bf16.mxu0 %v569
        %1613 = vmatmul.mubr.bf16.gmra.mrb[0].mxu0 %v451
        %v1614 = vpop.f32.mrb[0].mxu0
        %v1615 = vadd.f32 %v1310, %v1614
        %v1616 = vpop.f32.mrb[0].mxu0
        %v1617 = vpop.f32.mrb[0].mxu0
        %v1618 = vadd.f32 %v1313, %v1617
        %v1619 = vpop.f32.mrb[0].mxu0
        %1620 = vmatprep.mubr.bf16.mxu0 %v581
        %1621 = vmatmul.mubr.bf16.gmra.mrb[0].mxu0 %v453
        %v1622 = vpop.f32.mrb[0].mxu0
        %v1623 = vadd.f32 %v1318, %v1622
        %v1624 = vpop.f32.mrb[0].mxu0
        %v1625 = vpop.f32.mrb[0].mxu0
        %v1626 = vadd.f32 %v1321, %v1625
        %v1627 = vpop.f32.mrb[0].mxu0
        %1628 = vmatprep.mubr.bf16.mxu0 %v593
        %1629 = vmatmul.mubr.bf16.gmra.mrb[0].mxu0 %v455
        %v1630 = vpop.f32.mrb[0].mxu0
        %v1631 = vadd.f32 %v1326, %v1630
        %v1632 = vpop.f32.mrb[0].mxu0
        %v1633 = vpop.f32.mrb[0].mxu0
        %v1634 = vadd.f32 %v1329, %v1633
        %v1635 = vpop.f32.mrb[0].mxu0
        %1636 = vmatprep.mubr.bf16.mxu0 %v605
        %1637 = vmatmul.mubr.bf16.gmra.mrb[0].mxu0 %v457
        %v1638 = vpop.f32.mrb[0].mxu0
        %v1639 = vadd.f32 %v1334, %v1638
        %v1640 = vpop.f32.mrb[0].mxu0
        %v1641 = vpop.f32.mrb[0].mxu0
        %v1642 = vadd.f32 %v1337, %v1641
        %v1643 = vpop.f32.mrb[0].mxu0
        %1644 = vmatprep.mubr.bf16.mxu0 %v617
        %1645 = vmatmul.mubr.bf16.gmra.mrb[0].mxu0 %v459
        %v1646 = vpop.f32.mrb[0].mxu0
        %v1647 = vadd.f32 %v1342, %v1646
        %v1648 = vpop.f32.mrb[0].mxu0
        %v1649 = vpop.f32.mrb[0].mxu0
        %v1650 = vadd.f32 %v1345, %v1649
        %v1651 = vpop.f32.mrb[0].mxu0
        %1652 = vmatprep.mubr.bf16.mxu0 %v629
        %1653 = vmatmul.mubr.bf16.gmra.mrb[0].mxu0 %v461
        %v1654 = vpop.f32.mrb[0].mxu0
        %v1655 = vadd.f32 %v1350, %v1654
        %v1656 = vpop.f32.mrb[0].mxu0
        %v1657 = vpop.f32.mrb[0].mxu0
        %v1658 = vadd.f32 %v1353, %v1657
        %v1659 = vpop.f32.mrb[0].mxu0
        %1660 = vmatprep.mubr.bf16.mxu0 %v641
        %1661 = vmatmul.mubr.bf16.gmra.mrb[0].mxu0 %v463
        %v1662 = vpop.f32.mrb[0].mxu0
        %v1663 = vadd.f32 %v1358, %v1662
        %v1664 = vpop.f32.mrb[0].mxu0
        %v1665 = vpop.f32.mrb[0].mxu0
        %v1666 = vadd.f32 %v1361, %v1665
        %v1667 = vpop.f32.mrb[0].mxu0
        %1668 = vmatprep.mubr.bf16.mxu0 %v653
        %1669 = vmatmul.mubr.bf16.gmra.mrb[0].mxu0 %v465
        %v1670 = vpop.f32.mrb[0].mxu0
        %v1671 = vadd.f32 %v1366, %v1670
        %v1672 = vpop.f32.mrb[0].mxu0
        %v1673 = vpop.f32.mrb[0].mxu0
        %v1674 = vadd.f32 %v1369, %v1673
        %v1675 = vpop.f32.mrb[0].mxu0
        %1676 = vmatprep.mubr.bf16.mxu0 %v665
        %1677 = vmatmul.mubr.bf16.gmra.mrb[0].mxu0 %v467
        %v1678 = vpop.f32.mrb[0].mxu0
        %v1679 = vadd.f32 %v1374, %v1678
        %v1680 = vpop.f32.mrb[0].mxu0
        %v1681 = vpop.f32.mrb[0].mxu0
        %v1682 = vadd.f32 %v1377, %v1681
        %v1683 = vpop.f32.mrb[0].mxu0
        %1684 = vdwg.mxu0
        %1685 = vmatprep.subr.bf16.mxu0 0
        %1686 = vmatpush1.bf16.msra.mxu0 %v1492
        %1687 = vmatprep.subr.bf16.mxu0 0
        %1688 = vmatpush1.bf16.msra.mxu0 %v1493
        %1689 = vmatprep.subr.bf16.mxu0 0
        %1690 = vmatpush1.bf16.msra.mxu0 %v1494
        %1691 = vmatprep.subr.bf16.mxu0 0
        %1692 = vmatpush1.bf16.msra.mxu0 %v1495
        %1693 = vmatprep.subr.bf16.mxu0 0
        %1694 = vmatpush1.bf16.msra.mxu0 %v1496
        %1695 = vmatprep.subr.bf16.mxu0 0
        %1696 = vmatpush1.bf16.msra.mxu0 %v1497
        %1697 = vmatprep.subr.bf16.mxu0 0
        %1698 = vmatpush1.bf16.msra.mxu0 %v1498
        %1699 = vmatprep.subr.bf16.mxu0 0
        %1700 = vmatpush1.bf16.msra.mxu0 %v1499
        %1701 = vmatprep.subr.bf16.mxu0 0
        %1702 = vmatpush1.bf16.msra.mxu0 0
        %1703 = vmatprep.subr.bf16.mxu0 0
        %1704 = vmatpush1.bf16.msra.mxu0 0
        %1705 = vmatprep.subr.bf16.mxu0 0
        %1706 = vmatpush1.bf16.msra.mxu0 0
        %1707 = vmatprep.subr.bf16.mxu0 0
        %1708 = vmatpush1.bf16.msra.mxu0 0
        %1709 = vmatprep.subr.bf16.mxu0 0
        %1710 = vmatpush1.bf16.msra.mxu0 0
        %1711 = vmatprep.subr.bf16.mxu0 0
        %1712 = vmatpush1.bf16.msra.mxu0 0
        %1713 = vmatprep.subr.bf16.mxu0 0
        %1714 = vmatpush1.bf16.msra.mxu0 0
        %1715 = vmatprep.subr.bf16.mxu0 0
        %1716 = vmatpush1.bf16.msra.mxu0 0
        %1717 = vmatprep.mubr.bf16.mxu0 0
        %1718 = vmatmul.mubr.bf16.gmra.mrb[0].mxu0 %v747
        %v1719 = vpop.f32.mrb[0].mxu0
        %v1720 = vadd.f32 %v1559, %v1719
        %v1721 = vpop.f32.mrb[0].mxu0
        %v1722 = vpop.f32.mrb[0].mxu0
        %v1723 = vadd.f32 %v1562, %v1722
        %v1724 = vpop.f32.mrb[0].mxu0
        %1725 = vmatprep.mubr.bf16.mxu0 0
        %1726 = vmatmul.mubr.bf16.gmra.mrb[0].mxu0 %v750
        %v1727 = vpop.f32.mrb[0].mxu0
        %v1728 = vadd.f32 %v1567, %v1727
        %v1729 = vpop.f32.mrb[0].mxu0
        %v1730 = vpop.f32.mrb[0].mxu0
        %v1731 = vadd.f32 %v1570, %v1730
        %v1732 = vpop.f32.mrb[0].mxu0
        %1733 = vmatprep.mubr.bf16.mxu0 0
        %1734 = vmatmul.mubr.bf16.gmra.mrb[0].mxu0 %v753
        %v1735 = vpop.f32.mrb[0].mxu0
        %v1736 = vadd.f32 %v1575, %v1735
        %v1737 = vpop.f32.mrb[0].mxu0
        %v1738 = vpop.f32.mrb[0].mxu0
        %v1739 = vadd.f32 %v1578, %v1738
        %v1740 = vpop.f32.mrb[0].mxu0
        %1741 = vmatprep.mubr.bf16.mxu0 0
        %1742 = vmatmul.mubr.bf16.gmra.mrb[0].mxu0 %v756
        %v1743 = vpop.f32.mrb[0].mxu0
        %v1744 = vadd.f32 %v1583, %v1743
        %v1745 = vpop.f32.mrb[0].mxu0
        %v1746 = vpop.f32.mrb[0].mxu0
        %v1747 = vadd.f32 %v1586, %v1746
        %v1748 = vpop.f32.mrb[0].mxu0
        %1749 = vmatprep.mubr.bf16.mxu0 0
        %1750 = vmatmul.mubr.bf16.gmra.mrb[0].mxu0 %v759
        %v1751 = vpop.f32.mrb[0].mxu0
        %v1752 = vadd.f32 %v1591, %v1751
        %v1753 = vpop.f32.mrb[0].mxu0
        %v1754 = vpop.f32.mrb[0].mxu0
        %v1755 = vadd.f32 %v1594, %v1754
        %v1756 = vpop.f32.mrb[0].mxu0
        %1757 = vmatprep.mubr.bf16.mxu0 0
        %1758 = vmatmul.mubr.bf16.gmra.mrb[0].mxu0 %v762
        %v1759 = vpop.f32.mrb[0].mxu0
        %v1760 = vadd.f32 %v1599, %v1759
        %v1761 = vpop.f32.mrb[0].mxu0
        %v1762 = vpop.f32.mrb[0].mxu0
        %v1763 = vadd.f32 %v1602, %v1762
        %v1764 = vpop.f32.mrb[0].mxu0
        %1765 = vmatprep.mubr.bf16.mxu0 0
        %1766 = vmatmul.mubr.bf16.gmra.mrb[0].mxu0 %v765
        %v1767 = vpop.f32.mrb[0].mxu0
        %v1768 = vadd.f32 %v1607, %v1767
        %v1769 = vpop.f32.mrb[0].mxu0
        %v1770 = vpop.f32.mrb[0].mxu0
        %v1771 = vadd.f32 %v1610, %v1770
        %v1772 = vpop.f32.mrb[0].mxu0
        %1773 = vmatprep.mubr.bf16.mxu0 0
        %1774 = vmatmul.mubr.bf16.gmra.mrb[0].mxu0 %v768
        %v1775 = vpop.f32.mrb[0].mxu0
        %v1776 = vadd.f32 %v1615, %v1775
        %v1777 = vpop.f32.mrb[0].mxu0
        %v1778 = vpop.f32.mrb[0].mxu0
        %v1779 = vadd.f32 %v1618, %v1778
        %v1780 = vpop.f32.mrb[0].mxu0
        %1781 = vmatprep.mubr.bf16.mxu0 0
        %1782 = vmatmul.mubr.bf16.gmra.mrb[0].mxu0 %v771
        %v1783 = vpop.f32.mrb[0].mxu0
        %v1784 = vadd.f32 %v1623, %v1783
        %v1785 = vpop.f32.mrb[0].mxu0
        %v1786 = vpop.f32.mrb[0].mxu0
        %v1787 = vadd.f32 %v1626, %v1786
        %v1788 = vpop.f32.mrb[0].mxu0
        %1789 = vmatprep.mubr.bf16.mxu0 0
        %1790 = vmatmul.mubr.bf16.gmra.mrb[0].mxu0 %v774
        %v1791 = vpop.f32.mrb[0].mxu0
        %v1792 = vadd.f32 %v1631, %v1791
        %v1793 = vpop.f32.mrb[0].mxu0
        %v1794 = vpop.f32.mrb[0].mxu0
        %v1795 = vadd.f32 %v1634, %v1794
        %v1796 = vpop.f32.mrb[0].mxu0
        %1797 = vmatprep.mubr.bf16.mxu0 0
        %1798 = vmatmul.mubr.bf16.gmra.mrb[0].mxu0 %v777
        %v1799 = vpop.f32.mrb[0].mxu0
        %v1800 = vadd.f32 %v1639, %v1799
        %v1801 = vpop.f32.mrb[0].mxu0
        %v1802 = vpop.f32.mrb[0].mxu0
        %v1803 = vadd.f32 %v1642, %v1802
        %v1804 = vpop.f32.mrb[0].mxu0
        %1805 = vmatprep.mubr.bf16.mxu0 0
        %1806 = vmatmul.mubr.bf16.gmra.mrb[0].mxu0 %v780
        %v1807 = vpop.f32.mrb[0].mxu0
        %v1808 = vadd.f32 %v1647, %v1807
        %v1809 = vpop.f32.mrb[0].mxu0
        %v1810 = vpop.f32.mrb[0].mxu0
        %v1811 = vadd.f32 %v1650, %v1810
        %v1812 = vpop.f32.mrb[0].mxu0
        %1813 = vmatprep.mubr.bf16.mxu0 0
        %1814 = vmatmul.mubr.bf16.gmra.mrb[0].mxu0 %v783
        %v1815 = vpop.f32.mrb[0].mxu0
        %v1816 = vadd.f32 %v1655, %v1815
        %v1817 = vpop.f32.mrb[0].mxu0
        %v1818 = vpop.f32.mrb[0].mxu0
        %v1819 = vadd.f32 %v1658, %v1818
        %v1820 = vpop.f32.mrb[0].mxu0
        %1821 = vmatprep.mubr.bf16.mxu0 0
        %1822 = vmatmul.mubr.bf16.gmra.mrb[0].mxu0 %v786
        %v1823 = vpop.f32.mrb[0].mxu0
        %v1824 = vadd.f32 %v1663, %v1823
        %v1825 = vpop.f32.mrb[0].mxu0
        %v1826 = vpop.f32.mrb[0].mxu0
        %v1827 = vadd.f32 %v1666, %v1826
        %v1828 = vpop.f32.mrb[0].mxu0
        %1829 = vmatprep.mubr.bf16.mxu0 0
        %1830 = vmatmul.mubr.bf16.gmra.mrb[0].mxu0 %v789
        %v1831 = vpop.f32.mrb[0].mxu0
        %v1832 = vadd.f32 %v1671, %v1831
        %v1833 = vpop.f32.mrb[0].mxu0
        %v1834 = vpop.f32.mrb[0].mxu0
        %v1835 = vadd.f32 %v1674, %v1834
        %v1836 = vpop.f32.mrb[0].mxu0
        %1837 = vmatprep.mubr.bf16.mxu0 0
        %1838 = vmatmul.mubr.bf16.gmra.mrb[0].mxu0 %v792
        %v1839 = vpop.f32.mrb[0].mxu0
        %v1840 = vadd.f32 %v1679, %v1839
        %v1841 = vpop.f32.mrb[0].mxu0
        %v1842 = vpop.f32.mrb[0].mxu0
        %v1843 = vadd.f32 %v1682, %v1842
        %v1844 = vpop.f32.mrb[0].mxu0
        %1845 = vdwg.mxu0
        %s1846 = scalar_lea.vmem [#allocation6], 384
        %v1847 = vld [vmem:[%s1846] sm:$0xf]
        %v1848 = vld [vmem:[%s1846 + $0x4] sm:$0xf]
        %v1849 = vld [vmem:[%s1846 + $0x8] sm:$0xf]
        %v1850 = vld [vmem:[%s1846 + $0xc] sm:$0xf]
        %v1851 = vld [vmem:[%s1846 + $0x10] sm:$0xf]
        %v1852 = vld [vmem:[%s1846 + $0x14] sm:$0xf]
        %v1853 = vld [vmem:[%s1846 + $0x18] sm:$0xf]
        %v1854 = vld [vmem:[%s1846 + $0x1c] sm:$0xf]
        %v1855 = vld [vmem:[%s1846 + $0x20] sm:$0xf]
        %v1856 = vld [vmem:[%s1846 + $0x24] sm:$0xf]
        %v1857 = vld [vmem:[%s1846 + $0x28] sm:$0xf]
        %v1858 = vld [vmem:[%s1846 + $0x2c] sm:$0xf]
        %v1859 = vld [vmem:[%s1846 + $0x30] sm:$0xf]
        %v1860 = vld [vmem:[%s1846 + $0x34] sm:$0xf]
        %v1861 = vld [vmem:[%s1846 + $0x38] sm:$0xf]
        %v1862 = vld [vmem:[%s1846 + $0x3c] sm:$0xf]
        %v1863 = vld [vmem:[%s1846 + $0x40] sm:$0xf]
        %v1864 = vld [vmem:[%s1846 + $0x44] sm:$0xf]
        %v1865 = vld [vmem:[%s1846 + $0x48] sm:$0xf]
        %v1866 = vld [vmem:[%s1846 + $0x4c] sm:$0xf]
        %v1867 = vld [vmem:[%s1846 + $0x50] sm:$0xf]
        %v1868 = vld [vmem:[%s1846 + $0x54] sm:$0xf]
        %v1869 = vld [vmem:[%s1846 + $0x58] sm:$0xf]
        %v1870 = vld [vmem:[%s1846 + $0x5c] sm:$0xf]
        %v1871 = vld [vmem:[%s1846 + $0x60] sm:$0xf]
        %v1872 = vld [vmem:[%s1846 + $0x64] sm:$0xf]
        %v1873 = vld [vmem:[%s1846 + $0x68] sm:$0xf]
        %v1874 = vld [vmem:[%s1846 + $0x6c] sm:$0xf]
        %v1875 = vld [vmem:[%s1846 + $0x70] sm:$0xf]
        %v1876 = vld [vmem:[%s1846 + $0x74] sm:$0xf]
        %v1877 = vld [vmem:[%s1846 + $0x78] sm:$0xf]
        %v1878 = vld [vmem:[%s1846 + $0x7c] sm:$0xf]
        %v1879 = vld [vmem:[%s1846 + $0x80] sm:$0xf]
        %v1880 = vld [vmem:[%s1846 + $0x84] sm:$0xf]
        %v1881 = vld [vmem:[%s1846 + $0x88] sm:$0xf]
        %v1882 = vld [vmem:[%s1846 + $0x8c] sm:$0xf]
        %v1883 = vld [vmem:[%s1846 + $0x90] sm:$0xf]
        %v1884 = vld [vmem:[%s1846 + $0x94] sm:$0xf]
        %v1885 = vld [vmem:[%s1846 + $0x98] sm:$0xf]
        %v1886 = vld [vmem:[%s1846 + $0x9c] sm:$0xf]
        %v1887 = vld [vmem:[%s1846 + $0xa0] sm:$0xf]
        %v1888 = vld [vmem:[%s1846 + $0xa4] sm:$0xf]
        %v1889 = vld [vmem:[%s1846 + $0xa8] sm:$0xf]
        %v1890 = vld [vmem:[%s1846 + $0xac] sm:$0xf]
        %v1891 = vld [vmem:[%s1846 + $0xb0] sm:$0xf]
        %v1892 = vld [vmem:[%s1846 + $0xb4] sm:$0xf]
        %v1893 = vld [vmem:[%s1846 + $0xb8] sm:$0xf]
        %v1894 = vld [vmem:[%s1846 + $0xbc] sm:$0xf]
        %v1943 = vunpack.c.l.b16 %v1847
        %v1944 = vunpack.c.l.b16 %v1848
        %v1945 = vunpack.c.l.b16 %v1849
        %v1946 = vunpack.c.l.b16 %v1850
        %v1947 = vunpack.c.l.b16 %v1851
        %v1948 = vunpack.c.l.b16 %v1852
        %v1949 = vunpack.c.l.b16 %v1853
        %v1950 = vunpack.c.l.b16 %v1854
        %v1951 = vunpack.c.l.b16 %v1855
        %v1952 = vunpack.c.l.b16 %v1856
        %v1953 = vunpack.c.l.b16 %v1857
        %v1954 = vunpack.c.l.b16 %v1858
        %v1955 = vunpack.c.l.b16 %v1859
        %v1956 = vunpack.c.l.b16 %v1860
        %v1957 = vunpack.c.l.b16 %v1861
        %v1958 = vunpack.c.l.b16 %v1862
        %v1959 = vunpack.c.l.b16 %v1863
        %v1960 = vunpack.c.l.b16 %v1864
        %v1961 = vunpack.c.l.b16 %v1865
        %v1962 = vunpack.c.l.b16 %v1866
        %v1963 = vunpack.c.l.b16 %v1867
        %v1964 = vunpack.c.l.b16 %v1868
        %v1965 = vunpack.c.l.b16 %v1869
        %v1966 = vunpack.c.l.b16 %v1870
        %v1967 = vunpack.c.l.b16 %v1871
        %v1968 = vunpack.c.l.b16 %v1872
        %v1969 = vunpack.c.l.b16 %v1873
        %v1970 = vunpack.c.l.b16 %v1874
        %v1971 = vunpack.c.l.b16 %v1875
        %v1972 = vunpack.c.l.b16 %v1876
        %v1973 = vunpack.c.l.b16 %v1877
        %v1974 = vunpack.c.l.b16 %v1878
        %v1975 = vunpack.c.l.b16 %v1879
        %v1976 = vunpack.c.l.b16 %v1880
        %v1977 = vunpack.c.l.b16 %v1881
        %v1978 = vunpack.c.l.b16 %v1882
        %v1979 = vunpack.c.l.b16 %v1883
        %v1980 = vunpack.c.l.b16 %v1884
        %v1981 = vunpack.c.l.b16 %v1885
        %v1982 = vunpack.c.l.b16 %v1886
        %v1983 = vunpack.c.l.b16 %v1887
        %v1984 = vunpack.c.l.b16 %v1888
        %v1985 = vunpack.c.l.b16 %v1889
        %v1986 = vunpack.c.l.b16 %v1890
        %v1987 = vunpack.c.l.b16 %v1891
        %v1988 = vunpack.c.l.b16 %v1892
        %v1989 = vunpack.c.l.b16 %v1893
        %v1990 = vunpack.c.l.b16 %v1894
        %v1991 = vpack.c.b16 %v1944, %v1943
        %v1992 = vpack.c.b16 %v1946, %v1945
        %v1993 = vpack.c.b16 %v1948, %v1947
        %v1994 = vpack.c.b16 %v1950, %v1949
        %v1995 = vpack.c.b16 %v1952, %v1951
        %v1996 = vpack.c.b16 %v1954, %v1953
        %v1997 = vpack.c.b16 %v1956, %v1955
        %v1998 = vpack.c.b16 %v1958, %v1957
        %v1999 = vpack.c.b16 %v1960, %v1959
        %v2000 = vpack.c.b16 %v1962, %v1961
        %v2001 = vpack.c.b16 %v1964, %v1963
        %v2002 = vpack.c.b16 %v1966, %v1965
        %v2003 = vpack.c.b16 %v1968, %v1967
        %v2004 = vpack.c.b16 %v1970, %v1969
        %v2005 = vpack.c.b16 %v1972, %v1971
        %v2006 = vpack.c.b16 %v1974, %v1973
        %v2007 = vpack.c.b16 %v1976, %v1975
        %v2008 = vpack.c.b16 %v1978, %v1977
        %v2009 = vpack.c.b16 %v1980, %v1979
        %v2010 = vpack.c.b16 %v1982, %v1981
        %v2011 = vpack.c.b16 %v1984, %v1983
        %v2012 = vpack.c.b16 %v1986, %v1985
        %v2013 = vpack.c.b16 %v1988, %v1987
        %v2014 = vpack.c.b16 %v1990, %v1989
        %2039 = vmatprep.subr.bf16.mxu0 0
        %2040 = vmatpush1.bf16.msra.mxu0 %v1991
        %2041 = vmatprep.subr.bf16.mxu0 0
        %2042 = vmatpush1.bf16.msra.mxu0 %v1992
        %2043 = vmatprep.subr.bf16.mxu0 0
        %2044 = vmatpush1.bf16.msra.mxu0 %v1993
        %2045 = vmatprep.subr.bf16.mxu0 0
        %2046 = vmatpush1.bf16.msra.mxu0 %v1994
        %2047 = vmatprep.subr.bf16.mxu0 0
        %2048 = vmatpush1.bf16.msra.mxu0 %v1995
        %2049 = vmatprep.subr.bf16.mxu0 0
        %2050 = vmatpush1.bf16.msra.mxu0 %v1996
        %2051 = vmatprep.subr.bf16.mxu0 0
        %2052 = vmatpush1.bf16.msra.mxu0 %v1997
        %2053 = vmatprep.subr.bf16.mxu0 0
        %2054 = vmatpush1.bf16.msra.mxu0 %v1998
        %2055 = vmatprep.subr.bf16.mxu0 0
        %2056 = vmatpush1.bf16.msra.mxu0 %v1999
        %2057 = vmatprep.subr.bf16.mxu0 0
        %2058 = vmatpush1.bf16.msra.mxu0 %v2000
        %2059 = vmatprep.subr.bf16.mxu0 0
        %2060 = vmatpush1.bf16.msra.mxu0 %v2001
        %2061 = vmatprep.subr.bf16.mxu0 0
        %2062 = vmatpush1.bf16.msra.mxu0 %v2002
        %2063 = vmatprep.subr.bf16.mxu0 0
        %2064 = vmatpush1.bf16.msra.mxu0 %v2003
        %2065 = vmatprep.subr.bf16.mxu0 0
        %2066 = vmatpush1.bf16.msra.mxu0 %v2004
        %2067 = vmatprep.subr.bf16.mxu0 0
        %2068 = vmatpush1.bf16.msra.mxu0 %v2005
        %2069 = vmatprep.subr.bf16.mxu0 0
        %2070 = vmatpush1.bf16.msra.mxu0 %v2006
        %2071 = vmatprep.mubr.bf16.mxu0 %v509
        %2072 = vmatmul.mubr.bf16.gmra.mrb[0].mxu0 %v441
        %v2073 = vpop.f32.mrb[0].mxu0
        %v2074 = vadd.f32 0.0, %v2073
        %v2075 = vpop.f32.mrb[0].mxu0
        %v2076 = vpop.f32.mrb[0].mxu0
        %v2077 = vadd.f32 0.0, %v2076
        %v2078 = vpop.f32.mrb[0].mxu0
        %2079 = vmatprep.mubr.bf16.mxu0 %v521
        %2080 = vmatmul.mubr.bf16.gmra.mrb[0].mxu0 %v443
        %v2081 = vpop.f32.mrb[0].mxu0
        %v2082 = vadd.f32 0.0, %v2081
        %v2083 = vpop.f32.mrb[0].mxu0
        %v2084 = vpop.f32.mrb[0].mxu0
        %v2085 = vadd.f32 0.0, %v2084
        %v2086 = vpop.f32.mrb[0].mxu0
        %2087 = vmatprep.mubr.bf16.mxu0 %v533
        %2088 = vmatmul.mubr.bf16.gmra.mrb[0].mxu0 %v445
        %v2089 = vpop.f32.mrb[0].mxu0
        %v2090 = vadd.f32 0.0, %v2089
        %v2091 = vpop.f32.mrb[0].mxu0
        %v2092 = vpop.f32.mrb[0].mxu0
        %v2093 = vadd.f32 0.0, %v2092
        %v2094 = vpop.f32.mrb[0].mxu0
        %2095 = vmatprep.mubr.bf16.mxu0 %v545
        %2096 = vmatmul.mubr.bf16.gmra.mrb[0].mxu0 %v447
        %v2097 = vpop.f32.mrb[0].mxu0
        %v2098 = vadd.f32 0.0, %v2097
        %v2099 = vpop.f32.mrb[0].mxu0
        %v2100 = vpop.f32.mrb[0].mxu0
        %v2101 = vadd.f32 0.0, %v2100
        %v2102 = vpop.f32.mrb[0].mxu0
        %2103 = vmatprep.mubr.bf16.mxu0 %v557
        %2104 = vmatmul.mubr.bf16.gmra.mrb[0].mxu0 %v449
        %v2105 = vpop.f32.mrb[0].mxu0
        %v2106 = vadd.f32 0.0, %v2105
        %v2107 = vpop.f32.mrb[0].mxu0
        %v2108 = vpop.f32.mrb[0].mxu0
        %v2109 = vadd.f32 0.0, %v2108
        %v2110 = vpop.f32.mrb[0].mxu0
        %2111 = vmatprep.mubr.bf16.mxu0 %v569
        %2112 = vmatmul.mubr.bf16.gmra.mrb[0].mxu0 %v451
        %v2113 = vpop.f32.mrb[0].mxu0
        %v2114 = vadd.f32 0.0, %v2113
        %v2115 = vpop.f32.mrb[0].mxu0
        %v2116 = vpop.f32.mrb[0].mxu0
        %v2117 = vadd.f32 0.0, %v2116
        %v2118 = vpop.f32.mrb[0].mxu0
        %2119 = vmatprep.mubr.bf16.mxu0 %v581
        %2120 = vmatmul.mubr.bf16.gmra.mrb[0].mxu0 %v453
        %v2121 = vpop.f32.mrb[0].mxu0
        %v2122 = vadd.f32 0.0, %v2121
        %v2123 = vpop.f32.mrb[0].mxu0
        %v2124 = vpop.f32.mrb[0].mxu0
        %v2125 = vadd.f32 0.0, %v2124
        %v2126 = vpop.f32.mrb[0].mxu0
        %2127 = vmatprep.mubr.bf16.mxu0 %v593
        %2128 = vmatmul.mubr.bf16.gmra.mrb[0].mxu0 %v455
        %v2129 = vpop.f32.mrb[0].mxu0
        %v2130 = vadd.f32 0.0, %v2129
        %v2131 = vpop.f32.mrb[0].mxu0
        %v2132 = vpop.f32.mrb[0].mxu0
        %v2133 = vadd.f32 0.0, %v2132
        %v2134 = vpop.f32.mrb[0].mxu0
        %2135 = vmatprep.mubr.bf16.mxu0 %v605
        %2136 = vmatmul.mubr.bf16.gmra.mrb[0].mxu0 %v457
        %v2137 = vpop.f32.mrb[0].mxu0
        %v2138 = vadd.f32 0.0, %v2137
        %v2139 = vpop.f32.mrb[0].mxu0
        %v2140 = vpop.f32.mrb[0].mxu0
        %v2141 = vadd.f32 0.0, %v2140
        %v2142 = vpop.f32.mrb[0].mxu0
        %2143 = vmatprep.mubr.bf16.mxu0 %v617
        %2144 = vmatmul.mubr.bf16.gmra.mrb[0].mxu0 %v459
        %v2145 = vpop.f32.mrb[0].mxu0
        %v2146 = vadd.f32 0.0, %v2145
        %v2147 = vpop.f32.mrb[0].mxu0
        %v2148 = vpop.f32.mrb[0].mxu0
        %v2149 = vadd.f32 0.0, %v2148
        %v2150 = vpop.f32.mrb[0].mxu0
        %2151 = vmatprep.mubr.bf16.mxu0 %v629
        %2152 = vmatmul.mubr.bf16.gmra.mrb[0].mxu0 %v461
        %v2153 = vpop.f32.mrb[0].mxu0
        %v2154 = vadd.f32 0.0, %v2153
        %v2155 = vpop.f32.mrb[0].mxu0
        %v2156 = vpop.f32.mrb[0].mxu0
        %v2157 = vadd.f32 0.0, %v2156
        %v2158 = vpop.f32.mrb[0].mxu0
        %2159 = vmatprep.mubr.bf16.mxu0 %v641
        %2160 = vmatmul.mubr.bf16.gmra.mrb[0].mxu0 %v463
        %v2161 = vpop.f32.mrb[0].mxu0
        %v2162 = vadd.f32 0.0, %v2161
        %v2163 = vpop.f32.mrb[0].mxu0
        %v2164 = vpop.f32.mrb[0].mxu0
        %v2165 = vadd.f32 0.0, %v2164
        %v2166 = vpop.f32.mrb[0].mxu0
        %2167 = vmatprep.mubr.bf16.mxu0 %v653
        %2168 = vmatmul.mubr.bf16.gmra.mrb[0].mxu0 %v465
        %v2169 = vpop.f32.mrb[0].mxu0
        %v2170 = vadd.f32 0.0, %v2169
        %v2171 = vpop.f32.mrb[0].mxu0
        %v2172 = vpop.f32.mrb[0].mxu0
        %v2173 = vadd.f32 0.0, %v2172
        %v2174 = vpop.f32.mrb[0].mxu0
        %2175 = vmatprep.mubr.bf16.mxu0 %v665
        %2176 = vmatmul.mubr.bf16.gmra.mrb[0].mxu0 %v467
        %v2177 = vpop.f32.mrb[0].mxu0
        %v2178 = vadd.f32 0.0, %v2177
        %v2179 = vpop.f32.mrb[0].mxu0
        %v2180 = vpop.f32.mrb[0].mxu0
        %v2181 = vadd.f32 0.0, %v2180
        %v2182 = vpop.f32.mrb[0].mxu0
        %2183 = vmatprep.mubr.bf16.mxu0 %v677
        %2184 = vmatmul.mubr.bf16.gmra.mrb[0].mxu0 %v469
        %v2185 = vpop.f32.mrb[0].mxu0
        %v2186 = vadd.f32 0.0, %v2185
        %v2187 = vpop.f32.mrb[0].mxu0
        %v2188 = vpop.f32.mrb[0].mxu0
        %v2189 = vadd.f32 0.0, %v2188
        %v2190 = vpop.f32.mrb[0].mxu0
        %2191 = vmatprep.mubr.bf16.mxu0 %v689
        %2192 = vmatmul.mubr.bf16.gmra.mrb[0].mxu0 %v471
        %v2193 = vpop.f32.mrb[0].mxu0
        %v2194 = vadd.f32 0.0, %v2193
        %v2195 = vpop.f32.mrb[0].mxu0
        %v2196 = vpop.f32.mrb[0].mxu0
        %v2197 = vadd.f32 0.0, %v2196
        %v2198 = vpop.f32.mrb[0].mxu0
        %2199 = vdwg.mxu0
        %2200 = vmatprep.subr.bf16.mxu0 0
        %2201 = vmatpush1.bf16.msra.mxu0 %v2007
        %2202 = vmatprep.subr.bf16.mxu0 0
        %2203 = vmatpush1.bf16.msra.mxu0 %v2008
        %2204 = vmatprep.subr.bf16.mxu0 0
        %2205 = vmatpush1.bf16.msra.mxu0 %v2009
        %2206 = vmatprep.subr.bf16.mxu0 0
        %2207 = vmatpush1.bf16.msra.mxu0 %v2010
        %2208 = vmatprep.subr.bf16.mxu0 0
        %2209 = vmatpush1.bf16.msra.mxu0 %v2011
        %2210 = vmatprep.subr.bf16.mxu0 0
        %2211 = vmatpush1.bf16.msra.mxu0 %v2012
        %2212 = vmatprep.subr.bf16.mxu0 0
        %2213 = vmatpush1.bf16.msra.mxu0 %v2013
        %2214 = vmatprep.subr.bf16.mxu0 0
        %2215 = vmatpush1.bf16.msra.mxu0 %v2014
        %2216 = vmatprep.subr.bf16.mxu0 0
        %2217 = vmatpush1.bf16.msra.mxu0 0
        %2218 = vmatprep.subr.bf16.mxu0 0
        %2219 = vmatpush1.bf16.msra.mxu0 0
        %2220 = vmatprep.subr.bf16.mxu0 0
        %2221 = vmatpush1.bf16.msra.mxu0 0
        %2222 = vmatprep.subr.bf16.mxu0 0
        %2223 = vmatpush1.bf16.msra.mxu0 0
        %2224 = vmatprep.subr.bf16.mxu0 0
        %2225 = vmatpush1.bf16.msra.mxu0 0
        %2226 = vmatprep.subr.bf16.mxu0 0
        %2227 = vmatpush1.bf16.msra.mxu0 0
        %2228 = vmatprep.subr.bf16.mxu0 0
        %2229 = vmatpush1.bf16.msra.mxu0 0
        %2230 = vmatprep.subr.bf16.mxu0 0
        %2231 = vmatpush1.bf16.msra.mxu0 0
        %2232 = vmatprep.mubr.bf16.mxu0 0
        %2233 = vmatmul.mubr.bf16.gmra.mrb[0].mxu0 %v753
        %v2234 = vpop.f32.mrb[0].mxu0
        %v2235 = vadd.f32 %v2074, %v2234
        %v2236 = vpop.f32.mrb[0].mxu0
        %v2237 = vpop.f32.mrb[0].mxu0
        %v2238 = vadd.f32 %v2077, %v2237
        %v2239 = vpop.f32.mrb[0].mxu0
        %2240 = vmatprep.mubr.bf16.mxu0 0
        %2241 = vmatmul.mubr.bf16.gmra.mrb[0].mxu0 %v756
        %v2242 = vpop.f32.mrb[0].mxu0
        %v2243 = vadd.f32 %v2082, %v2242
        %v2244 = vpop.f32.mrb[0].mxu0
        %v2245 = vpop.f32.mrb[0].mxu0
        %v2246 = vadd.f32 %v2085, %v2245
        %v2247 = vpop.f32.mrb[0].mxu0
        %2248 = vmatprep.mubr.bf16.mxu0 0
        %2249 = vmatmul.mubr.bf16.gmra.mrb[0].mxu0 %v759
        %v2250 = vpop.f32.mrb[0].mxu0
        %v2251 = vadd.f32 %v2090, %v2250
        %v2252 = vpop.f32.mrb[0].mxu0
        %v2253 = vpop.f32.mrb[0].mxu0
        %v2254 = vadd.f32 %v2093, %v2253
        %v2255 = vpop.f32.mrb[0].mxu0
        %2256 = vmatprep.mubr.bf16.mxu0 0
        %2257 = vmatmul.mubr.bf16.gmra.mrb[0].mxu0 %v762
        %v2258 = vpop.f32.mrb[0].mxu0
        %v2259 = vadd.f32 %v2098, %v2258
        %v2260 = vpop.f32.mrb[0].mxu0
        %v2261 = vpop.f32.mrb[0].mxu0
        %v2262 = vadd.f32 %v2101, %v2261
        %v2263 = vpop.f32.mrb[0].mxu0
        %2264 = vmatprep.mubr.bf16.mxu0 0
        %2265 = vmatmul.mubr.bf16.gmra.mrb[0].mxu0 %v765
        %v2266 = vpop.f32.mrb[0].mxu0
        %v2267 = vadd.f32 %v2106, %v2266
        %v2268 = vpop.f32.mrb[0].mxu0
        %v2269 = vpop.f32.mrb[0].mxu0
        %v2270 = vadd.f32 %v2109, %v2269
        %v2271 = vpop.f32.mrb[0].mxu0
        %2272 = vmatprep.mubr.bf16.mxu0 0
        %2273 = vmatmul.mubr.bf16.gmra.mrb[0].mxu0 %v768
        %v2274 = vpop.f32.mrb[0].mxu0
        %v2275 = vadd.f32 %v2114, %v2274
        %v2276 = vpop.f32.mrb[0].mxu0
        %v2277 = vpop.f32.mrb[0].mxu0
        %v2278 = vadd.f32 %v2117, %v2277
        %v2279 = vpop.f32.mrb[0].mxu0
        %2280 = vmatprep.mubr.bf16.mxu0 0
        %2281 = vmatmul.mubr.bf16.gmra.mrb[0].mxu0 %v771
        %v2282 = vpop.f32.mrb[0].mxu0
        %v2283 = vadd.f32 %v2122, %v2282
        %v2284 = vpop.f32.mrb[0].mxu0
        %v2285 = vpop.f32.mrb[0].mxu0
        %v2286 = vadd.f32 %v2125, %v2285
        %v2287 = vpop.f32.mrb[0].mxu0
        %2288 = vmatprep.mubr.bf16.mxu0 0
        %2289 = vmatmul.mubr.bf16.gmra.mrb[0].mxu0 %v774
        %v2290 = vpop.f32.mrb[0].mxu0
        %v2291 = vadd.f32 %v2130, %v2290
        %v2292 = vpop.f32.mrb[0].mxu0
        %v2293 = vpop.f32.mrb[0].mxu0
        %v2294 = vadd.f32 %v2133, %v2293
        %v2295 = vpop.f32.mrb[0].mxu0
        %2296 = vmatprep.mubr.bf16.mxu0 0
        %2297 = vmatmul.mubr.bf16.gmra.mrb[0].mxu0 %v777
        %v2298 = vpop.f32.mrb[0].mxu0
        %v2299 = vadd.f32 %v2138, %v2298
        %v2300 = vpop.f32.mrb[0].mxu0
        %v2301 = vpop.f32.mrb[0].mxu0
        %v2302 = vadd.f32 %v2141, %v2301
        %v2303 = vpop.f32.mrb[0].mxu0
        %2304 = vmatprep.mubr.bf16.mxu0 0
        %2305 = vmatmul.mubr.bf16.gmra.mrb[0].mxu0 %v780
        %v2306 = vpop.f32.mrb[0].mxu0
        %v2307 = vadd.f32 %v2146, %v2306
        %v2308 = vpop.f32.mrb[0].mxu0
        %v2309 = vpop.f32.mrb[0].mxu0
        %v2310 = vadd.f32 %v2149, %v2309
        %v2311 = vpop.f32.mrb[0].mxu0
        %2312 = vmatprep.mubr.bf16.mxu0 0
        %2313 = vmatmul.mubr.bf16.gmra.mrb[0].mxu0 %v783
        %v2314 = vpop.f32.mrb[0].mxu0
        %v2315 = vadd.f32 %v2154, %v2314
        %v2316 = vpop.f32.mrb[0].mxu0
        %v2317 = vpop.f32.mrb[0].mxu0
        %v2318 = vadd.f32 %v2157, %v2317
        %v2319 = vpop.f32.mrb[0].mxu0
        %2320 = vmatprep.mubr.bf16.mxu0 0
        %2321 = vmatmul.mubr.bf16.gmra.mrb[0].mxu0 %v786
        %v2322 = vpop.f32.mrb[0].mxu0
        %v2323 = vadd.f32 %v2162, %v2322
        %v2324 = vpop.f32.mrb[0].mxu0
        %v2325 = vpop.f32.mrb[0].mxu0
        %v2326 = vadd.f32 %v2165, %v2325
        %v2327 = vpop.f32.mrb[0].mxu0
        %2328 = vmatprep.mubr.bf16.mxu0 0
        %2329 = vmatmul.mubr.bf16.gmra.mrb[0].mxu0 %v789
        %v2330 = vpop.f32.mrb[0].mxu0
        %v2331 = vadd.f32 %v2170, %v2330
        %v2332 = vpop.f32.mrb[0].mxu0
        %v2333 = vpop.f32.mrb[0].mxu0
        %v2334 = vadd.f32 %v2173, %v2333
        %v2335 = vpop.f32.mrb[0].mxu0
        %2336 = vmatprep.mubr.bf16.mxu0 0
        %2337 = vmatmul.mubr.bf16.gmra.mrb[0].mxu0 %v792
        %v2338 = vpop.f32.mrb[0].mxu0
        %v2339 = vadd.f32 %v2178, %v2338
        %v2340 = vpop.f32.mrb[0].mxu0
        %v2341 = vpop.f32.mrb[0].mxu0
        %v2342 = vadd.f32 %v2181, %v2341
        %v2343 = vpop.f32.mrb[0].mxu0
        %2344 = vmatprep.mubr.bf16.mxu0 0
        %2345 = vmatmul.mubr.bf16.gmra.mrb[0].mxu0 %v795
        %v2346 = vpop.f32.mrb[0].mxu0
        %v2347 = vadd.f32 %v2186, %v2346
        %v2348 = vpop.f32.mrb[0].mxu0
        %v2349 = vpop.f32.mrb[0].mxu0
        %v2350 = vadd.f32 %v2189, %v2349
        %v2351 = vpop.f32.mrb[0].mxu0
        %2352 = vmatprep.mubr.bf16.mxu0 0
        %2353 = vmatmul.mubr.bf16.gmra.mrb[0].mxu0 %v798
        %v2354 = vpop.f32.mrb[0].mxu0
        %v2355 = vadd.f32 %v2194, %v2354
        %v2356 = vpop.f32.mrb[0].mxu0
        %v2357 = vpop.f32.mrb[0].mxu0
        %v2358 = vadd.f32 %v2197, %v2357
        %v2359 = vpop.f32.mrb[0].mxu0
        %2360 = vdwg.mxu0
        %v2361 = vadd.f32 %v1720, %v2235
        %v2362 = vadd.f32 %v1723, %v2238
        %v2363 = vadd.f32 %v1728, %v2243
        %v2364 = vadd.f32 %v1731, %v2246
        %v2365 = vadd.f32 %v1736, %v2251
        %v2366 = vadd.f32 %v1739, %v2254
        %v2367 = vadd.f32 %v1744, %v2259
        %v2368 = vadd.f32 %v1747, %v2262
        %v2369 = vadd.f32 %v1752, %v2267
        %v2370 = vadd.f32 %v1755, %v2270
        %v2371 = vadd.f32 %v1760, %v2275
        %v2372 = vadd.f32 %v1763, %v2278
        %v2373 = vadd.f32 %v1768, %v2283
        %v2374 = vadd.f32 %v1771, %v2286
        %v2375 = vadd.f32 %v1776, %v2291
        %v2376 = vadd.f32 %v1779, %v2294
        %v2377 = vadd.f32 %v1784, %v2299
        %v2378 = vadd.f32 %v1787, %v2302
        %v2379 = vadd.f32 %v1792, %v2307
        %v2380 = vadd.f32 %v1795, %v2310
        %v2381 = vadd.f32 %v1800, %v2315
        %v2382 = vadd.f32 %v1803, %v2318
        %v2383 = vadd.f32 %v1808, %v2323
        %v2384 = vadd.f32 %v1811, %v2326
        %v2385 = vadd.f32 %v1816, %v2331
        %v2386 = vadd.f32 %v1819, %v2334
        %v2387 = vadd.f32 %v1824, %v2339
        %v2388 = vadd.f32 %v1827, %v2342
        %v2389 = vadd.f32 %v1832, %v2347
        %v2390 = vadd.f32 %v1835, %v2350
        %v2391 = vadd.f32 %v1840, %v2355
        %v2392 = vadd.f32 %v1843, %v2358
        %v2393 = vld [vmem:[%s2] sm:$0x1]
        %v2395 = vlaneseq
        %v2396 = vshrl.u32 %v2395, 7
        %v2397 = vsub.s32 0, %v2396
        %v2398 = vrot.slane %v2393, %v2397
        %v2400 = vadd.f32 %v2361, %v2398
        %v2401 = vadd.f32 %v2362, %v2398
        %v2402 = vadd.f32 %v2363, %v2398
        %v2403 = vadd.f32 %v2364, %v2398
        %v2404 = vadd.f32 %v2365, %v2398
        %v2405 = vadd.f32 %v2366, %v2398
        %v2406 = vadd.f32 %v2367, %v2398
        %v2407 = vadd.f32 %v2368, %v2398
        %v2408 = vadd.f32 %v2369, %v2398
        %v2409 = vadd.f32 %v2370, %v2398
        %v2410 = vadd.f32 %v2371, %v2398
        %v2411 = vadd.f32 %v2372, %v2398
        %v2412 = vadd.f32 %v2373, %v2398
        %v2413 = vadd.f32 %v2374, %v2398
        %v2414 = vadd.f32 %v2375, %v2398
        %v2415 = vadd.f32 %v2376, %v2398
        %v2416 = vadd.f32 %v2377, %v2398
        %v2417 = vadd.f32 %v2378, %v2398
        %v2418 = vadd.f32 %v2379, %v2398
        %v2419 = vadd.f32 %v2380, %v2398
        %v2420 = vadd.f32 %v2381, %v2398
        %v2421 = vadd.f32 %v2382, %v2398
        %v2422 = vadd.f32 %v2383, %v2398
        %v2423 = vadd.f32 %v2384, %v2398
        %v2424 = vadd.f32 %v2385, %v2398
        %v2425 = vadd.f32 %v2386, %v2398
        %v2426 = vadd.f32 %v2387, %v2398
        %v2427 = vadd.f32 %v2388, %v2398
        %v2428 = vadd.f32 %v2389, %v2398
        %v2429 = vadd.f32 %v2390, %v2398
        %v2430 = vadd.f32 %v2391, %v2398
        %v2431 = vadd.f32 %v2392, %v2398
        %v2432 = vmax.f32 %v2400, 0.0
        %v2433 = vmax.f32 %v2401, 0.0
        %v2434 = vmax.f32 %v2402, 0.0
        %v2435 = vmax.f32 %v2403, 0.0
        %v2436 = vmax.f32 %v2404, 0.0
        %v2437 = vmax.f32 %v2405, 0.0
        %v2438 = vmax.f32 %v2406, 0.0
        %v2439 = vmax.f32 %v2407, 0.0
        %v2440 = vmax.f32 %v2408, 0.0
        %v2441 = vmax.f32 %v2409, 0.0
        %v2442 = vmax.f32 %v2410, 0.0
        %v2443 = vmax.f32 %v2411, 0.0
        %v2444 = vmax.f32 %v2412, 0.0
        %v2445 = vmax.f32 %v2413, 0.0
        %v2446 = vmax.f32 %v2414, 0.0
        %v2447 = vmax.f32 %v2415, 0.0
        %v2448 = vmax.f32 %v2416, 0.0
        %v2449 = vmax.f32 %v2417, 0.0
        %v2450 = vmax.f32 %v2418, 0.0
        %v2451 = vmax.f32 %v2419, 0.0
        %v2452 = vmax.f32 %v2420, 0.0
        %v2453 = vmax.f32 %v2421, 0.0
        %v2454 = vmax.f32 %v2422, 0.0
        %v2455 = vmax.f32 %v2423, 0.0
        %v2456 = vmax.f32 %v2424, 0.0
        %v2457 = vmax.f32 %v2425, 0.0
        %v2458 = vmax.f32 %v2426, 0.0
        %v2459 = vmax.f32 %v2427, 0.0
        %v2460 = vmax.f32 %v2428, 0.0
        %v2461 = vmax.f32 %v2429, 0.0
        %v2462 = vmax.f32 %v2430, 0.0
        %v2463 = vmax.f32 %v2431, 0.0
        %v2464 = vpack.c.bf16 %v2433, %v2432
        %v2465 = vpack.c.bf16 %v2435, %v2434
        %v2466 = vpack.c.bf16 %v2437, %v2436
        %v2467 = vpack.c.bf16 %v2439, %v2438
        %v2468 = vpack.c.bf16 %v2441, %v2440
        %v2469 = vpack.c.bf16 %v2443, %v2442
        %v2470 = vpack.c.bf16 %v2445, %v2444
        %v2471 = vpack.c.bf16 %v2447, %v2446
        %v2472 = vpack.c.bf16 %v2449, %v2448
        %v2473 = vpack.c.bf16 %v2451, %v2450
        %v2474 = vpack.c.bf16 %v2453, %v2452
        %v2475 = vpack.c.bf16 %v2455, %v2454
        %v2476 = vpack.c.bf16 %v2457, %v2456
        %v2477 = vpack.c.bf16 %v2459, %v2458
        %v2478 = vpack.c.bf16 %v2461, %v2460
        %v2479 = vpack.c.bf16 %v2463, %v2462
        %v2496 = vrot.slane %v2464, 4
        %v2497 = vrot.slane %v2465, 4
        %v2498 = vrot.slane %v2466, 4
        %v2499 = vrot.slane %v2467, 4
        %v2500 = vrot.slane %v2468, 4
        %v2501 = vrot.slane %v2469, 4
        %v2502 = vrot.slane %v2470, 4
        %v2503 = vrot.slane %v2471, 4
        %v2504 = vrot.slane %v2472, 4
        %v2505 = vrot.slane %v2473, 4
        %v2506 = vrot.slane %v2474, 4
        %v2507 = vrot.slane %v2475, 4
        %v2508 = vrot.slane %v2476, 4
        %v2509 = vrot.slane %v2477, 4
        %v2510 = vrot.slane %v2478, 4
        %v2511 = vrot.slane %v2479, 4
        %s2528 = scalar_lea.vmem [#allocation2], 16
        %2529 = vst [vmem:[%s2528] sm:$0xf0] %v2496
        %2530 = vst [vmem:[%s2528 + $0x8] sm:$0xf] %v2496
        %2531 = vst [vmem:[%s2528 + $0x10] sm:$0xf0] %v2497
        %2532 = vst [vmem:[%s2528 + $0x18] sm:$0xf] %v2497
        %2533 = vst [vmem:[%s2528 + $0x20] sm:$0xf0] %v2498
        %2534 = vst [vmem:[%s2528 + $0x28] sm:$0xf] %v2498
        %2535 = vst [vmem:[%s2528 + $0x30] sm:$0xf0] %v2499
        %2536 = vst [vmem:[%s2528 + $0x38] sm:$0xf] %v2499
        %2537 = vst [vmem:[%s2528 + $0x40] sm:$0xf0] %v2500
        %2538 = vst [vmem:[%s2528 + $0x48] sm:$0xf] %v2500
        %2539 = vst [vmem:[%s2528 + $0x50] sm:$0xf0] %v2501
        %2540 = vst [vmem:[%s2528 + $0x58] sm:$0xf] %v2501
        %2541 = vst [vmem:[%s2528 + $0x60] sm:$0xf0] %v2502
        %2542 = vst [vmem:[%s2528 + $0x68] sm:$0xf] %v2502
        %2543 = vst [vmem:[%s2528 + $0x70] sm:$0xf0] %v2503
        %2544 = vst [vmem:[%s2528 + $0x78] sm:$0xf] %v2503
        %2545 = vst [vmem:[%s2528 + $0x80] sm:$0xf0] %v2504
        %2546 = vst [vmem:[%s2528 + $0x88] sm:$0xf] %v2504
        %2547 = vst [vmem:[%s2528 + $0x90] sm:$0xf0] %v2505
        %2548 = vst [vmem:[%s2528 + $0x98] sm:$0xf] %v2505
        %2549 = vst [vmem:[%s2528 + $0xa0] sm:$0xf0] %v2506
        %2550 = vst [vmem:[%s2528 + $0xa8] sm:$0xf] %v2506
        %2551 = vst [vmem:[%s2528 + $0xb0] sm:$0xf0] %v2507
        %2552 = vst [vmem:[%s2528 + $0xb8] sm:$0xf] %v2507
        %2553 = vst [vmem:[%s2528 + $0xc0] sm:$0xf0] %v2508
        %2554 = vst [vmem:[%s2528 + $0xc8] sm:$0xf] %v2508
        %2555 = vst [vmem:[%s2528 + $0xd0] sm:$0xf0] %v2509
        %2556 = vst [vmem:[%s2528 + $0xd8] sm:$0xf] %v2509
        %2557 = vst [vmem:[%s2528 + $0xe0] sm:$0xf0] %v2510
        %2558 = vst [vmem:[%s2528 + $0xe8] sm:$0xf] %v2510
        %2559 = vst [vmem:[%s2528 + $0xf0] sm:$0xf0] %v2511
        %2560 = vst [vmem:[%s2528 + $0xf8] sm:$0xf] %v2511
        %v2561 = vld [vmem:[#allocation2] sm:$0xff]
        %v2562 = vld [vmem:[#allocation2 + $0x8] sm:$0xff]
        %v2563 = vld [vmem:[#allocation2 + $0x10] sm:$0xff]
        %v2564 = vld [vmem:[#allocation2 + $0x18] sm:$0xff]
        %v2565 = vld [vmem:[#allocation2 + $0x20] sm:$0xff]
        %v2566 = vld [vmem:[#allocation2 + $0x28] sm:$0xff]
        %v2567 = vld [vmem:[#allocation2 + $0x30] sm:$0xff]
        %v2568 = vld [vmem:[#allocation2 + $0x38] sm:$0xff]
        %v2569 = vld [vmem:[#allocation2 + $0x40] sm:$0xff]
        %v2570 = vld [vmem:[#allocation2 + $0x48] sm:$0xff]
        %v2571 = vld [vmem:[#allocation2 + $0x50] sm:$0xff]
        %v2572 = vld [vmem:[#allocation2 + $0x58] sm:$0xff]
        %v2573 = vld [vmem:[#allocation2 + $0x60] sm:$0xff]
        %v2574 = vld [vmem:[#allocation2 + $0x68] sm:$0xff]
        %v2575 = vld [vmem:[#allocation2 + $0x70] sm:$0xff]
        %v2576 = vld [vmem:[#allocation2 + $0x78] sm:$0xff]
        %v2577 = vld [vmem:[#allocation2 + $0x80] sm:$0xff]
        %v2578 = vld [vmem:[#allocation2 + $0x88] sm:$0xff]
        %v2579 = vld [vmem:[#allocation2 + $0x90] sm:$0xff]
        %v2580 = vld [vmem:[#allocation2 + $0x98] sm:$0xff]
        %v2581 = vld [vmem:[#allocation2 + $0xa0] sm:$0xff]
        %v2582 = vld [vmem:[#allocation2 + $0xa8] sm:$0xff]
        %v2583 = vld [vmem:[#allocation2 + $0xb0] sm:$0xff]
        %v2584 = vld [vmem:[#allocation2 + $0xb8] sm:$0xff]
        %v2585 = vld [vmem:[#allocation2 + $0xc0] sm:$0xff]
        %v2586 = vld [vmem:[#allocation2 + $0xc8] sm:$0xff]
        %v2587 = vld [vmem:[#allocation2 + $0xd0] sm:$0xff]
        %v2588 = vld [vmem:[#allocation2 + $0xd8] sm:$0xff]
        %v2589 = vld [vmem:[#allocation2 + $0xe0] sm:$0xff]
        %v2590 = vld [vmem:[#allocation2 + $0xe8] sm:$0xff]
        %v2591 = vld [vmem:[#allocation2 + $0xf0] sm:$0xff]
        %v2592 = vld [vmem:[#allocation2 + $0xf8] sm:$0xff]
        %v2593 = vld [vmem:[#allocation2 + $0x100] sm:$0xff]
        %v2594 = vld [vmem:[#allocation2 + $0x108] sm:$0xff]
        %v2595 = vld [vmem:[#allocation2 + $0x110] sm:$0xff]
        %v2596 = vld [vmem:[#allocation2 + $0x118] sm:$0xff]
        %v2598 = vshrl.u32 %v2561, 16
        %v2600 = vshll.u32 %v2561, 16
        %v2602 = vrot.slane %v2600, 1
        %v2603 = vor.u32 %v2598, %v2602
        %v2605 = vshll.u32 %v2562, 16
        %v2607 = vrot.slane %v2605, 1
        %v2608 = vsel %vm473, %v2603, %v2607
        %v2609 = vshrl.u32 %v2562, 16
        %v2611 = vor.u32 %v2609, %v2607
        %v2613 = vshrl.u32 %v2563, 16
        %v2615 = vshll.u32 %v2563, 16
        %v2617 = vrot.slane %v2615, 1
        %v2618 = vor.u32 %v2613, %v2617
        %v2620 = vshll.u32 %v2564, 16
        %v2622 = vrot.slane %v2620, 1
        %v2623 = vsel %vm473, %v2618, %v2622
        %v2624 = vshrl.u32 %v2564, 16
        %v2626 = vor.u32 %v2624, %v2622
        %v2628 = vshrl.u32 %v2565, 16
        %v2630 = vshll.u32 %v2565, 16
        %v2632 = vrot.slane %v2630, 1
        %v2633 = vor.u32 %v2628, %v2632
        %v2635 = vshll.u32 %v2566, 16
        %v2637 = vrot.slane %v2635, 1
        %v2638 = vsel %vm473, %v2633, %v2637
        %v2639 = vshrl.u32 %v2566, 16
        %v2641 = vor.u32 %v2639, %v2637
        %v2643 = vshrl.u32 %v2567, 16
        %v2645 = vshll.u32 %v2567, 16
        %v2647 = vrot.slane %v2645, 1
        %v2648 = vor.u32 %v2643, %v2647
        %v2650 = vshll.u32 %v2568, 16
        %v2652 = vrot.slane %v2650, 1
        %v2653 = vsel %vm473, %v2648, %v2652
        %v2654 = vshrl.u32 %v2568, 16
        %v2656 = vor.u32 %v2654, %v2652
        %v2658 = vshrl.u32 %v2569, 16
        %v2660 = vshll.u32 %v2569, 16
        %v2662 = vrot.slane %v2660, 1
        %v2663 = vor.u32 %v2658, %v2662
        %v2665 = vshll.u32 %v2570, 16
        %v2667 = vrot.slane %v2665, 1
        %v2668 = vsel %vm473, %v2663, %v2667
        %v2669 = vshrl.u32 %v2570, 16
        %v2671 = vor.u32 %v2669, %v2667
        %v2673 = vshrl.u32 %v2571, 16
        %v2675 = vshll.u32 %v2571, 16
        %v2677 = vrot.slane %v2675, 1
        %v2678 = vor.u32 %v2673, %v2677
        %v2680 = vshll.u32 %v2572, 16
        %v2682 = vrot.slane %v2680, 1
        %v2683 = vsel %vm473, %v2678, %v2682
        %v2684 = vshrl.u32 %v2572, 16
        %v2686 = vor.u32 %v2684, %v2682
        %v2688 = vshrl.u32 %v2573, 16
        %v2690 = vshll.u32 %v2573, 16
        %v2692 = vrot.slane %v2690, 1
        %v2693 = vor.u32 %v2688, %v2692
        %v2695 = vshll.u32 %v2574, 16
        %v2697 = vrot.slane %v2695, 1
        %v2698 = vsel %vm473, %v2693, %v2697
        %v2699 = vshrl.u32 %v2574, 16
        %v2701 = vor.u32 %v2699, %v2697
        %v2703 = vshrl.u32 %v2575, 16
        %v2705 = vshll.u32 %v2575, 16
        %v2707 = vrot.slane %v2705, 1
        %v2708 = vor.u32 %v2703, %v2707
        %v2710 = vshll.u32 %v2576, 16
        %v2712 = vrot.slane %v2710, 1
        %v2713 = vsel %vm473, %v2708, %v2712
        %v2714 = vshrl.u32 %v2576, 16
        %v2716 = vor.u32 %v2714, %v2712
        %v2718 = vshrl.u32 %v2577, 16
        %v2720 = vshll.u32 %v2577, 16
        %v2722 = vrot.slane %v2720, 1
        %v2723 = vor.u32 %v2718, %v2722
        %v2725 = vshll.u32 %v2578, 16
        %v2727 = vrot.slane %v2725, 1
        %v2728 = vsel %vm473, %v2723, %v2727
        %v2729 = vshrl.u32 %v2578, 16
        %v2731 = vor.u32 %v2729, %v2727
        %v2733 = vshrl.u32 %v2579, 16
        %v2735 = vshll.u32 %v2579, 16
        %v2737 = vrot.slane %v2735, 1
        %v2738 = vor.u32 %v2733, %v2737
        %v2740 = vshll.u32 %v2580, 16
        %v2742 = vrot.slane %v2740, 1
        %v2743 = vsel %vm473, %v2738, %v2742
        %v2744 = vshrl.u32 %v2580, 16
        %v2746 = vor.u32 %v2744, %v2742
        %v2748 = vshrl.u32 %v2581, 16
        %v2750 = vshll.u32 %v2581, 16
        %v2752 = vrot.slane %v2750, 1
        %v2753 = vor.u32 %v2748, %v2752
        %v2755 = vshll.u32 %v2582, 16
        %v2757 = vrot.slane %v2755, 1
        %v2758 = vsel %vm473, %v2753, %v2757
        %v2759 = vshrl.u32 %v2582, 16
        %v2761 = vor.u32 %v2759, %v2757
        %v2763 = vshrl.u32 %v2583, 16
        %v2765 = vshll.u32 %v2583, 16
        %v2767 = vrot.slane %v2765, 1
        %v2768 = vor.u32 %v2763, %v2767
        %v2770 = vshll.u32 %v2584, 16
        %v2772 = vrot.slane %v2770, 1
        %v2773 = vsel %vm473, %v2768, %v2772
        %v2774 = vshrl.u32 %v2584, 16
        %v2776 = vor.u32 %v2774, %v2772
        %v2778 = vshrl.u32 %v2585, 16
        %v2780 = vshll.u32 %v2585, 16
        %v2782 = vrot.slane %v2780, 1
        %v2783 = vor.u32 %v2778, %v2782
        %v2785 = vshll.u32 %v2586, 16
        %v2787 = vrot.slane %v2785, 1
        %v2788 = vsel %vm473, %v2783, %v2787
        %v2789 = vshrl.u32 %v2586, 16
        %v2791 = vor.u32 %v2789, %v2787
        %v2793 = vshrl.u32 %v2587, 16
        %v2795 = vshll.u32 %v2587, 16
        %v2797 = vrot.slane %v2795, 1
        %v2798 = vor.u32 %v2793, %v2797
        %v2800 = vshll.u32 %v2588, 16
        %v2802 = vrot.slane %v2800, 1
        %v2803 = vsel %vm473, %v2798, %v2802
        %v2804 = vshrl.u32 %v2588, 16
        %v2806 = vor.u32 %v2804, %v2802
        %v2808 = vshrl.u32 %v2589, 16
        %v2810 = vshll.u32 %v2589, 16
        %v2812 = vrot.slane %v2810, 1
        %v2813 = vor.u32 %v2808, %v2812
        %v2815 = vshll.u32 %v2590, 16
        %v2817 = vrot.slane %v2815, 1
        %v2818 = vsel %vm473, %v2813, %v2817
        %v2819 = vshrl.u32 %v2590, 16
        %v2821 = vor.u32 %v2819, %v2817
        %v2823 = vshrl.u32 %v2591, 16
        %v2825 = vshll.u32 %v2591, 16
        %v2827 = vrot.slane %v2825, 1
        %v2828 = vor.u32 %v2823, %v2827
        %v2830 = vshll.u32 %v2592, 16
        %v2832 = vrot.slane %v2830, 1
        %v2833 = vsel %vm473, %v2828, %v2832
        %v2834 = vshrl.u32 %v2592, 16
        %v2836 = vor.u32 %v2834, %v2832
        %v2838 = vshrl.u32 %v2593, 16
        %v2840 = vshll.u32 %v2593, 16
        %v2842 = vrot.slane %v2840, 1
        %v2843 = vor.u32 %v2838, %v2842
        %v2845 = vshll.u32 %v2594, 16
        %v2847 = vrot.slane %v2845, 1
        %v2848 = vsel %vm473, %v2843, %v2847
        %v2849 = vshrl.u32 %v2594, 16
        %v2851 = vor.u32 %v2849, %v2847
        %v2853 = vshrl.u32 %v2595, 16
        %v2855 = vshll.u32 %v2595, 16
        %v2857 = vrot.slane %v2855, 1
        %v2858 = vor.u32 %v2853, %v2857
        %v2860 = vshll.u32 %v2596, 16
        %v2862 = vrot.slane %v2860, 1
        %v2863 = vsel %vm473, %v2858, %v2862
        %v2864 = vshrl.u32 %v2596, 16
        %v2866 = vor.u32 %v2864, %v2862
        %v2903 = vrot.slane %v2561, 1
        %v2904 = vrot.slane %v2562, 1
        %v2905 = vsel %vm744, %v2903, %v2904
        %v2906 = vrot.slane %v2563, 1
        %v2907 = vrot.slane %v2564, 1
        %v2908 = vsel %vm744, %v2906, %v2907
        %v2909 = vrot.slane %v2565, 1
        %v2910 = vrot.slane %v2566, 1
        %v2911 = vsel %vm744, %v2909, %v2910
        %v2912 = vrot.slane %v2567, 1
        %v2913 = vrot.slane %v2568, 1
        %v2914 = vsel %vm744, %v2912, %v2913
        %v2915 = vrot.slane %v2569, 1
        %v2916 = vrot.slane %v2570, 1
        %v2917 = vsel %vm744, %v2915, %v2916
        %v2918 = vrot.slane %v2571, 1
        %v2919 = vrot.slane %v2572, 1
        %v2920 = vsel %vm744, %v2918, %v2919
        %v2921 = vrot.slane %v2573, 1
        %v2922 = vrot.slane %v2574, 1
        %v2923 = vsel %vm744, %v2921, %v2922
        %v2924 = vrot.slane %v2575, 1
        %v2925 = vrot.slane %v2576, 1
        %v2926 = vsel %vm744, %v2924, %v2925
        %v2927 = vrot.slane %v2577, 1
        %v2928 = vrot.slane %v2578, 1
        %v2929 = vsel %vm744, %v2927, %v2928
        %v2930 = vrot.slane %v2579, 1
        %v2931 = vrot.slane %v2580, 1
        %v2932 = vsel %vm744, %v2930, %v2931
        %v2933 = vrot.slane %v2581, 1
        %v2934 = vrot.slane %v2582, 1
        %v2935 = vsel %vm744, %v2933, %v2934
        %v2936 = vrot.slane %v2583, 1
        %v2937 = vrot.slane %v2584, 1
        %v2938 = vsel %vm744, %v2936, %v2937
        %v2939 = vrot.slane %v2585, 1
        %v2940 = vrot.slane %v2586, 1
        %v2941 = vsel %vm744, %v2939, %v2940
        %v2942 = vrot.slane %v2587, 1
        %v2943 = vrot.slane %v2588, 1
        %v2944 = vsel %vm744, %v2942, %v2943
        %v2945 = vrot.slane %v2589, 1
        %v2946 = vrot.slane %v2590, 1
        %v2947 = vsel %vm744, %v2945, %v2946
        %v2948 = vrot.slane %v2591, 1
        %v2949 = vrot.slane %v2592, 1
        %v2950 = vsel %vm744, %v2948, %v2949
        %v2951 = vrot.slane %v2593, 1
        %v2952 = vrot.slane %v2594, 1
        %v2953 = vsel %vm744, %v2951, %v2952
        %v2954 = vrot.slane %v2595, 1
        %v2955 = vrot.slane %v2596, 1
        %v2956 = vsel %vm744, %v2954, %v2955
        %vm2957 = vsmask.f32 4352
        %v2958 = vrot.slane %v2598, 3
        %v2959 = vrot.slane %v2600, 4
        %v2960 = vor.u32 %v2958, %v2959
        %v2961 = vrot.slane %v2609, 3
        %v2962 = vrot.slane %v2605, 4
        %v2963 = vor.u32 %v2961, %v2962
        %v2964 = vsel %vm2957, %v2960, %v2963
        %v2966 = vshrl.u32 %v2608, 16
        %v2968 = vrot.slane %v2966, 3
        %v2969 = vshll.u32 %v2608, 16
        %v2971 = vrot.slane %v2969, 4
        %v2972 = vor.u32 %v2968, %v2971
        %v2974 = vshrl.u32 %v2611, 16
        %v2976 = vrot.slane %v2974, 3
        %v2977 = vshll.u32 %v2611, 16
        %v2979 = vrot.slane %v2977, 4
        %v2980 = vor.u32 %v2976, %v2979
        %v2981 = vsel %vm2957, %v2972, %v2980
        %v2983 = vshrl.u32 %v2905, 16
        %v2985 = vrot.slane %v2983, 3
        %v2986 = vshll.u32 %v2905, 16
        %v2988 = vrot.slane %v2986, 4
        %v2989 = vor.u32 %v2985, %v2988
        %v2991 = vshrl.u32 %v2904, 16
        %v2993 = vrot.slane %v2991, 3
        %v2994 = vshll.u32 %v2904, 16
        %v2996 = vrot.slane %v2994, 4
        %v2997 = vor.u32 %v2993, %v2996
        %v2998 = vsel %vm2957, %v2989, %v2997
        %v2999 = vrot.slane %v2613, 3
        %v3000 = vrot.slane %v2615, 4
        %v3001 = vor.u32 %v2999, %v3000
        %v3002 = vrot.slane %v2624, 3
        %v3003 = vrot.slane %v2620, 4
        %v3004 = vor.u32 %v3002, %v3003
        %v3005 = vsel %vm2957, %v3001, %v3004
        %v3007 = vshrl.u32 %v2623, 16
        %v3009 = vrot.slane %v3007, 3
        %v3010 = vshll.u32 %v2623, 16
        %v3012 = vrot.slane %v3010, 4
        %v3013 = vor.u32 %v3009, %v3012
        %v3015 = vshrl.u32 %v2626, 16
        %v3017 = vrot.slane %v3015, 3
        %v3018 = vshll.u32 %v2626, 16
        %v3020 = vrot.slane %v3018, 4
        %v3021 = vor.u32 %v3017, %v3020
        %v3022 = vsel %vm2957, %v3013, %v3021
        %v3024 = vshrl.u32 %v2908, 16
        %v3026 = vrot.slane %v3024, 3
        %v3027 = vshll.u32 %v2908, 16
        %v3029 = vrot.slane %v3027, 4
        %v3030 = vor.u32 %v3026, %v3029
        %v3032 = vshrl.u32 %v2907, 16
        %v3034 = vrot.slane %v3032, 3
        %v3035 = vshll.u32 %v2907, 16
        %v3037 = vrot.slane %v3035, 4
        %v3038 = vor.u32 %v3034, %v3037
        %v3039 = vsel %vm2957, %v3030, %v3038
        %v3040 = vrot.slane %v2628, 3
        %v3041 = vrot.slane %v2630, 4
        %v3042 = vor.u32 %v3040, %v3041
        %v3043 = vrot.slane %v2639, 3
        %v3044 = vrot.slane %v2635, 4
        %v3045 = vor.u32 %v3043, %v3044
        %v3046 = vsel %vm2957, %v3042, %v3045
        %v3048 = vshrl.u32 %v2638, 16
        %v3050 = vrot.slane %v3048, 3
        %v3051 = vshll.u32 %v2638, 16
        %v3053 = vrot.slane %v3051, 4
        %v3054 = vor.u32 %v3050, %v3053
        %v3056 = vshrl.u32 %v2641, 16
        %v3058 = vrot.slane %v3056, 3
        %v3059 = vshll.u32 %v2641, 16
        %v3061 = vrot.slane %v3059, 4
        %v3062 = vor.u32 %v3058, %v3061
        %v3063 = vsel %vm2957, %v3054, %v3062
        %v3065 = vshrl.u32 %v2911, 16
        %v3067 = vrot.slane %v3065, 3
        %v3068 = vshll.u32 %v2911, 16
        %v3070 = vrot.slane %v3068, 4
        %v3071 = vor.u32 %v3067, %v3070
        %v3073 = vshrl.u32 %v2910, 16
        %v3075 = vrot.slane %v3073, 3
        %v3076 = vshll.u32 %v2910, 16
        %v3078 = vrot.slane %v3076, 4
        %v3079 = vor.u32 %v3075, %v3078
        %v3080 = vsel %vm2957, %v3071, %v3079
        %v3081 = vrot.slane %v2643, 3
        %v3082 = vrot.slane %v2645, 4
        %v3083 = vor.u32 %v3081, %v3082
        %v3084 = vrot.slane %v2654, 3
        %v3085 = vrot.slane %v2650, 4
        %v3086 = vor.u32 %v3084, %v3085
        %v3087 = vsel %vm2957, %v3083, %v3086
        %v3089 = vshrl.u32 %v2653, 16
        %v3091 = vrot.slane %v3089, 3
        %v3092 = vshll.u32 %v2653, 16
        %v3094 = vrot.slane %v3092, 4
        %v3095 = vor.u32 %v3091, %v3094
        %v3097 = vshrl.u32 %v2656, 16
        %v3099 = vrot.slane %v3097, 3
        %v3100 = vshll.u32 %v2656, 16
        %v3102 = vrot.slane %v3100, 4
        %v3103 = vor.u32 %v3099, %v3102
        %v3104 = vsel %vm2957, %v3095, %v3103
        %v3106 = vshrl.u32 %v2914, 16
        %v3108 = vrot.slane %v3106, 3
        %v3109 = vshll.u32 %v2914, 16
        %v3111 = vrot.slane %v3109, 4
        %v3112 = vor.u32 %v3108, %v3111
        %v3114 = vshrl.u32 %v2913, 16
        %v3116 = vrot.slane %v3114, 3
        %v3117 = vshll.u32 %v2913, 16
        %v3119 = vrot.slane %v3117, 4
        %v3120 = vor.u32 %v3116, %v3119
        %v3121 = vsel %vm2957, %v3112, %v3120
        %v3122 = vrot.slane %v2658, 3
        %v3123 = vrot.slane %v2660, 4
        %v3124 = vor.u32 %v3122, %v3123
        %v3125 = vrot.slane %v2669, 3
        %v3126 = vrot.slane %v2665, 4
        %v3127 = vor.u32 %v3125, %v3126
        %v3128 = vsel %vm2957, %v3124, %v3127
        %v3130 = vshrl.u32 %v2668, 16
        %v3132 = vrot.slane %v3130, 3
        %v3133 = vshll.u32 %v2668, 16
        %v3135 = vrot.slane %v3133, 4
        %v3136 = vor.u32 %v3132, %v3135
        %v3138 = vshrl.u32 %v2671, 16
        %v3140 = vrot.slane %v3138, 3
        %v3141 = vshll.u32 %v2671, 16
        %v3143 = vrot.slane %v3141, 4
        %v3144 = vor.u32 %v3140, %v3143
        %v3145 = vsel %vm2957, %v3136, %v3144
        %v3147 = vshrl.u32 %v2917, 16
        %v3149 = vrot.slane %v3147, 3
        %v3150 = vshll.u32 %v2917, 16
        %v3152 = vrot.slane %v3150, 4
        %v3153 = vor.u32 %v3149, %v3152
        %v3155 = vshrl.u32 %v2916, 16
        %v3157 = vrot.slane %v3155, 3
        %v3158 = vshll.u32 %v2916, 16
        %v3160 = vrot.slane %v3158, 4
        %v3161 = vor.u32 %v3157, %v3160
        %v3162 = vsel %vm2957, %v3153, %v3161
        %v3163 = vrot.slane %v2673, 3
        %v3164 = vrot.slane %v2675, 4
        %v3165 = vor.u32 %v3163, %v3164
        %v3166 = vrot.slane %v2684, 3
        %v3167 = vrot.slane %v2680, 4
        %v3168 = vor.u32 %v3166, %v3167
        %v3169 = vsel %vm2957, %v3165, %v3168
        %v3171 = vshrl.u32 %v2683, 16
        %v3173 = vrot.slane %v3171, 3
        %v3174 = vshll.u32 %v2683, 16
        %v3176 = vrot.slane %v3174, 4
        %v3177 = vor.u32 %v3173, %v3176
        %v3179 = vshrl.u32 %v2686, 16
        %v3181 = vrot.slane %v3179, 3
        %v3182 = vshll.u32 %v2686, 16
        %v3184 = vrot.slane %v3182, 4
        %v3185 = vor.u32 %v3181, %v3184
        %v3186 = vsel %vm2957, %v3177, %v3185
        %v3188 = vshrl.u32 %v2920, 16
        %v3190 = vrot.slane %v3188, 3
        %v3191 = vshll.u32 %v2920, 16
        %v3193 = vrot.slane %v3191, 4
        %v3194 = vor.u32 %v3190, %v3193
        %v3196 = vshrl.u32 %v2919, 16
        %v3198 = vrot.slane %v3196, 3
        %v3199 = vshll.u32 %v2919, 16
        %v3201 = vrot.slane %v3199, 4
        %v3202 = vor.u32 %v3198, %v3201
        %v3203 = vsel %vm2957, %v3194, %v3202
        %v3204 = vrot.slane %v2688, 3
        %v3205 = vrot.slane %v2690, 4
        %v3206 = vor.u32 %v3204, %v3205
        %v3207 = vrot.slane %v2699, 3
        %v3208 = vrot.slane %v2695, 4
        %v3209 = vor.u32 %v3207, %v3208
        %v3210 = vsel %vm2957, %v3206, %v3209
        %v3212 = vshrl.u32 %v2698, 16
        %v3214 = vrot.slane %v3212, 3
        %v3215 = vshll.u32 %v2698, 16
        %v3217 = vrot.slane %v3215, 4
        %v3218 = vor.u32 %v3214, %v3217
        %v3220 = vshrl.u32 %v2701, 16
        %v3222 = vrot.slane %v3220, 3
        %v3223 = vshll.u32 %v2701, 16
        %v3225 = vrot.slane %v3223, 4
        %v3226 = vor.u32 %v3222, %v3225
        %v3227 = vsel %vm2957, %v3218, %v3226
        %v3229 = vshrl.u32 %v2923, 16
        %v3231 = vrot.slane %v3229, 3
        %v3232 = vshll.u32 %v2923, 16
        %v3234 = vrot.slane %v3232, 4
        %v3235 = vor.u32 %v3231, %v3234
        %v3237 = vshrl.u32 %v2922, 16
        %v3239 = vrot.slane %v3237, 3
        %v3240 = vshll.u32 %v2922, 16
        %v3242 = vrot.slane %v3240, 4
        %v3243 = vor.u32 %v3239, %v3242
        %v3244 = vsel %vm2957, %v3235, %v3243
        %v3245 = vrot.slane %v2703, 3
        %v3246 = vrot.slane %v2705, 4
        %v3247 = vor.u32 %v3245, %v3246
        %v3248 = vrot.slane %v2714, 3
        %v3249 = vrot.slane %v2710, 4
        %v3250 = vor.u32 %v3248, %v3249
        %v3251 = vsel %vm2957, %v3247, %v3250
        %v3253 = vshrl.u32 %v2713, 16
        %v3255 = vrot.slane %v3253, 3
        %v3256 = vshll.u32 %v2713, 16
        %v3258 = vrot.slane %v3256, 4
        %v3259 = vor.u32 %v3255, %v3258
        %v3261 = vshrl.u32 %v2716, 16
        %v3263 = vrot.slane %v3261, 3
        %v3264 = vshll.u32 %v2716, 16
        %v3266 = vrot.slane %v3264, 4
        %v3267 = vor.u32 %v3263, %v3266
        %v3268 = vsel %vm2957, %v3259, %v3267
        %v3270 = vshrl.u32 %v2926, 16
        %v3272 = vrot.slane %v3270, 3
        %v3273 = vshll.u32 %v2926, 16
        %v3275 = vrot.slane %v3273, 4
        %v3276 = vor.u32 %v3272, %v3275
        %v3278 = vshrl.u32 %v2925, 16
        %v3280 = vrot.slane %v3278, 3
        %v3281 = vshll.u32 %v2925, 16
        %v3283 = vrot.slane %v3281, 4
        %v3284 = vor.u32 %v3280, %v3283
        %v3285 = vsel %vm2957, %v3276, %v3284
        %v3286 = vrot.slane %v2718, 3
        %v3287 = vrot.slane %v2720, 4
        %v3288 = vor.u32 %v3286, %v3287
        %v3289 = vrot.slane %v2729, 3
        %v3290 = vrot.slane %v2725, 4
        %v3291 = vor.u32 %v3289, %v3290
        %v3292 = vsel %vm2957, %v3288, %v3291
        %v3294 = vshrl.u32 %v2728, 16
        %v3296 = vrot.slane %v3294, 3
        %v3297 = vshll.u32 %v2728, 16
        %v3299 = vrot.slane %v3297, 4
        %v3300 = vor.u32 %v3296, %v3299
        %v3302 = vshrl.u32 %v2731, 16
        %v3304 = vrot.slane %v3302, 3
        %v3305 = vshll.u32 %v2731, 16
        %v3307 = vrot.slane %v3305, 4
        %v3308 = vor.u32 %v3304, %v3307
        %v3309 = vsel %vm2957, %v3300, %v3308
        %v3311 = vshrl.u32 %v2929, 16
        %v3313 = vrot.slane %v3311, 3
        %v3314 = vshll.u32 %v2929, 16
        %v3316 = vrot.slane %v3314, 4
        %v3317 = vor.u32 %v3313, %v3316
        %v3319 = vshrl.u32 %v2928, 16
        %v3321 = vrot.slane %v3319, 3
        %v3322 = vshll.u32 %v2928, 16
        %v3324 = vrot.slane %v3322, 4
        %v3325 = vor.u32 %v3321, %v3324
        %v3326 = vsel %vm2957, %v3317, %v3325
        %v3327 = vrot.slane %v2733, 3
        %v3328 = vrot.slane %v2735, 4
        %v3329 = vor.u32 %v3327, %v3328
        %v3330 = vrot.slane %v2744, 3
        %v3331 = vrot.slane %v2740, 4
        %v3332 = vor.u32 %v3330, %v3331
        %v3333 = vsel %vm2957, %v3329, %v3332
        %v3335 = vshrl.u32 %v2743, 16
        %v3337 = vrot.slane %v3335, 3
        %v3338 = vshll.u32 %v2743, 16
        %v3340 = vrot.slane %v3338, 4
        %v3341 = vor.u32 %v3337, %v3340
        %v3343 = vshrl.u32 %v2746, 16
        %v3345 = vrot.slane %v3343, 3
        %v3346 = vshll.u32 %v2746, 16
        %v3348 = vrot.slane %v3346, 4
        %v3349 = vor.u32 %v3345, %v3348
        %v3350 = vsel %vm2957, %v3341, %v3349
        %v3352 = vshrl.u32 %v2932, 16
        %v3354 = vrot.slane %v3352, 3
        %v3355 = vshll.u32 %v2932, 16
        %v3357 = vrot.slane %v3355, 4
        %v3358 = vor.u32 %v3354, %v3357
        %v3360 = vshrl.u32 %v2931, 16
        %v3362 = vrot.slane %v3360, 3
        %v3363 = vshll.u32 %v2931, 16
        %v3365 = vrot.slane %v3363, 4
        %v3366 = vor.u32 %v3362, %v3365
        %v3367 = vsel %vm2957, %v3358, %v3366
        %v3368 = vrot.slane %v2748, 3
        %v3369 = vrot.slane %v2750, 4
        %v3370 = vor.u32 %v3368, %v3369
        %v3371 = vrot.slane %v2759, 3
        %v3372 = vrot.slane %v2755, 4
        %v3373 = vor.u32 %v3371, %v3372
        %v3374 = vsel %vm2957, %v3370, %v3373
        %v3376 = vshrl.u32 %v2758, 16
        %v3378 = vrot.slane %v3376, 3
        %v3379 = vshll.u32 %v2758, 16
        %v3381 = vrot.slane %v3379, 4
        %v3382 = vor.u32 %v3378, %v3381
        %v3384 = vshrl.u32 %v2761, 16
        %v3386 = vrot.slane %v3384, 3
        %v3387 = vshll.u32 %v2761, 16
        %v3389 = vrot.slane %v3387, 4
        %v3390 = vor.u32 %v3386, %v3389
        %v3391 = vsel %vm2957, %v3382, %v3390
        %v3393 = vshrl.u32 %v2935, 16
        %v3395 = vrot.slane %v3393, 3
        %v3396 = vshll.u32 %v2935, 16
        %v3398 = vrot.slane %v3396, 4
        %v3399 = vor.u32 %v3395, %v3398
        %v3401 = vshrl.u32 %v2934, 16
        %v3403 = vrot.slane %v3401, 3
        %v3404 = vshll.u32 %v2934, 16
        %v3406 = vrot.slane %v3404, 4
        %v3407 = vor.u32 %v3403, %v3406
        %v3408 = vsel %vm2957, %v3399, %v3407
        %v3409 = vrot.slane %v2763, 3
        %v3410 = vrot.slane %v2765, 4
        %v3411 = vor.u32 %v3409, %v3410
        %v3412 = vrot.slane %v2774, 3
        %v3413 = vrot.slane %v2770, 4
        %v3414 = vor.u32 %v3412, %v3413
        %v3415 = vsel %vm2957, %v3411, %v3414
        %v3417 = vshrl.u32 %v2773, 16
        %v3419 = vrot.slane %v3417, 3
        %v3420 = vshll.u32 %v2773, 16
        %v3422 = vrot.slane %v3420, 4
        %v3423 = vor.u32 %v3419, %v3422
        %v3425 = vshrl.u32 %v2776, 16
        %v3427 = vrot.slane %v3425, 3
        %v3428 = vshll.u32 %v2776, 16
        %v3430 = vrot.slane %v3428, 4
        %v3431 = vor.u32 %v3427, %v3430
        %v3432 = vsel %vm2957, %v3423, %v3431
        %v3434 = vshrl.u32 %v2938, 16
        %v3436 = vrot.slane %v3434, 3
        %v3437 = vshll.u32 %v2938, 16
        %v3439 = vrot.slane %v3437, 4
        %v3440 = vor.u32 %v3436, %v3439
        %v3442 = vshrl.u32 %v2937, 16
        %v3444 = vrot.slane %v3442, 3
        %v3445 = vshll.u32 %v2937, 16
        %v3447 = vrot.slane %v3445, 4
        %v3448 = vor.u32 %v3444, %v3447
        %v3449 = vsel %vm2957, %v3440, %v3448
        %v3450 = vrot.slane %v2778, 3
        %v3451 = vrot.slane %v2780, 4
        %v3452 = vor.u32 %v3450, %v3451
        %v3453 = vrot.slane %v2789, 3
        %v3454 = vrot.slane %v2785, 4
        %v3455 = vor.u32 %v3453, %v3454
        %v3456 = vsel %vm2957, %v3452, %v3455
        %v3458 = vshrl.u32 %v2788, 16
        %v3460 = vrot.slane %v3458, 3
        %v3461 = vshll.u32 %v2788, 16
        %v3463 = vrot.slane %v3461, 4
        %v3464 = vor.u32 %v3460, %v3463
        %v3466 = vshrl.u32 %v2791, 16
        %v3468 = vrot.slane %v3466, 3
        %v3469 = vshll.u32 %v2791, 16
        %v3471 = vrot.slane %v3469, 4
        %v3472 = vor.u32 %v3468, %v3471
        %v3473 = vsel %vm2957, %v3464, %v3472
        %v3475 = vshrl.u32 %v2941, 16
        %v3477 = vrot.slane %v3475, 3
        %v3478 = vshll.u32 %v2941, 16
        %v3480 = vrot.slane %v3478, 4
        %v3481 = vor.u32 %v3477, %v3480
        %v3483 = vshrl.u32 %v2940, 16
        %v3485 = vrot.slane %v3483, 3
        %v3486 = vshll.u32 %v2940, 16
        %v3488 = vrot.slane %v3486, 4
        %v3489 = vor.u32 %v3485, %v3488
        %v3490 = vsel %vm2957, %v3481, %v3489
        %v3491 = vrot.slane %v2793, 3
        %v3492 = vrot.slane %v2795, 4
        %v3493 = vor.u32 %v3491, %v3492
        %v3494 = vrot.slane %v2804, 3
        %v3495 = vrot.slane %v2800, 4
        %v3496 = vor.u32 %v3494, %v3495
        %v3497 = vsel %vm2957, %v3493, %v3496
        %v3499 = vshrl.u32 %v2803, 16
        %v3501 = vrot.slane %v3499, 3
        %v3502 = vshll.u32 %v2803, 16
        %v3504 = vrot.slane %v3502, 4
        %v3505 = vor.u32 %v3501, %v3504
        %v3507 = vshrl.u32 %v2806, 16
        %v3509 = vrot.slane %v3507, 3
        %v3510 = vshll.u32 %v2806, 16
        %v3512 = vrot.slane %v3510, 4
        %v3513 = vor.u32 %v3509, %v3512
        %v3514 = vsel %vm2957, %v3505, %v3513
        %v3516 = vshrl.u32 %v2944, 16
        %v3518 = vrot.slane %v3516, 3
        %v3519 = vshll.u32 %v2944, 16
        %v3521 = vrot.slane %v3519, 4
        %v3522 = vor.u32 %v3518, %v3521
        %v3524 = vshrl.u32 %v2943, 16
        %v3526 = vrot.slane %v3524, 3
        %v3527 = vshll.u32 %v2943, 16
        %v3529 = vrot.slane %v3527, 4
        %v3530 = vor.u32 %v3526, %v3529
        %v3531 = vsel %vm2957, %v3522, %v3530
        %v3532 = vrot.slane %v2808, 3
        %v3533 = vrot.slane %v2810, 4
        %v3534 = vor.u32 %v3532, %v3533
        %v3535 = vrot.slane %v2819, 3
        %v3536 = vrot.slane %v2815, 4
        %v3537 = vor.u32 %v3535, %v3536
        %v3538 = vsel %vm2957, %v3534, %v3537
        %v3540 = vshrl.u32 %v2818, 16
        %v3542 = vrot.slane %v3540, 3
        %v3543 = vshll.u32 %v2818, 16
        %v3545 = vrot.slane %v3543, 4
        %v3546 = vor.u32 %v3542, %v3545
        %v3548 = vshrl.u32 %v2821, 16
        %v3550 = vrot.slane %v3548, 3
        %v3551 = vshll.u32 %v2821, 16
        %v3553 = vrot.slane %v3551, 4
        %v3554 = vor.u32 %v3550, %v3553
        %v3555 = vsel %vm2957, %v3546, %v3554
        %v3557 = vshrl.u32 %v2947, 16
        %v3559 = vrot.slane %v3557, 3
        %v3560 = vshll.u32 %v2947, 16
        %v3562 = vrot.slane %v3560, 4
        %v3563 = vor.u32 %v3559, %v3562
        %v3565 = vshrl.u32 %v2946, 16
        %v3567 = vrot.slane %v3565, 3
        %v3568 = vshll.u32 %v2946, 16
        %v3570 = vrot.slane %v3568, 4
        %v3571 = vor.u32 %v3567, %v3570
        %v3572 = vsel %vm2957, %v3563, %v3571
        %v3573 = vrot.slane %v2823, 3
        %v3574 = vrot.slane %v2825, 4
        %v3575 = vor.u32 %v3573, %v3574
        %v3576 = vrot.slane %v2834, 3
        %v3577 = vrot.slane %v2830, 4
        %v3578 = vor.u32 %v3576, %v3577
        %v3579 = vsel %vm2957, %v3575, %v3578
        %v3581 = vshrl.u32 %v2833, 16
        %v3583 = vrot.slane %v3581, 3
        %v3584 = vshll.u32 %v2833, 16
        %v3586 = vrot.slane %v3584, 4
        %v3587 = vor.u32 %v3583, %v3586
        %v3589 = vshrl.u32 %v2836, 16
        %v3591 = vrot.slane %v3589, 3
        %v3592 = vshll.u32 %v2836, 16
        %v3594 = vrot.slane %v3592, 4
        %v3595 = vor.u32 %v3591, %v3594
        %v3596 = vsel %vm2957, %v3587, %v3595
        %v3598 = vshrl.u32 %v2950, 16
        %v3600 = vrot.slane %v3598, 3
        %v3601 = vshll.u32 %v2950, 16
        %v3603 = vrot.slane %v3601, 4
        %v3604 = vor.u32 %v3600, %v3603
        %v3606 = vshrl.u32 %v2949, 16
        %v3608 = vrot.slane %v3606, 3
        %v3609 = vshll.u32 %v2949, 16
        %v3611 = vrot.slane %v3609, 4
        %v3612 = vor.u32 %v3608, %v3611
        %v3613 = vsel %vm2957, %v3604, %v3612
        %v3662 = vld [vmem:[#allocation8] sm:$0xf]
        %v3663 = vld [vmem:[#allocation8 + $0x4] sm:$0xf]
        %v3664 = vld [vmem:[#allocation8 + $0x8] sm:$0xf]
        %v3665 = vld [vmem:[#allocation8 + $0xc] sm:$0xf]
        %v3666 = vld [vmem:[#allocation8 + $0x10] sm:$0xf]
        %v3667 = vld [vmem:[#allocation8 + $0x14] sm:$0xf]
        %v3668 = vld [vmem:[#allocation8 + $0x18] sm:$0xf]
        %v3669 = vld [vmem:[#allocation8 + $0x1c] sm:$0xf]
        %v3670 = vld [vmem:[#allocation8 + $0x20] sm:$0xf]
        %v3671 = vld [vmem:[#allocation8 + $0x24] sm:$0xf]
        %v3672 = vld [vmem:[#allocation8 + $0x28] sm:$0xf]
        %v3673 = vld [vmem:[#allocation8 + $0x2c] sm:$0xf]
        %v3674 = vld [vmem:[#allocation8 + $0x30] sm:$0xf]
        %v3675 = vld [vmem:[#allocation8 + $0x34] sm:$0xf]
        %v3676 = vld [vmem:[#allocation8 + $0x38] sm:$0xf]
        %v3677 = vld [vmem:[#allocation8 + $0x3c] sm:$0xf]
        %v3678 = vld [vmem:[#allocation8 + $0x40] sm:$0xf]
        %v3679 = vld [vmem:[#allocation8 + $0x44] sm:$0xf]
        %v3680 = vld [vmem:[#allocation8 + $0x48] sm:$0xf]
        %v3681 = vld [vmem:[#allocation8 + $0x4c] sm:$0xf]
        %v3682 = vld [vmem:[#allocation8 + $0x50] sm:$0xf]
        %v3683 = vld [vmem:[#allocation8 + $0x54] sm:$0xf]
        %v3684 = vld [vmem:[#allocation8 + $0x58] sm:$0xf]
        %v3685 = vld [vmem:[#allocation8 + $0x5c] sm:$0xf]
        %v3686 = vld [vmem:[#allocation8 + $0x60] sm:$0xf]
        %v3687 = vld [vmem:[#allocation8 + $0x64] sm:$0xf]
        %v3688 = vld [vmem:[#allocation8 + $0x68] sm:$0xf]
        %v3689 = vld [vmem:[#allocation8 + $0x6c] sm:$0xf]
        %v3690 = vld [vmem:[#allocation8 + $0x70] sm:$0xf]
        %v3691 = vld [vmem:[#allocation8 + $0x74] sm:$0xf]
        %v3692 = vld [vmem:[#allocation8 + $0x78] sm:$0xf]
        %v3693 = vld [vmem:[#allocation8 + $0x7c] sm:$0xf]
        %v3694 = vld [vmem:[#allocation8 + $0x80] sm:$0xf]
        %v3695 = vld [vmem:[#allocation8 + $0x84] sm:$0xf]
        %v3696 = vld [vmem:[#allocation8 + $0x88] sm:$0xf]
        %v3697 = vld [vmem:[#allocation8 + $0x8c] sm:$0xf]
        %v3698 = vld [vmem:[#allocation8 + $0x90] sm:$0xf]
        %v3699 = vld [vmem:[#allocation8 + $0x94] sm:$0xf]
        %v3700 = vld [vmem:[#allocation8 + $0x98] sm:$0xf]
        %v3701 = vld [vmem:[#allocation8 + $0x9c] sm:$0xf]
        %v3702 = vld [vmem:[#allocation8 + $0xa0] sm:$0xf]
        %v3703 = vld [vmem:[#allocation8 + $0xa4] sm:$0xf]
        %v3704 = vld [vmem:[#allocation8 + $0xa8] sm:$0xf]
        %v3705 = vld [vmem:[#allocation8 + $0xac] sm:$0xf]
        %v3706 = vld [vmem:[#allocation8 + $0xb0] sm:$0xf]
        %v3707 = vld [vmem:[#allocation8 + $0xb4] sm:$0xf]
        %v3708 = vld [vmem:[#allocation8 + $0xb8] sm:$0xf]
        %v3709 = vld [vmem:[#allocation8 + $0xbc] sm:$0xf]
        %v3710 = vrot.slane %v2838, 3
        %v3711 = vrot.slane %v2840, 4
        %v3712 = vor.u32 %v3710, %v3711
        %v3713 = vrot.slane %v2849, 3
        %v3714 = vrot.slane %v2845, 4
        %v3715 = vor.u32 %v3713, %v3714
        %v3716 = vsel %vm2957, %v3712, %v3715
        %v3718 = vshrl.u32 %v2848, 16
        %v3720 = vrot.slane %v3718, 3
        %v3721 = vshll.u32 %v2848, 16
        %v3723 = vrot.slane %v3721, 4
        %v3724 = vor.u32 %v3720, %v3723
        %v3726 = vshrl.u32 %v2851, 16
        %v3728 = vrot.slane %v3726, 3
        %v3729 = vshll.u32 %v2851, 16
        %v3731 = vrot.slane %v3729, 4
        %v3732 = vor.u32 %v3728, %v3731
        %v3733 = vsel %vm2957, %v3724, %v3732
        %v3735 = vshrl.u32 %v2953, 16
        %v3737 = vrot.slane %v3735, 3
        %v3738 = vshll.u32 %v2953, 16
        %v3740 = vrot.slane %v3738, 4
        %v3741 = vor.u32 %v3737, %v3740
        %v3743 = vshrl.u32 %v2952, 16
        %v3745 = vrot.slane %v3743, 3
        %v3746 = vshll.u32 %v2952, 16
        %v3748 = vrot.slane %v3746, 4
        %v3749 = vor.u32 %v3745, %v3748
        %v3750 = vsel %vm2957, %v3741, %v3749
        %s3754 = scalar_lea.vmem [#allocation8], 192
        %v3755 = vld [vmem:[%s3754] sm:$0xf]
        %v3756 = vld [vmem:[%s3754 + $0x4] sm:$0xf]
        %v3757 = vld [vmem:[%s3754 + $0x8] sm:$0xf]
        %v3758 = vld [vmem:[%s3754 + $0xc] sm:$0xf]
        %v3759 = vld [vmem:[%s3754 + $0x10] sm:$0xf]
        %v3760 = vld [vmem:[%s3754 + $0x14] sm:$0xf]
        %v3761 = vld [vmem:[%s3754 + $0x18] sm:$0xf]
        %v3762 = vld [vmem:[%s3754 + $0x1c] sm:$0xf]
        %v3763 = vld [vmem:[%s3754 + $0x20] sm:$0xf]
        %v3764 = vld [vmem:[%s3754 + $0x24] sm:$0xf]
        %v3765 = vld [vmem:[%s3754 + $0x28] sm:$0xf]
        %v3766 = vld [vmem:[%s3754 + $0x2c] sm:$0xf]
        %v3767 = vld [vmem:[%s3754 + $0x30] sm:$0xf]
        %v3768 = vld [vmem:[%s3754 + $0x34] sm:$0xf]
        %v3769 = vld [vmem:[%s3754 + $0x38] sm:$0xf]
        %v3770 = vld [vmem:[%s3754 + $0x3c] sm:$0xf]
        %v3771 = vld [vmem:[%s3754 + $0x40] sm:$0xf]
        %v3772 = vld [vmem:[%s3754 + $0x44] sm:$0xf]
        %v3773 = vld [vmem:[%s3754 + $0x48] sm:$0xf]
        %v3774 = vld [vmem:[%s3754 + $0x4c] sm:$0xf]
        %v3775 = vld [vmem:[%s3754 + $0x50] sm:$0xf]
        %v3776 = vld [vmem:[%s3754 + $0x54] sm:$0xf]
        %v3777 = vld [vmem:[%s3754 + $0x58] sm:$0xf]
        %v3778 = vld [vmem:[%s3754 + $0x5c] sm:$0xf]
        %v3779 = vld [vmem:[%s3754 + $0x60] sm:$0xf]
        %v3780 = vld [vmem:[%s3754 + $0x64] sm:$0xf]
        %v3781 = vld [vmem:[%s3754 + $0x68] sm:$0xf]
        %v3782 = vld [vmem:[%s3754 + $0x6c] sm:$0xf]
        %v3783 = vld [vmem:[%s3754 + $0x70] sm:$0xf]
        %v3784 = vld [vmem:[%s3754 + $0x74] sm:$0xf]
        %v3785 = vld [vmem:[%s3754 + $0x78] sm:$0xf]
        %v3786 = vld [vmem:[%s3754 + $0x7c] sm:$0xf]
        %v3787 = vld [vmem:[%s3754 + $0x80] sm:$0xf]
        %v3788 = vld [vmem:[%s3754 + $0x84] sm:$0xf]
        %v3789 = vld [vmem:[%s3754 + $0x88] sm:$0xf]
        %v3790 = vld [vmem:[%s3754 + $0x8c] sm:$0xf]
        %v3791 = vld [vmem:[%s3754 + $0x90] sm:$0xf]
        %v3792 = vld [vmem:[%s3754 + $0x94] sm:$0xf]
        %v3793 = vld [vmem:[%s3754 + $0x98] sm:$0xf]
        %v3794 = vld [vmem:[%s3754 + $0x9c] sm:$0xf]
        %v3795 = vld [vmem:[%s3754 + $0xa0] sm:$0xf]
        %v3796 = vld [vmem:[%s3754 + $0xa4] sm:$0xf]
        %v3797 = vld [vmem:[%s3754 + $0xa8] sm:$0xf]
        %v3798 = vld [vmem:[%s3754 + $0xac] sm:$0xf]
        %v3799 = vld [vmem:[%s3754 + $0xb0] sm:$0xf]
        %v3800 = vld [vmem:[%s3754 + $0xb4] sm:$0xf]
        %v3801 = vld [vmem:[%s3754 + $0xb8] sm:$0xf]
        %v3802 = vld [vmem:[%s3754 + $0xbc] sm:$0xf]
        %v3851 = vunpack.c.l.b16 %v3755
        %v3852 = vunpack.c.l.b16 %v3756
        %v3853 = vunpack.c.l.b16 %v3757
        %v3854 = vunpack.c.l.b16 %v3758
        %v3855 = vunpack.c.l.b16 %v3759
        %v3856 = vunpack.c.l.b16 %v3760
        %v3857 = vunpack.c.l.b16 %v3761
        %v3858 = vunpack.c.l.b16 %v3762
        %v3859 = vunpack.c.l.b16 %v3763
        %v3860 = vunpack.c.l.b16 %v3764
        %v3861 = vunpack.c.l.b16 %v3765
        %v3862 = vunpack.c.l.b16 %v3766
        %v3863 = vunpack.c.l.b16 %v3767
        %v3864 = vunpack.c.l.b16 %v3768
        %v3865 = vunpack.c.l.b16 %v3769
        %v3866 = vunpack.c.l.b16 %v3770
        %v3867 = vunpack.c.l.b16 %v3771
        %v3868 = vunpack.c.l.b16 %v3772
        %v3869 = vunpack.c.l.b16 %v3773
        %v3870 = vunpack.c.l.b16 %v3774
        %v3871 = vunpack.c.l.b16 %v3775
        %v3872 = vunpack.c.l.b16 %v3776
        %v3873 = vunpack.c.l.b16 %v3777
        %v3874 = vunpack.c.l.b16 %v3778
        %v3875 = vunpack.c.l.b16 %v3779
        %v3876 = vunpack.c.l.b16 %v3780
        %v3877 = vunpack.c.l.b16 %v3781
        %v3878 = vunpack.c.l.b16 %v3782
        %v3879 = vunpack.c.l.b16 %v3783
        %v3880 = vunpack.c.l.b16 %v3784
        %v3881 = vunpack.c.l.b16 %v3785
        %v3882 = vunpack.c.l.b16 %v3786
        %v3883 = vunpack.c.l.b16 %v3787
        %v3884 = vunpack.c.l.b16 %v3788
        %v3885 = vunpack.c.l.b16 %v3789
        %v3886 = vunpack.c.l.b16 %v3790
        %v3887 = vunpack.c.l.b16 %v3791
        %v3888 = vunpack.c.l.b16 %v3792
        %v3889 = vunpack.c.l.b16 %v3793
        %v3890 = vunpack.c.l.b16 %v3794
        %v3891 = vunpack.c.l.b16 %v3795
        %v3892 = vunpack.c.l.b16 %v3796
        %v3893 = vunpack.c.l.b16 %v3797
        %v3894 = vunpack.c.l.b16 %v3798
        %v3895 = vunpack.c.l.b16 %v3799
        %v3896 = vunpack.c.l.b16 %v3800
        %v3897 = vunpack.c.l.b16 %v3801
        %v3898 = vunpack.c.l.b16 %v3802
        %v3899 = vpack.c.b16 %v3852, %v3851
        %v3900 = vpack.c.b16 %v3854, %v3853
        %v3901 = vpack.c.b16 %v3856, %v3855
        %v3902 = vpack.c.b16 %v3858, %v3857
        %v3903 = vpack.c.b16 %v3860, %v3859
        %v3904 = vpack.c.b16 %v3862, %v3861
        %v3905 = vpack.c.b16 %v3864, %v3863
        %v3906 = vpack.c.b16 %v3866, %v3865
        %v3907 = vpack.c.b16 %v3868, %v3867
        %v3908 = vpack.c.b16 %v3870, %v3869
        %v3909 = vpack.c.b16 %v3872, %v3871
        %v3910 = vpack.c.b16 %v3874, %v3873
        %v3911 = vpack.c.b16 %v3876, %v3875
        %v3912 = vpack.c.b16 %v3878, %v3877
        %v3913 = vpack.c.b16 %v3880, %v3879
        %v3914 = vpack.c.b16 %v3882, %v3881
        %v3915 = vpack.c.b16 %v3884, %v3883
        %v3916 = vpack.c.b16 %v3886, %v3885
        %v3917 = vpack.c.b16 %v3888, %v3887
        %v3918 = vpack.c.b16 %v3890, %v3889
        %v3919 = vpack.c.b16 %v3892, %v3891
        %v3920 = vpack.c.b16 %v3894, %v3893
        %v3921 = vpack.c.b16 %v3896, %v3895
        %v3922 = vpack.c.b16 %v3898, %v3897
        %3947 = vmatprep.subr.bf16.mxu0 0
        %3948 = vmatpush1.bf16.msra.mxu0 %v3899
        %3949 = vmatprep.subr.bf16.mxu0 0
        %3950 = vmatpush1.bf16.msra.mxu0 %v3900
        %3951 = vmatprep.subr.bf16.mxu0 0
        %3952 = vmatpush1.bf16.msra.mxu0 %v3901
        %3953 = vmatprep.subr.bf16.mxu0 0
        %3954 = vmatpush1.bf16.msra.mxu0 %v3902
        %3955 = vmatprep.subr.bf16.mxu0 0
        %3956 = vmatpush1.bf16.msra.mxu0 %v3903
        %3957 = vmatprep.subr.bf16.mxu0 0
        %3958 = vmatpush1.bf16.msra.mxu0 %v3904
        %3959 = vmatprep.subr.bf16.mxu0 0
        %3960 = vmatpush1.bf16.msra.mxu0 %v3905
        %3961 = vmatprep.subr.bf16.mxu0 0
        %3962 = vmatpush1.bf16.msra.mxu0 %v3906
        %3963 = vmatprep.subr.bf16.mxu0 0
        %3964 = vmatpush1.bf16.msra.mxu0 %v3907
        %3965 = vmatprep.subr.bf16.mxu0 0
        %3966 = vmatpush1.bf16.msra.mxu0 %v3908
        %3967 = vmatprep.subr.bf16.mxu0 0
        %3968 = vmatpush1.bf16.msra.mxu0 %v3909
        %3969 = vmatprep.subr.bf16.mxu0 0
        %3970 = vmatpush1.bf16.msra.mxu0 %v3910
        %3971 = vmatprep.subr.bf16.mxu0 0
        %3972 = vmatpush1.bf16.msra.mxu0 %v3911
        %3973 = vmatprep.subr.bf16.mxu0 0
        %3974 = vmatpush1.bf16.msra.mxu0 %v3912
        %3975 = vmatprep.subr.bf16.mxu0 0
        %3976 = vmatpush1.bf16.msra.mxu0 %v3913
        %3977 = vmatprep.subr.bf16.mxu0 0
        %3978 = vmatpush1.bf16.msra.mxu0 %v3914
        %3979 = vmatprep.mubr.bf16.mxu0 %v3022
        %3980 = vmatmul.mubr.bf16.gmra.mrb[0].mxu0 %v3005
        %v3981 = vpop.f32.mrb[0].mxu0
        %v3982 = vadd.f32 0.0, %v3981
        %v3983 = vpop.f32.mrb[0].mxu0
        %v3984 = vpop.f32.mrb[0].mxu0
        %v3985 = vadd.f32 0.0, %v3984
        %v3986 = vpop.f32.mrb[0].mxu0
        %3987 = vmatprep.mubr.bf16.mxu0 %v3063
        %3988 = vmatmul.mubr.bf16.gmra.mrb[0].mxu0 %v3046
        %v3989 = vpop.f32.mrb[0].mxu0
        %v3990 = vadd.f32 0.0, %v3989
        %v3991 = vpop.f32.mrb[0].mxu0
        %v3992 = vpop.f32.mrb[0].mxu0
        %v3993 = vadd.f32 0.0, %v3992
        %v3994 = vpop.f32.mrb[0].mxu0
        %3995 = vmatprep.mubr.bf16.mxu0 %v3104
        %3996 = vmatmul.mubr.bf16.gmra.mrb[0].mxu0 %v3087
        %v3997 = vpop.f32.mrb[0].mxu0
        %v3998 = vadd.f32 0.0, %v3997
        %v3999 = vpop.f32.mrb[0].mxu0
        %v4000 = vpop.f32.mrb[0].mxu0
        %v4001 = vadd.f32 0.0, %v4000
        %v4002 = vpop.f32.mrb[0].mxu0
        %4003 = vmatprep.mubr.bf16.mxu0 %v3145
        %4004 = vmatmul.mubr.bf16.gmra.mrb[0].mxu0 %v3128
        %v4005 = vpop.f32.mrb[0].mxu0
        %v4006 = vadd.f32 0.0, %v4005
        %v4007 = vpop.f32.mrb[0].mxu0
        %v4008 = vpop.f32.mrb[0].mxu0
        %v4009 = vadd.f32 0.0, %v4008
        %v4010 = vpop.f32.mrb[0].mxu0
        %4011 = vmatprep.mubr.bf16.mxu0 %v3186
        %4012 = vmatmul.mubr.bf16.gmra.mrb[0].mxu0 %v3169
        %v4013 = vpop.f32.mrb[0].mxu0
        %v4014 = vadd.f32 0.0, %v4013
        %v4015 = vpop.f32.mrb[0].mxu0
        %v4016 = vpop.f32.mrb[0].mxu0
        %v4017 = vadd.f32 0.0, %v4016
        %v4018 = vpop.f32.mrb[0].mxu0
        %4019 = vmatprep.mubr.bf16.mxu0 %v3227
        %4020 = vmatmul.mubr.bf16.gmra.mrb[0].mxu0 %v3210
        %v4021 = vpop.f32.mrb[0].mxu0
        %v4022 = vadd.f32 0.0, %v4021
        %v4023 = vpop.f32.mrb[0].mxu0
        %v4024 = vpop.f32.mrb[0].mxu0
        %v4025 = vadd.f32 0.0, %v4024
        %v4026 = vpop.f32.mrb[0].mxu0
        %4027 = vmatprep.mubr.bf16.mxu0 %v3268
        %4028 = vmatmul.mubr.bf16.gmra.mrb[0].mxu0 %v3251
        %v4029 = vpop.f32.mrb[0].mxu0
        %v4030 = vadd.f32 0.0, %v4029
        %v4031 = vpop.f32.mrb[0].mxu0
        %v4032 = vpop.f32.mrb[0].mxu0
        %v4033 = vadd.f32 0.0, %v4032
        %v4034 = vpop.f32.mrb[0].mxu0
        %4035 = vmatprep.mubr.bf16.mxu0 %v3309
        %4036 = vmatmul.mubr.bf16.gmra.mrb[0].mxu0 %v3292
        %v4037 = vpop.f32.mrb[0].mxu0
        %v4038 = vadd.f32 0.0, %v4037
        %v4039 = vpop.f32.mrb[0].mxu0
        %v4040 = vpop.f32.mrb[0].mxu0
        %v4041 = vadd.f32 0.0, %v4040
        %v4042 = vpop.f32.mrb[0].mxu0
        %4043 = vmatprep.mubr.bf16.mxu0 %v3350
        %4044 = vmatmul.mubr.bf16.gmra.mrb[0].mxu0 %v3333
        %v4045 = vpop.f32.mrb[0].mxu0
        %v4046 = vadd.f32 0.0, %v4045
        %v4047 = vpop.f32.mrb[0].mxu0
        %v4048 = vpop.f32.mrb[0].mxu0
        %v4049 = vadd.f32 0.0, %v4048
        %v4050 = vpop.f32.mrb[0].mxu0
        %4051 = vmatprep.mubr.bf16.mxu0 %v3391
        %4052 = vmatmul.mubr.bf16.gmra.mrb[0].mxu0 %v3374
        %v4053 = vpop.f32.mrb[0].mxu0
        %v4054 = vadd.f32 0.0, %v4053
        %v4055 = vpop.f32.mrb[0].mxu0
        %v4056 = vpop.f32.mrb[0].mxu0
        %v4057 = vadd.f32 0.0, %v4056
        %v4058 = vpop.f32.mrb[0].mxu0
        %4059 = vmatprep.mubr.bf16.mxu0 %v3432
        %4060 = vmatmul.mubr.bf16.gmra.mrb[0].mxu0 %v3415
        %v4061 = vpop.f32.mrb[0].mxu0
        %v4062 = vadd.f32 0.0, %v4061
        %v4063 = vpop.f32.mrb[0].mxu0
        %v4064 = vpop.f32.mrb[0].mxu0
        %v4065 = vadd.f32 0.0, %v4064
        %v4066 = vpop.f32.mrb[0].mxu0
        %4067 = vmatprep.mubr.bf16.mxu0 %v3473
        %4068 = vmatmul.mubr.bf16.gmra.mrb[0].mxu0 %v3456
        %v4069 = vpop.f32.mrb[0].mxu0
        %v4070 = vadd.f32 0.0, %v4069
        %v4071 = vpop.f32.mrb[0].mxu0
        %v4072 = vpop.f32.mrb[0].mxu0
        %v4073 = vadd.f32 0.0, %v4072
        %v4074 = vpop.f32.mrb[0].mxu0
        %4075 = vmatprep.mubr.bf16.mxu0 %v3514
        %4076 = vmatmul.mubr.bf16.gmra.mrb[0].mxu0 %v3497
        %v4077 = vpop.f32.mrb[0].mxu0
        %v4078 = vadd.f32 0.0, %v4077
        %v4079 = vpop.f32.mrb[0].mxu0
        %v4080 = vpop.f32.mrb[0].mxu0
        %v4081 = vadd.f32 0.0, %v4080
        %v4082 = vpop.f32.mrb[0].mxu0
        %4083 = vmatprep.mubr.bf16.mxu0 %v3555
        %4084 = vmatmul.mubr.bf16.gmra.mrb[0].mxu0 %v3538
        %v4085 = vpop.f32.mrb[0].mxu0
        %v4086 = vadd.f32 0.0, %v4085
        %v4087 = vpop.f32.mrb[0].mxu0
        %v4088 = vpop.f32.mrb[0].mxu0
        %v4089 = vadd.f32 0.0, %v4088
        %v4090 = vpop.f32.mrb[0].mxu0
        %4091 = vmatprep.mubr.bf16.mxu0 %v3596
        %4092 = vmatmul.mubr.bf16.gmra.mrb[0].mxu0 %v3579
        %v4093 = vpop.f32.mrb[0].mxu0
        %v4094 = vadd.f32 0.0, %v4093
        %v4095 = vpop.f32.mrb[0].mxu0
        %v4096 = vpop.f32.mrb[0].mxu0
        %v4097 = vadd.f32 0.0, %v4096
        %v4098 = vpop.f32.mrb[0].mxu0
        %4099 = vmatprep.mubr.bf16.mxu0 %v3733
        %4100 = vmatmul.mubr.bf16.gmra.mrb[0].mxu0 %v3716
        %v4101 = vpop.f32.mrb[0].mxu0
        %v4102 = vadd.f32 0.0, %v4101
        %v4103 = vpop.f32.mrb[0].mxu0
        %v4104 = vpop.f32.mrb[0].mxu0
        %v4105 = vadd.f32 0.0, %v4104
        %v4106 = vpop.f32.mrb[0].mxu0
        %4107 = vdwg.mxu0
        %4108 = vmatprep.subr.bf16.mxu0 0
        %4109 = vmatpush1.bf16.msra.mxu0 %v3915
        %4110 = vmatprep.subr.bf16.mxu0 0
        %4111 = vmatpush1.bf16.msra.mxu0 %v3916
        %4112 = vmatprep.subr.bf16.mxu0 0
        %4113 = vmatpush1.bf16.msra.mxu0 %v3917
        %4114 = vmatprep.subr.bf16.mxu0 0
        %4115 = vmatpush1.bf16.msra.mxu0 %v3918
        %4116 = vmatprep.subr.bf16.mxu0 0
        %4117 = vmatpush1.bf16.msra.mxu0 %v3919
        %4118 = vmatprep.subr.bf16.mxu0 0
        %4119 = vmatpush1.bf16.msra.mxu0 %v3920
        %4120 = vmatprep.subr.bf16.mxu0 0
        %4121 = vmatpush1.bf16.msra.mxu0 %v3921
        %4122 = vmatprep.subr.bf16.mxu0 0
        %4123 = vmatpush1.bf16.msra.mxu0 %v3922
        %4124 = vmatprep.subr.bf16.mxu0 0
        %4125 = vmatpush1.bf16.msra.mxu0 0
        %4126 = vmatprep.subr.bf16.mxu0 0
        %4127 = vmatpush1.bf16.msra.mxu0 0
        %4128 = vmatprep.subr.bf16.mxu0 0
        %4129 = vmatpush1.bf16.msra.mxu0 0
        %4130 = vmatprep.subr.bf16.mxu0 0
        %4131 = vmatpush1.bf16.msra.mxu0 0
        %4132 = vmatprep.subr.bf16.mxu0 0
        %4133 = vmatpush1.bf16.msra.mxu0 0
        %4134 = vmatprep.subr.bf16.mxu0 0
        %4135 = vmatpush1.bf16.msra.mxu0 0
        %4136 = vmatprep.subr.bf16.mxu0 0
        %4137 = vmatpush1.bf16.msra.mxu0 0
        %4138 = vmatprep.subr.bf16.mxu0 0
        %4139 = vmatpush1.bf16.msra.mxu0 0
        %4140 = vmatprep.mubr.bf16.mxu0 0
        %4141 = vmatmul.mubr.bf16.gmra.mrb[0].mxu0 %v3039
        %v4142 = vpop.f32.mrb[0].mxu0
        %v4143 = vadd.f32 %v3982, %v4142
        %v4144 = vpop.f32.mrb[0].mxu0
        %v4145 = vpop.f32.mrb[0].mxu0
        %v4146 = vadd.f32 %v3985, %v4145
        %v4147 = vpop.f32.mrb[0].mxu0
        %4148 = vmatprep.mubr.bf16.mxu0 0
        %4149 = vmatmul.mubr.bf16.gmra.mrb[0].mxu0 %v3080
        %v4150 = vpop.f32.mrb[0].mxu0
        %v4151 = vadd.f32 %v3990, %v4150
        %v4152 = vpop.f32.mrb[0].mxu0
        %v4153 = vpop.f32.mrb[0].mxu0
        %v4154 = vadd.f32 %v3993, %v4153
        %v4155 = vpop.f32.mrb[0].mxu0
        %4156 = vmatprep.mubr.bf16.mxu0 0
        %4157 = vmatmul.mubr.bf16.gmra.mrb[0].mxu0 %v3121
        %v4158 = vpop.f32.mrb[0].mxu0
        %v4159 = vadd.f32 %v3998, %v4158
        %v4160 = vpop.f32.mrb[0].mxu0
        %v4161 = vpop.f32.mrb[0].mxu0
        %v4162 = vadd.f32 %v4001, %v4161
        %v4163 = vpop.f32.mrb[0].mxu0
        %4164 = vmatprep.mubr.bf16.mxu0 0
        %4165 = vmatmul.mubr.bf16.gmra.mrb[0].mxu0 %v3162
        %v4166 = vpop.f32.mrb[0].mxu0
        %v4167 = vadd.f32 %v4006, %v4166
        %v4168 = vpop.f32.mrb[0].mxu0
        %v4169 = vpop.f32.mrb[0].mxu0
        %v4170 = vadd.f32 %v4009, %v4169
        %v4171 = vpop.f32.mrb[0].mxu0
        %4172 = vmatprep.mubr.bf16.mxu0 0
        %4173 = vmatmul.mubr.bf16.gmra.mrb[0].mxu0 %v3203
        %v4174 = vpop.f32.mrb[0].mxu0
        %v4175 = vadd.f32 %v4014, %v4174
        %v4176 = vpop.f32.mrb[0].mxu0
        %v4177 = vpop.f32.mrb[0].mxu0
        %v4178 = vadd.f32 %v4017, %v4177
        %v4179 = vpop.f32.mrb[0].mxu0
        %4180 = vmatprep.mubr.bf16.mxu0 0
        %4181 = vmatmul.mubr.bf16.gmra.mrb[0].mxu0 %v3244
        %v4182 = vpop.f32.mrb[0].mxu0
        %v4183 = vadd.f32 %v4022, %v4182
        %v4184 = vpop.f32.mrb[0].mxu0
        %v4185 = vpop.f32.mrb[0].mxu0
        %v4186 = vadd.f32 %v4025, %v4185
        %v4187 = vpop.f32.mrb[0].mxu0
        %4188 = vmatprep.mubr.bf16.mxu0 0
        %4189 = vmatmul.mubr.bf16.gmra.mrb[0].mxu0 %v3285
        %v4190 = vpop.f32.mrb[0].mxu0
        %v4191 = vadd.f32 %v4030, %v4190
        %v4192 = vpop.f32.mrb[0].mxu0
        %v4193 = vpop.f32.mrb[0].mxu0
        %v4194 = vadd.f32 %v4033, %v4193
        %v4195 = vpop.f32.mrb[0].mxu0
        %4196 = vmatprep.mubr.bf16.mxu0 0
        %4197 = vmatmul.mubr.bf16.gmra.mrb[0].mxu0 %v3326
        %v4198 = vpop.f32.mrb[0].mxu0
        %v4199 = vadd.f32 %v4038, %v4198
        %v4200 = vpop.f32.mrb[0].mxu0
        %v4201 = vpop.f32.mrb[0].mxu0
        %v4202 = vadd.f32 %v4041, %v4201
        %v4203 = vpop.f32.mrb[0].mxu0
        %4204 = vmatprep.mubr.bf16.mxu0 0
        %4205 = vmatmul.mubr.bf16.gmra.mrb[0].mxu0 %v3367
        %v4206 = vpop.f32.mrb[0].mxu0
        %v4207 = vadd.f32 %v4046, %v4206
        %v4208 = vpop.f32.mrb[0].mxu0
        %v4209 = vpop.f32.mrb[0].mxu0
        %v4210 = vadd.f32 %v4049, %v4209
        %v4211 = vpop.f32.mrb[0].mxu0
        %4212 = vmatprep.mubr.bf16.mxu0 0
        %4213 = vmatmul.mubr.bf16.gmra.mrb[0].mxu0 %v3408
        %v4214 = vpop.f32.mrb[0].mxu0
        %v4215 = vadd.f32 %v4054, %v4214
        %v4216 = vpop.f32.mrb[0].mxu0
        %v4217 = vpop.f32.mrb[0].mxu0
        %v4218 = vadd.f32 %v4057, %v4217
        %v4219 = vpop.f32.mrb[0].mxu0
        %4220 = vmatprep.mubr.bf16.mxu0 0
        %4221 = vmatmul.mubr.bf16.gmra.mrb[0].mxu0 %v3449
        %v4222 = vpop.f32.mrb[0].mxu0
        %v4223 = vadd.f32 %v4062, %v4222
        %v4224 = vpop.f32.mrb[0].mxu0
        %v4225 = vpop.f32.mrb[0].mxu0
        %v4226 = vadd.f32 %v4065, %v4225
        %v4227 = vpop.f32.mrb[0].mxu0
        %4228 = vmatprep.mubr.bf16.mxu0 0
        %4229 = vmatmul.mubr.bf16.gmra.mrb[0].mxu0 %v3490
        %v4230 = vpop.f32.mrb[0].mxu0
        %v4231 = vadd.f32 %v4070, %v4230
        %v4232 = vpop.f32.mrb[0].mxu0
        %v4233 = vpop.f32.mrb[0].mxu0
        %v4234 = vadd.f32 %v4073, %v4233
        %v4235 = vpop.f32.mrb[0].mxu0
        %4236 = vmatprep.mubr.bf16.mxu0 0
        %4237 = vmatmul.mubr.bf16.gmra.mrb[0].mxu0 %v3531
        %v4238 = vpop.f32.mrb[0].mxu0
        %v4239 = vadd.f32 %v4078, %v4238
        %v4240 = vpop.f32.mrb[0].mxu0
        %v4241 = vpop.f32.mrb[0].mxu0
        %v4242 = vadd.f32 %v4081, %v4241
        %v4243 = vpop.f32.mrb[0].mxu0
        %4244 = vmatprep.mubr.bf16.mxu0 0
        %4245 = vmatmul.mubr.bf16.gmra.mrb[0].mxu0 %v3572
        %v4246 = vpop.f32.mrb[0].mxu0
        %v4247 = vadd.f32 %v4086, %v4246
        %v4248 = vpop.f32.mrb[0].mxu0
        %v4249 = vpop.f32.mrb[0].mxu0
        %v4250 = vadd.f32 %v4089, %v4249
        %v4251 = vpop.f32.mrb[0].mxu0
        %4252 = vmatprep.mubr.bf16.mxu0 0
        %4253 = vmatmul.mubr.bf16.gmra.mrb[0].mxu0 %v3613
        %v4254 = vpop.f32.mrb[0].mxu0
        %v4255 = vadd.f32 %v4094, %v4254
        %v4256 = vpop.f32.mrb[0].mxu0
        %v4257 = vpop.f32.mrb[0].mxu0
        %v4258 = vadd.f32 %v4097, %v4257
        %v4259 = vpop.f32.mrb[0].mxu0
        %4260 = vmatprep.mubr.bf16.mxu0 0
        %4261 = vmatmul.mubr.bf16.gmra.mrb[0].mxu0 %v3750
        %v4262 = vpop.f32.mrb[0].mxu0
        %v4263 = vadd.f32 %v4102, %v4262
        %v4264 = vpop.f32.mrb[0].mxu0
        %v4265 = vpop.f32.mrb[0].mxu0
        %v4266 = vadd.f32 %v4105, %v4265
        %v4267 = vpop.f32.mrb[0].mxu0
        %4268 = vdwg.mxu0
        %v4317 = vunpack.c.l.b16 %v3662
        %v4318 = vunpack.c.l.b16 %v3663
        %v4319 = vunpack.c.l.b16 %v3664
        %v4320 = vunpack.c.l.b16 %v3665
        %v4321 = vunpack.c.l.b16 %v3666
        %v4322 = vunpack.c.l.b16 %v3667
        %v4323 = vunpack.c.l.b16 %v3668
        %v4324 = vunpack.c.l.b16 %v3669
        %v4325 = vunpack.c.l.b16 %v3670
        %v4326 = vunpack.c.l.b16 %v3671
        %v4327 = vunpack.c.l.b16 %v3672
        %v4328 = vunpack.c.l.b16 %v3673
        %v4329 = vunpack.c.l.b16 %v3674
        %v4330 = vunpack.c.l.b16 %v3675
        %v4331 = vunpack.c.l.b16 %v3676
        %v4332 = vunpack.c.l.b16 %v3677
        %v4333 = vunpack.c.l.b16 %v3678
        %v4334 = vunpack.c.l.b16 %v3679
        %v4335 = vunpack.c.l.b16 %v3680
        %v4336 = vunpack.c.l.b16 %v3681
        %v4337 = vunpack.c.l.b16 %v3682
        %v4338 = vunpack.c.l.b16 %v3683
        %v4339 = vunpack.c.l.b16 %v3684
        %v4340 = vunpack.c.l.b16 %v3685
        %v4341 = vunpack.c.l.b16 %v3686
        %v4342 = vunpack.c.l.b16 %v3687
        %v4343 = vunpack.c.l.b16 %v3688
        %v4344 = vunpack.c.l.b16 %v3689
        %v4345 = vunpack.c.l.b16 %v3690
        %v4346 = vunpack.c.l.b16 %v3691
        %v4347 = vunpack.c.l.b16 %v3692
        %v4348 = vunpack.c.l.b16 %v3693
        %v4349 = vunpack.c.l.b16 %v3694
        %v4350 = vunpack.c.l.b16 %v3695
        %v4351 = vunpack.c.l.b16 %v3696
        %v4352 = vunpack.c.l.b16 %v3697
        %v4353 = vunpack.c.l.b16 %v3698
        %v4354 = vunpack.c.l.b16 %v3699
        %v4355 = vunpack.c.l.b16 %v3700
        %v4356 = vunpack.c.l.b16 %v3701
        %v4357 = vunpack.c.l.b16 %v3702
        %v4358 = vunpack.c.l.b16 %v3703
        %v4359 = vunpack.c.l.b16 %v3704
        %v4360 = vunpack.c.l.b16 %v3705
        %v4361 = vunpack.c.l.b16 %v3706
        %v4362 = vunpack.c.l.b16 %v3707
        %v4363 = vunpack.c.l.b16 %v3708
        %v4364 = vunpack.c.l.b16 %v3709
        %v4365 = vpack.c.b16 %v4318, %v4317
        %v4366 = vpack.c.b16 %v4320, %v4319
        %v4367 = vpack.c.b16 %v4322, %v4321
        %v4368 = vpack.c.b16 %v4324, %v4323
        %v4369 = vpack.c.b16 %v4326, %v4325
        %v4370 = vpack.c.b16 %v4328, %v4327
        %v4371 = vpack.c.b16 %v4330, %v4329
        %v4372 = vpack.c.b16 %v4332, %v4331
        %v4373 = vpack.c.b16 %v4334, %v4333
        %v4374 = vpack.c.b16 %v4336, %v4335
        %v4375 = vpack.c.b16 %v4338, %v4337
        %v4376 = vpack.c.b16 %v4340, %v4339
        %v4377 = vpack.c.b16 %v4342, %v4341
        %v4378 = vpack.c.b16 %v4344, %v4343
        %v4379 = vpack.c.b16 %v4346, %v4345
        %v4380 = vpack.c.b16 %v4348, %v4347
        %v4381 = vpack.c.b16 %v4350, %v4349
        %v4382 = vpack.c.b16 %v4352, %v4351
        %v4383 = vpack.c.b16 %v4354, %v4353
        %v4384 = vpack.c.b16 %v4356, %v4355
        %v4385 = vpack.c.b16 %v4358, %v4357
        %v4386 = vpack.c.b16 %v4360, %v4359
        %v4387 = vpack.c.b16 %v4362, %v4361
        %v4388 = vpack.c.b16 %v4364, %v4363
        %4413 = vmatprep.subr.bf16.mxu0 0
        %4414 = vmatpush1.bf16.msra.mxu0 %v4365
        %4415 = vmatprep.subr.bf16.mxu0 0
        %4416 = vmatpush1.bf16.msra.mxu0 %v4366
        %4417 = vmatprep.subr.bf16.mxu0 0
        %4418 = vmatpush1.bf16.msra.mxu0 %v4367
        %4419 = vmatprep.subr.bf16.mxu0 0
        %4420 = vmatpush1.bf16.msra.mxu0 %v4368
        %4421 = vmatprep.subr.bf16.mxu0 0
        %4422 = vmatpush1.bf16.msra.mxu0 %v4369
        %4423 = vmatprep.subr.bf16.mxu0 0
        %4424 = vmatpush1.bf16.msra.mxu0 %v4370
        %4425 = vmatprep.subr.bf16.mxu0 0
        %4426 = vmatpush1.bf16.msra.mxu0 %v4371
        %4427 = vmatprep.subr.bf16.mxu0 0
        %4428 = vmatpush1.bf16.msra.mxu0 %v4372
        %4429 = vmatprep.subr.bf16.mxu0 0
        %4430 = vmatpush1.bf16.msra.mxu0 %v4373
        %4431 = vmatprep.subr.bf16.mxu0 0
        %4432 = vmatpush1.bf16.msra.mxu0 %v4374
        %4433 = vmatprep.subr.bf16.mxu0 0
        %4434 = vmatpush1.bf16.msra.mxu0 %v4375
        %4435 = vmatprep.subr.bf16.mxu0 0
        %4436 = vmatpush1.bf16.msra.mxu0 %v4376
        %4437 = vmatprep.subr.bf16.mxu0 0
        %4438 = vmatpush1.bf16.msra.mxu0 %v4377
        %4439 = vmatprep.subr.bf16.mxu0 0
        %4440 = vmatpush1.bf16.msra.mxu0 %v4378
        %4441 = vmatprep.subr.bf16.mxu0 0
        %4442 = vmatpush1.bf16.msra.mxu0 %v4379
        %4443 = vmatprep.subr.bf16.mxu0 0
        %4444 = vmatpush1.bf16.msra.mxu0 %v4380
        %4445 = vmatprep.mubr.bf16.mxu0 %v2981
        %4446 = vmatmul.mubr.bf16.gmra.mrb[0].mxu0 %v2964
        %v4447 = vpop.f32.mrb[0].mxu0
        %v4448 = vadd.f32 %v4143, %v4447
        %v4449 = vpop.f32.mrb[0].mxu0
        %v4450 = vpop.f32.mrb[0].mxu0
        %v4451 = vadd.f32 %v4146, %v4450
        %v4452 = vpop.f32.mrb[0].mxu0
        %4453 = vmatprep.mubr.bf16.mxu0 %v3022
        %4454 = vmatmul.mubr.bf16.gmra.mrb[0].mxu0 %v3005
        %v4455 = vpop.f32.mrb[0].mxu0
        %v4456 = vadd.f32 %v4151, %v4455
        %v4457 = vpop.f32.mrb[0].mxu0
        %v4458 = vpop.f32.mrb[0].mxu0
        %v4459 = vadd.f32 %v4154, %v4458
        %v4460 = vpop.f32.mrb[0].mxu0
        %4461 = vmatprep.mubr.bf16.mxu0 %v3063
        %4462 = vmatmul.mubr.bf16.gmra.mrb[0].mxu0 %v3046
        %v4463 = vpop.f32.mrb[0].mxu0
        %v4464 = vadd.f32 %v4159, %v4463
        %v4465 = vpop.f32.mrb[0].mxu0
        %v4466 = vpop.f32.mrb[0].mxu0
        %v4467 = vadd.f32 %v4162, %v4466
        %v4468 = vpop.f32.mrb[0].mxu0
        %4469 = vmatprep.mubr.bf16.mxu0 %v3104
        %4470 = vmatmul.mubr.bf16.gmra.mrb[0].mxu0 %v3087
        %v4471 = vpop.f32.mrb[0].mxu0
        %v4472 = vadd.f32 %v4167, %v4471
        %v4473 = vpop.f32.mrb[0].mxu0
        %v4474 = vpop.f32.mrb[0].mxu0
        %v4475 = vadd.f32 %v4170, %v4474
        %v4476 = vpop.f32.mrb[0].mxu0
        %4477 = vmatprep.mubr.bf16.mxu0 %v3145
        %4478 = vmatmul.mubr.bf16.gmra.mrb[0].mxu0 %v3128
        %v4479 = vpop.f32.mrb[0].mxu0
        %v4480 = vadd.f32 %v4175, %v4479
        %v4481 = vpop.f32.mrb[0].mxu0
        %v4482 = vpop.f32.mrb[0].mxu0
        %v4483 = vadd.f32 %v4178, %v4482
        %v4484 = vpop.f32.mrb[0].mxu0
        %4485 = vmatprep.mubr.bf16.mxu0 %v3186
        %4486 = vmatmul.mubr.bf16.gmra.mrb[0].mxu0 %v3169
        %v4487 = vpop.f32.mrb[0].mxu0
        %v4488 = vadd.f32 %v4183, %v4487
        %v4489 = vpop.f32.mrb[0].mxu0
        %v4490 = vpop.f32.mrb[0].mxu0
        %v4491 = vadd.f32 %v4186, %v4490
        %v4492 = vpop.f32.mrb[0].mxu0
        %4493 = vmatprep.mubr.bf16.mxu0 %v3227
        %4494 = vmatmul.mubr.bf16.gmra.mrb[0].mxu0 %v3210
        %v4495 = vpop.f32.mrb[0].mxu0
        %v4496 = vadd.f32 %v4191, %v4495
        %v4497 = vpop.f32.mrb[0].mxu0
        %v4498 = vpop.f32.mrb[0].mxu0
        %v4499 = vadd.f32 %v4194, %v4498
        %v4500 = vpop.f32.mrb[0].mxu0
        %4501 = vmatprep.mubr.bf16.mxu0 %v3268
        %4502 = vmatmul.mubr.bf16.gmra.mrb[0].mxu0 %v3251
        %v4503 = vpop.f32.mrb[0].mxu0
        %v4504 = vadd.f32 %v4199, %v4503
        %v4505 = vpop.f32.mrb[0].mxu0
        %v4506 = vpop.f32.mrb[0].mxu0
        %v4507 = vadd.f32 %v4202, %v4506
        %v4508 = vpop.f32.mrb[0].mxu0
        %4509 = vmatprep.mubr.bf16.mxu0 %v3309
        %4510 = vmatmul.mubr.bf16.gmra.mrb[0].mxu0 %v3292
        %v4511 = vpop.f32.mrb[0].mxu0
        %v4512 = vadd.f32 %v4207, %v4511
        %v4513 = vpop.f32.mrb[0].mxu0
        %v4514 = vpop.f32.mrb[0].mxu0
        %v4515 = vadd.f32 %v4210, %v4514
        %v4516 = vpop.f32.mrb[0].mxu0
        %4517 = vmatprep.mubr.bf16.mxu0 %v3350
        %4518 = vmatmul.mubr.bf16.gmra.mrb[0].mxu0 %v3333
        %v4519 = vpop.f32.mrb[0].mxu0
        %v4520 = vadd.f32 %v4215, %v4519
        %v4521 = vpop.f32.mrb[0].mxu0
        %v4522 = vpop.f32.mrb[0].mxu0
        %v4523 = vadd.f32 %v4218, %v4522
        %v4524 = vpop.f32.mrb[0].mxu0
        %4525 = vmatprep.mubr.bf16.mxu0 %v3391
        %4526 = vmatmul.mubr.bf16.gmra.mrb[0].mxu0 %v3374
        %v4527 = vpop.f32.mrb[0].mxu0
        %v4528 = vadd.f32 %v4223, %v4527
        %v4529 = vpop.f32.mrb[0].mxu0
        %v4530 = vpop.f32.mrb[0].mxu0
        %v4531 = vadd.f32 %v4226, %v4530
        %v4532 = vpop.f32.mrb[0].mxu0
        %4533 = vmatprep.mubr.bf16.mxu0 %v3432
        %4534 = vmatmul.mubr.bf16.gmra.mrb[0].mxu0 %v3415
        %v4535 = vpop.f32.mrb[0].mxu0
        %v4536 = vadd.f32 %v4231, %v4535
        %v4537 = vpop.f32.mrb[0].mxu0
        %v4538 = vpop.f32.mrb[0].mxu0
        %v4539 = vadd.f32 %v4234, %v4538
        %v4540 = vpop.f32.mrb[0].mxu0
        %4541 = vmatprep.mubr.bf16.mxu0 %v3473
        %4542 = vmatmul.mubr.bf16.gmra.mrb[0].mxu0 %v3456
        %v4543 = vpop.f32.mrb[0].mxu0
        %v4544 = vadd.f32 %v4239, %v4543
        %v4545 = vpop.f32.mrb[0].mxu0
        %v4546 = vpop.f32.mrb[0].mxu0
        %v4547 = vadd.f32 %v4242, %v4546
        %v4548 = vpop.f32.mrb[0].mxu0
        %4549 = vmatprep.mubr.bf16.mxu0 %v3514
        %4550 = vmatmul.mubr.bf16.gmra.mrb[0].mxu0 %v3497
        %v4551 = vpop.f32.mrb[0].mxu0
        %v4552 = vadd.f32 %v4247, %v4551
        %v4553 = vpop.f32.mrb[0].mxu0
        %v4554 = vpop.f32.mrb[0].mxu0
        %v4555 = vadd.f32 %v4250, %v4554
        %v4556 = vpop.f32.mrb[0].mxu0
        %4557 = vmatprep.mubr.bf16.mxu0 %v3555
        %4558 = vmatmul.mubr.bf16.gmra.mrb[0].mxu0 %v3538
        %v4559 = vpop.f32.mrb[0].mxu0
        %v4560 = vadd.f32 %v4255, %v4559
        %v4561 = vpop.f32.mrb[0].mxu0
        %v4562 = vpop.f32.mrb[0].mxu0
        %v4563 = vadd.f32 %v4258, %v4562
        %v4564 = vpop.f32.mrb[0].mxu0
        %4565 = vmatprep.mubr.bf16.mxu0 %v3596
        %4566 = vmatmul.mubr.bf16.gmra.mrb[0].mxu0 %v3579
        %v4567 = vpop.f32.mrb[0].mxu0
        %v4568 = vadd.f32 %v4263, %v4567
        %v4569 = vpop.f32.mrb[0].mxu0
        %v4570 = vpop.f32.mrb[0].mxu0
        %v4571 = vadd.f32 %v4266, %v4570
        %v4572 = vpop.f32.mrb[0].mxu0
        %4573 = vdwg.mxu0
        %4574 = vmatprep.subr.bf16.mxu0 0
        %4575 = vmatpush1.bf16.msra.mxu0 %v4381
        %4576 = vmatprep.subr.bf16.mxu0 0
        %4577 = vmatpush1.bf16.msra.mxu0 %v4382
        %4578 = vmatprep.subr.bf16.mxu0 0
        %4579 = vmatpush1.bf16.msra.mxu0 %v4383
        %4580 = vmatprep.subr.bf16.mxu0 0
        %4581 = vmatpush1.bf16.msra.mxu0 %v4384
        %4582 = vmatprep.subr.bf16.mxu0 0
        %4583 = vmatpush1.bf16.msra.mxu0 %v4385
        %4584 = vmatprep.subr.bf16.mxu0 0
        %4585 = vmatpush1.bf16.msra.mxu0 %v4386
        %4586 = vmatprep.subr.bf16.mxu0 0
        %4587 = vmatpush1.bf16.msra.mxu0 %v4387
        %4588 = vmatprep.subr.bf16.mxu0 0
        %4589 = vmatpush1.bf16.msra.mxu0 %v4388
        %4590 = vmatprep.subr.bf16.mxu0 0
        %4591 = vmatpush1.bf16.msra.mxu0 0
        %4592 = vmatprep.subr.bf16.mxu0 0
        %4593 = vmatpush1.bf16.msra.mxu0 0
        %4594 = vmatprep.subr.bf16.mxu0 0
        %4595 = vmatpush1.bf16.msra.mxu0 0
        %4596 = vmatprep.subr.bf16.mxu0 0
        %4597 = vmatpush1.bf16.msra.mxu0 0
        %4598 = vmatprep.subr.bf16.mxu0 0
        %4599 = vmatpush1.bf16.msra.mxu0 0
        %4600 = vmatprep.subr.bf16.mxu0 0
        %4601 = vmatpush1.bf16.msra.mxu0 0
        %4602 = vmatprep.subr.bf16.mxu0 0
        %4603 = vmatpush1.bf16.msra.mxu0 0
        %4604 = vmatprep.subr.bf16.mxu0 0
        %4605 = vmatpush1.bf16.msra.mxu0 0
        %4606 = vmatprep.mubr.bf16.mxu0 0
        %4607 = vmatmul.mubr.bf16.gmra.mrb[0].mxu0 %v2998
        %v4608 = vpop.f32.mrb[0].mxu0
        %v4609 = vadd.f32 %v4448, %v4608
        %v4610 = vpop.f32.mrb[0].mxu0
        %v4611 = vpop.f32.mrb[0].mxu0
        %v4612 = vadd.f32 %v4451, %v4611
        %v4613 = vpop.f32.mrb[0].mxu0
        %4614 = vmatprep.mubr.bf16.mxu0 0
        %4615 = vmatmul.mubr.bf16.gmra.mrb[0].mxu0 %v3039
        %v4616 = vpop.f32.mrb[0].mxu0
        %v4617 = vadd.f32 %v4456, %v4616
        %v4618 = vpop.f32.mrb[0].mxu0
        %v4619 = vpop.f32.mrb[0].mxu0
        %v4620 = vadd.f32 %v4459, %v4619
        %v4621 = vpop.f32.mrb[0].mxu0
        %4622 = vmatprep.mubr.bf16.mxu0 0
        %4623 = vmatmul.mubr.bf16.gmra.mrb[0].mxu0 %v3080
        %v4624 = vpop.f32.mrb[0].mxu0
        %v4625 = vadd.f32 %v4464, %v4624
        %v4626 = vpop.f32.mrb[0].mxu0
        %v4627 = vpop.f32.mrb[0].mxu0
        %v4628 = vadd.f32 %v4467, %v4627
        %v4629 = vpop.f32.mrb[0].mxu0
        %4630 = vmatprep.mubr.bf16.mxu0 0
        %4631 = vmatmul.mubr.bf16.gmra.mrb[0].mxu0 %v3121
        %v4632 = vpop.f32.mrb[0].mxu0
        %v4633 = vadd.f32 %v4472, %v4632
        %v4634 = vpop.f32.mrb[0].mxu0
        %v4635 = vpop.f32.mrb[0].mxu0
        %v4636 = vadd.f32 %v4475, %v4635
        %v4637 = vpop.f32.mrb[0].mxu0
        %4638 = vmatprep.mubr.bf16.mxu0 0
        %4639 = vmatmul.mubr.bf16.gmra.mrb[0].mxu0 %v3162
        %v4640 = vpop.f32.mrb[0].mxu0
        %v4641 = vadd.f32 %v4480, %v4640
        %v4642 = vpop.f32.mrb[0].mxu0
        %v4643 = vpop.f32.mrb[0].mxu0
        %v4644 = vadd.f32 %v4483, %v4643
        %v4645 = vpop.f32.mrb[0].mxu0
        %4646 = vmatprep.mubr.bf16.mxu0 0
        %4647 = vmatmul.mubr.bf16.gmra.mrb[0].mxu0 %v3203
        %v4648 = vpop.f32.mrb[0].mxu0
        %v4649 = vadd.f32 %v4488, %v4648
        %v4650 = vpop.f32.mrb[0].mxu0
        %v4651 = vpop.f32.mrb[0].mxu0
        %v4652 = vadd.f32 %v4491, %v4651
        %v4653 = vpop.f32.mrb[0].mxu0
        %4654 = vmatprep.mubr.bf16.mxu0 0
        %4655 = vmatmul.mubr.bf16.gmra.mrb[0].mxu0 %v3244
        %v4656 = vpop.f32.mrb[0].mxu0
        %v4657 = vadd.f32 %v4496, %v4656
        %v4658 = vpop.f32.mrb[0].mxu0
        %v4659 = vpop.f32.mrb[0].mxu0
        %v4660 = vadd.f32 %v4499, %v4659
        %v4661 = vpop.f32.mrb[0].mxu0
        %4662 = vmatprep.mubr.bf16.mxu0 0
        %4663 = vmatmul.mubr.bf16.gmra.mrb[0].mxu0 %v3285
        %v4664 = vpop.f32.mrb[0].mxu0
        %v4665 = vadd.f32 %v4504, %v4664
        %v4666 = vpop.f32.mrb[0].mxu0
        %v4667 = vpop.f32.mrb[0].mxu0
        %v4668 = vadd.f32 %v4507, %v4667
        %v4669 = vpop.f32.mrb[0].mxu0
        %4670 = vmatprep.mubr.bf16.mxu0 0
        %4671 = vmatmul.mubr.bf16.gmra.mrb[0].mxu0 %v3326
        %v4672 = vpop.f32.mrb[0].mxu0
        %v4673 = vadd.f32 %v4512, %v4672
        %v4674 = vpop.f32.mrb[0].mxu0
        %v4675 = vpop.f32.mrb[0].mxu0
        %v4676 = vadd.f32 %v4515, %v4675
        %v4677 = vpop.f32.mrb[0].mxu0
        %4678 = vmatprep.mubr.bf16.mxu0 0
        %4679 = vmatmul.mubr.bf16.gmra.mrb[0].mxu0 %v3367
        %v4680 = vpop.f32.mrb[0].mxu0
        %v4681 = vadd.f32 %v4520, %v4680
        %v4682 = vpop.f32.mrb[0].mxu0
        %v4683 = vpop.f32.mrb[0].mxu0
        %v4684 = vadd.f32 %v4523, %v4683
        %v4685 = vpop.f32.mrb[0].mxu0
        %4686 = vmatprep.mubr.bf16.mxu0 0
        %4687 = vmatmul.mubr.bf16.gmra.mrb[0].mxu0 %v3408
        %v4688 = vpop.f32.mrb[0].mxu0
        %v4689 = vadd.f32 %v4528, %v4688
        %v4690 = vpop.f32.mrb[0].mxu0
        %v4691 = vpop.f32.mrb[0].mxu0
        %v4692 = vadd.f32 %v4531, %v4691
        %v4693 = vpop.f32.mrb[0].mxu0
        %4694 = vmatprep.mubr.bf16.mxu0 0
        %4695 = vmatmul.mubr.bf16.gmra.mrb[0].mxu0 %v3449
        %v4696 = vpop.f32.mrb[0].mxu0
        %v4697 = vadd.f32 %v4536, %v4696
        %v4698 = vpop.f32.mrb[0].mxu0
        %v4699 = vpop.f32.mrb[0].mxu0
        %v4700 = vadd.f32 %v4539, %v4699
        %v4701 = vpop.f32.mrb[0].mxu0
        %4702 = vmatprep.mubr.bf16.mxu0 0
        %4703 = vmatmul.mubr.bf16.gmra.mrb[0].mxu0 %v3490
        %v4704 = vpop.f32.mrb[0].mxu0
        %v4705 = vadd.f32 %v4544, %v4704
        %v4706 = vpop.f32.mrb[0].mxu0
        %v4707 = vpop.f32.mrb[0].mxu0
        %v4708 = vadd.f32 %v4547, %v4707
        %v4709 = vpop.f32.mrb[0].mxu0
        %4710 = vmatprep.mubr.bf16.mxu0 0
        %4711 = vmatmul.mubr.bf16.gmra.mrb[0].mxu0 %v3531
        %v4712 = vpop.f32.mrb[0].mxu0
        %v4713 = vadd.f32 %v4552, %v4712
        %v4714 = vpop.f32.mrb[0].mxu0
        %v4715 = vpop.f32.mrb[0].mxu0
        %v4716 = vadd.f32 %v4555, %v4715
        %v4717 = vpop.f32.mrb[0].mxu0
        %4718 = vmatprep.mubr.bf16.mxu0 0
        %4719 = vmatmul.mubr.bf16.gmra.mrb[0].mxu0 %v3572
        %v4720 = vpop.f32.mrb[0].mxu0
        %v4721 = vadd.f32 %v4560, %v4720
        %v4722 = vpop.f32.mrb[0].mxu0
        %v4723 = vpop.f32.mrb[0].mxu0
        %v4724 = vadd.f32 %v4563, %v4723
        %v4725 = vpop.f32.mrb[0].mxu0
        %4726 = vmatprep.mubr.bf16.mxu0 0
        %4727 = vmatmul.mubr.bf16.gmra.mrb[0].mxu0 %v3613
        %v4728 = vpop.f32.mrb[0].mxu0
        %v4729 = vadd.f32 %v4568, %v4728
        %v4730 = vpop.f32.mrb[0].mxu0
        %v4731 = vpop.f32.mrb[0].mxu0
        %v4732 = vadd.f32 %v4571, %v4731
        %v4733 = vpop.f32.mrb[0].mxu0
        %4734 = vdwg.mxu0
        %v4735 = vrot.slane %v2853, 3
        %v4736 = vrot.slane %v2855, 4
        %v4737 = vor.u32 %v4735, %v4736
        %v4738 = vrot.slane %v2864, 3
        %v4739 = vrot.slane %v2860, 4
        %v4740 = vor.u32 %v4738, %v4739
        %v4741 = vsel %vm2957, %v4737, %v4740
        %v4743 = vshrl.u32 %v2863, 16
        %v4745 = vrot.slane %v4743, 3
        %v4746 = vshll.u32 %v2863, 16
        %v4748 = vrot.slane %v4746, 4
        %v4749 = vor.u32 %v4745, %v4748
        %v4751 = vshrl.u32 %v2866, 16
        %v4753 = vrot.slane %v4751, 3
        %v4754 = vshll.u32 %v2866, 16
        %v4756 = vrot.slane %v4754, 4
        %v4757 = vor.u32 %v4753, %v4756
        %v4758 = vsel %vm2957, %v4749, %v4757
        %v4760 = vshrl.u32 %v2956, 16
        %v4762 = vrot.slane %v4760, 3
        %v4763 = vshll.u32 %v2956, 16
        %v4765 = vrot.slane %v4763, 4
        %v4766 = vor.u32 %v4762, %v4765
        %v4768 = vshrl.u32 %v2955, 16
        %v4770 = vrot.slane %v4768, 3
        %v4771 = vshll.u32 %v2955, 16
        %v4773 = vrot.slane %v4771, 4
        %v4774 = vor.u32 %v4770, %v4773
        %v4775 = vsel %vm2957, %v4766, %v4774
        %s4779 = scalar_lea.vmem [#allocation8], 384
        %v4780 = vld [vmem:[%s4779] sm:$0xf]
        %v4781 = vld [vmem:[%s4779 + $0x4] sm:$0xf]
        %v4782 = vld [vmem:[%s4779 + $0x8] sm:$0xf]
        %v4783 = vld [vmem:[%s4779 + $0xc] sm:$0xf]
        %v4784 = vld [vmem:[%s4779 + $0x10] sm:$0xf]
        %v4785 = vld [vmem:[%s4779 + $0x14] sm:$0xf]
        %v4786 = vld [vmem:[%s4779 + $0x18] sm:$0xf]
        %v4787 = vld [vmem:[%s4779 + $0x1c] sm:$0xf]
        %v4788 = vld [vmem:[%s4779 + $0x20] sm:$0xf]
        %v4789 = vld [vmem:[%s4779 + $0x24] sm:$0xf]
        %v4790 = vld [vmem:[%s4779 + $0x28] sm:$0xf]
        %v4791 = vld [vmem:[%s4779 + $0x2c] sm:$0xf]
        %v4792 = vld [vmem:[%s4779 + $0x30] sm:$0xf]
        %v4793 = vld [vmem:[%s4779 + $0x34] sm:$0xf]
        %v4794 = vld [vmem:[%s4779 + $0x38] sm:$0xf]
        %v4795 = vld [vmem:[%s4779 + $0x3c] sm:$0xf]
        %v4796 = vld [vmem:[%s4779 + $0x40] sm:$0xf]
        %v4797 = vld [vmem:[%s4779 + $0x44] sm:$0xf]
        %v4798 = vld [vmem:[%s4779 + $0x48] sm:$0xf]
        %v4799 = vld [vmem:[%s4779 + $0x4c] sm:$0xf]
        %v4800 = vld [vmem:[%s4779 + $0x50] sm:$0xf]
        %v4801 = vld [vmem:[%s4779 + $0x54] sm:$0xf]
        %v4802 = vld [vmem:[%s4779 + $0x58] sm:$0xf]
        %v4803 = vld [vmem:[%s4779 + $0x5c] sm:$0xf]
        %v4804 = vld [vmem:[%s4779 + $0x60] sm:$0xf]
        %v4805 = vld [vmem:[%s4779 + $0x64] sm:$0xf]
        %v4806 = vld [vmem:[%s4779 + $0x68] sm:$0xf]
        %v4807 = vld [vmem:[%s4779 + $0x6c] sm:$0xf]
        %v4808 = vld [vmem:[%s4779 + $0x70] sm:$0xf]
        %v4809 = vld [vmem:[%s4779 + $0x74] sm:$0xf]
        %v4810 = vld [vmem:[%s4779 + $0x78] sm:$0xf]
        %v4811 = vld [vmem:[%s4779 + $0x7c] sm:$0xf]
        %v4812 = vld [vmem:[%s4779 + $0x80] sm:$0xf]
        %v4813 = vld [vmem:[%s4779 + $0x84] sm:$0xf]
        %v4814 = vld [vmem:[%s4779 + $0x88] sm:$0xf]
        %v4815 = vld [vmem:[%s4779 + $0x8c] sm:$0xf]
        %v4816 = vld [vmem:[%s4779 + $0x90] sm:$0xf]
        %v4817 = vld [vmem:[%s4779 + $0x94] sm:$0xf]
        %v4818 = vld [vmem:[%s4779 + $0x98] sm:$0xf]
        %v4819 = vld [vmem:[%s4779 + $0x9c] sm:$0xf]
        %v4820 = vld [vmem:[%s4779 + $0xa0] sm:$0xf]
        %v4821 = vld [vmem:[%s4779 + $0xa4] sm:$0xf]
        %v4822 = vld [vmem:[%s4779 + $0xa8] sm:$0xf]
        %v4823 = vld [vmem:[%s4779 + $0xac] sm:$0xf]
        %v4824 = vld [vmem:[%s4779 + $0xb0] sm:$0xf]
        %v4825 = vld [vmem:[%s4779 + $0xb4] sm:$0xf]
        %v4826 = vld [vmem:[%s4779 + $0xb8] sm:$0xf]
        %v4827 = vld [vmem:[%s4779 + $0xbc] sm:$0xf]
        %v4876 = vunpack.c.l.b16 %v4780
        %v4877 = vunpack.c.l.b16 %v4781
        %v4878 = vunpack.c.l.b16 %v4782
        %v4879 = vunpack.c.l.b16 %v4783
        %v4880 = vunpack.c.l.b16 %v4784
        %v4881 = vunpack.c.l.b16 %v4785
        %v4882 = vunpack.c.l.b16 %v4786
        %v4883 = vunpack.c.l.b16 %v4787
        %v4884 = vunpack.c.l.b16 %v4788
        %v4885 = vunpack.c.l.b16 %v4789
        %v4886 = vunpack.c.l.b16 %v4790
        %v4887 = vunpack.c.l.b16 %v4791
        %v4888 = vunpack.c.l.b16 %v4792
        %v4889 = vunpack.c.l.b16 %v4793
        %v4890 = vunpack.c.l.b16 %v4794
        %v4891 = vunpack.c.l.b16 %v4795
        %v4892 = vunpack.c.l.b16 %v4796
        %v4893 = vunpack.c.l.b16 %v4797
        %v4894 = vunpack.c.l.b16 %v4798
        %v4895 = vunpack.c.l.b16 %v4799
        %v4896 = vunpack.c.l.b16 %v4800
        %v4897 = vunpack.c.l.b16 %v4801
        %v4898 = vunpack.c.l.b16 %v4802
        %v4899 = vunpack.c.l.b16 %v4803
        %v4900 = vunpack.c.l.b16 %v4804
        %v4901 = vunpack.c.l.b16 %v4805
        %v4902 = vunpack.c.l.b16 %v4806
        %v4903 = vunpack.c.l.b16 %v4807
        %v4904 = vunpack.c.l.b16 %v4808
        %v4905 = vunpack.c.l.b16 %v4809
        %v4906 = vunpack.c.l.b16 %v4810
        %v4907 = vunpack.c.l.b16 %v4811
        %v4908 = vunpack.c.l.b16 %v4812
        %v4909 = vunpack.c.l.b16 %v4813
        %v4910 = vunpack.c.l.b16 %v4814
        %v4911 = vunpack.c.l.b16 %v4815
        %v4912 = vunpack.c.l.b16 %v4816
        %v4913 = vunpack.c.l.b16 %v4817
        %v4914 = vunpack.c.l.b16 %v4818
        %v4915 = vunpack.c.l.b16 %v4819
        %v4916 = vunpack.c.l.b16 %v4820
        %v4917 = vunpack.c.l.b16 %v4821
        %v4918 = vunpack.c.l.b16 %v4822
        %v4919 = vunpack.c.l.b16 %v4823
        %v4920 = vunpack.c.l.b16 %v4824
        %v4921 = vunpack.c.l.b16 %v4825
        %v4922 = vunpack.c.l.b16 %v4826
        %v4923 = vunpack.c.l.b16 %v4827
        %v4924 = vpack.c.b16 %v4877, %v4876
        %v4925 = vpack.c.b16 %v4879, %v4878
        %v4926 = vpack.c.b16 %v4881, %v4880
        %v4927 = vpack.c.b16 %v4883, %v4882
        %v4928 = vpack.c.b16 %v4885, %v4884
        %v4929 = vpack.c.b16 %v4887, %v4886
        %v4930 = vpack.c.b16 %v4889, %v4888
        %v4931 = vpack.c.b16 %v4891, %v4890
        %v4932 = vpack.c.b16 %v4893, %v4892
        %v4933 = vpack.c.b16 %v4895, %v4894
        %v4934 = vpack.c.b16 %v4897, %v4896
        %v4935 = vpack.c.b16 %v4899, %v4898
        %v4936 = vpack.c.b16 %v4901, %v4900
        %v4937 = vpack.c.b16 %v4903, %v4902
        %v4938 = vpack.c.b16 %v4905, %v4904
        %v4939 = vpack.c.b16 %v4907, %v4906
        %v4940 = vpack.c.b16 %v4909, %v4908
        %v4941 = vpack.c.b16 %v4911, %v4910
        %v4942 = vpack.c.b16 %v4913, %v4912
        %v4943 = vpack.c.b16 %v4915, %v4914
        %v4944 = vpack.c.b16 %v4917, %v4916
        %v4945 = vpack.c.b16 %v4919, %v4918
        %v4946 = vpack.c.b16 %v4921, %v4920
        %v4947 = vpack.c.b16 %v4923, %v4922
        %4972 = vmatprep.subr.bf16.mxu0 0
        %4973 = vmatpush1.bf16.msra.mxu0 %v4924
        %4974 = vmatprep.subr.bf16.mxu0 0
        %4975 = vmatpush1.bf16.msra.mxu0 %v4925
        %4976 = vmatprep.subr.bf16.mxu0 0
        %4977 = vmatpush1.bf16.msra.mxu0 %v4926
        %4978 = vmatprep.subr.bf16.mxu0 0
        %4979 = vmatpush1.bf16.msra.mxu0 %v4927
        %4980 = vmatprep.subr.bf16.mxu0 0
        %4981 = vmatpush1.bf16.msra.mxu0 %v4928
        %4982 = vmatprep.subr.bf16.mxu0 0
        %4983 = vmatpush1.bf16.msra.mxu0 %v4929
        %4984 = vmatprep.subr.bf16.mxu0 0
        %4985 = vmatpush1.bf16.msra.mxu0 %v4930
        %4986 = vmatprep.subr.bf16.mxu0 0
        %4987 = vmatpush1.bf16.msra.mxu0 %v4931
        %4988 = vmatprep.subr.bf16.mxu0 0
        %4989 = vmatpush1.bf16.msra.mxu0 %v4932
        %4990 = vmatprep.subr.bf16.mxu0 0
        %4991 = vmatpush1.bf16.msra.mxu0 %v4933
        %4992 = vmatprep.subr.bf16.mxu0 0
        %4993 = vmatpush1.bf16.msra.mxu0 %v4934
        %4994 = vmatprep.subr.bf16.mxu0 0
        %4995 = vmatpush1.bf16.msra.mxu0 %v4935
        %4996 = vmatprep.subr.bf16.mxu0 0
        %4997 = vmatpush1.bf16.msra.mxu0 %v4936
        %4998 = vmatprep.subr.bf16.mxu0 0
        %4999 = vmatpush1.bf16.msra.mxu0 %v4937
        %5000 = vmatprep.subr.bf16.mxu0 0
        %5001 = vmatpush1.bf16.msra.mxu0 %v4938
        %5002 = vmatprep.subr.bf16.mxu0 0
        %5003 = vmatpush1.bf16.msra.mxu0 %v4939
        %5004 = vmatprep.mubr.bf16.mxu0 %v3063
        %5005 = vmatmul.mubr.bf16.gmra.mrb[0].mxu0 %v3046
        %v5006 = vpop.f32.mrb[0].mxu0
        %v5007 = vadd.f32 0.0, %v5006
        %v5008 = vpop.f32.mrb[0].mxu0
        %v5009 = vpop.f32.mrb[0].mxu0
        %v5010 = vadd.f32 0.0, %v5009
        %v5011 = vpop.f32.mrb[0].mxu0
        %5012 = vmatprep.mubr.bf16.mxu0 %v3104
        %5013 = vmatmul.mubr.bf16.gmra.mrb[0].mxu0 %v3087
        %v5014 = vpop.f32.mrb[0].mxu0
        %v5015 = vadd.f32 0.0, %v5014
        %v5016 = vpop.f32.mrb[0].mxu0
        %v5017 = vpop.f32.mrb[0].mxu0
        %v5018 = vadd.f32 0.0, %v5017
        %v5019 = vpop.f32.mrb[0].mxu0
        %5020 = vmatprep.mubr.bf16.mxu0 %v3145
        %5021 = vmatmul.mubr.bf16.gmra.mrb[0].mxu0 %v3128
        %v5022 = vpop.f32.mrb[0].mxu0
        %v5023 = vadd.f32 0.0, %v5022
        %v5024 = vpop.f32.mrb[0].mxu0
        %v5025 = vpop.f32.mrb[0].mxu0
        %v5026 = vadd.f32 0.0, %v5025
        %v5027 = vpop.f32.mrb[0].mxu0
        %5028 = vmatprep.mubr.bf16.mxu0 %v3186
        %5029 = vmatmul.mubr.bf16.gmra.mrb[0].mxu0 %v3169
        %v5030 = vpop.f32.mrb[0].mxu0
        %v5031 = vadd.f32 0.0, %v5030
        %v5032 = vpop.f32.mrb[0].mxu0
        %v5033 = vpop.f32.mrb[0].mxu0
        %v5034 = vadd.f32 0.0, %v5033
        %v5035 = vpop.f32.mrb[0].mxu0
        %5036 = vmatprep.mubr.bf16.mxu0 %v3227
        %5037 = vmatmul.mubr.bf16.gmra.mrb[0].mxu0 %v3210
        %v5038 = vpop.f32.mrb[0].mxu0
        %v5039 = vadd.f32 0.0, %v5038
        %v5040 = vpop.f32.mrb[0].mxu0
        %v5041 = vpop.f32.mrb[0].mxu0
        %v5042 = vadd.f32 0.0, %v5041
        %v5043 = vpop.f32.mrb[0].mxu0
        %5044 = vmatprep.mubr.bf16.mxu0 %v3268
        %5045 = vmatmul.mubr.bf16.gmra.mrb[0].mxu0 %v3251
        %v5046 = vpop.f32.mrb[0].mxu0
        %v5047 = vadd.f32 0.0, %v5046
        %v5048 = vpop.f32.mrb[0].mxu0
        %v5049 = vpop.f32.mrb[0].mxu0
        %v5050 = vadd.f32 0.0, %v5049
        %v5051 = vpop.f32.mrb[0].mxu0
        %5052 = vmatprep.mubr.bf16.mxu0 %v3309
        %5053 = vmatmul.mubr.bf16.gmra.mrb[0].mxu0 %v3292
        %v5054 = vpop.f32.mrb[0].mxu0
        %v5055 = vadd.f32 0.0, %v5054
        %v5056 = vpop.f32.mrb[0].mxu0
        %v5057 = vpop.f32.mrb[0].mxu0
        %v5058 = vadd.f32 0.0, %v5057
        %v5059 = vpop.f32.mrb[0].mxu0
        %5060 = vmatprep.mubr.bf16.mxu0 %v3350
        %5061 = vmatmul.mubr.bf16.gmra.mrb[0].mxu0 %v3333
        %v5062 = vpop.f32.mrb[0].mxu0
        %v5063 = vadd.f32 0.0, %v5062
        %v5064 = vpop.f32.mrb[0].mxu0
        %v5065 = vpop.f32.mrb[0].mxu0
        %v5066 = vadd.f32 0.0, %v5065
        %v5067 = vpop.f32.mrb[0].mxu0
        %5068 = vmatprep.mubr.bf16.mxu0 %v3391
        %5069 = vmatmul.mubr.bf16.gmra.mrb[0].mxu0 %v3374
        %v5070 = vpop.f32.mrb[0].mxu0
        %v5071 = vadd.f32 0.0, %v5070
        %v5072 = vpop.f32.mrb[0].mxu0
        %v5073 = vpop.f32.mrb[0].mxu0
        %v5074 = vadd.f32 0.0, %v5073
        %v5075 = vpop.f32.mrb[0].mxu0
        %5076 = vmatprep.mubr.bf16.mxu0 %v3432
        %5077 = vmatmul.mubr.bf16.gmra.mrb[0].mxu0 %v3415
        %v5078 = vpop.f32.mrb[0].mxu0
        %v5079 = vadd.f32 0.0, %v5078
        %v5080 = vpop.f32.mrb[0].mxu0
        %v5081 = vpop.f32.mrb[0].mxu0
        %v5082 = vadd.f32 0.0, %v5081
        %v5083 = vpop.f32.mrb[0].mxu0
        %5084 = vmatprep.mubr.bf16.mxu0 %v3473
        %5085 = vmatmul.mubr.bf16.gmra.mrb[0].mxu0 %v3456
        %v5086 = vpop.f32.mrb[0].mxu0
        %v5087 = vadd.f32 0.0, %v5086
        %v5088 = vpop.f32.mrb[0].mxu0
        %v5089 = vpop.f32.mrb[0].mxu0
        %v5090 = vadd.f32 0.0, %v5089
        %v5091 = vpop.f32.mrb[0].mxu0
        %5092 = vmatprep.mubr.bf16.mxu0 %v3514
        %5093 = vmatmul.mubr.bf16.gmra.mrb[0].mxu0 %v3497
        %v5094 = vpop.f32.mrb[0].mxu0
        %v5095 = vadd.f32 0.0, %v5094
        %v5096 = vpop.f32.mrb[0].mxu0
        %v5097 = vpop.f32.mrb[0].mxu0
        %v5098 = vadd.f32 0.0, %v5097
        %v5099 = vpop.f32.mrb[0].mxu0
        %5100 = vmatprep.mubr.bf16.mxu0 %v3555
        %5101 = vmatmul.mubr.bf16.gmra.mrb[0].mxu0 %v3538
        %v5102 = vpop.f32.mrb[0].mxu0
        %v5103 = vadd.f32 0.0, %v5102
        %v5104 = vpop.f32.mrb[0].mxu0
        %v5105 = vpop.f32.mrb[0].mxu0
        %v5106 = vadd.f32 0.0, %v5105
        %v5107 = vpop.f32.mrb[0].mxu0
        %5108 = vmatprep.mubr.bf16.mxu0 %v3596
        %5109 = vmatmul.mubr.bf16.gmra.mrb[0].mxu0 %v3579
        %v5110 = vpop.f32.mrb[0].mxu0
        %v5111 = vadd.f32 0.0, %v5110
        %v5112 = vpop.f32.mrb[0].mxu0
        %v5113 = vpop.f32.mrb[0].mxu0
        %v5114 = vadd.f32 0.0, %v5113
        %v5115 = vpop.f32.mrb[0].mxu0
        %5116 = vmatprep.mubr.bf16.mxu0 %v3733
        %5117 = vmatmul.mubr.bf16.gmra.mrb[0].mxu0 %v3716
        %v5118 = vpop.f32.mrb[0].mxu0
        %v5119 = vadd.f32 0.0, %v5118
        %v5120 = vpop.f32.mrb[0].mxu0
        %v5121 = vpop.f32.mrb[0].mxu0
        %v5122 = vadd.f32 0.0, %v5121
        %v5123 = vpop.f32.mrb[0].mxu0
        %5124 = vmatprep.mubr.bf16.mxu0 %v4758
        %5125 = vmatmul.mubr.bf16.gmra.mrb[0].mxu0 %v4741
        %v5126 = vpop.f32.mrb[0].mxu0
        %v5127 = vadd.f32 0.0, %v5126
        %v5128 = vpop.f32.mrb[0].mxu0
        %v5129 = vpop.f32.mrb[0].mxu0
        %v5130 = vadd.f32 0.0, %v5129
        %v5131 = vpop.f32.mrb[0].mxu0
        %5132 = vdwg.mxu0
        %5133 = vmatprep.subr.bf16.mxu0 0
        %5134 = vmatpush1.bf16.msra.mxu0 %v4940
        %5135 = vmatprep.subr.bf16.mxu0 0
        %5136 = vmatpush1.bf16.msra.mxu0 %v4941
        %5137 = vmatprep.subr.bf16.mxu0 0
        %5138 = vmatpush1.bf16.msra.mxu0 %v4942
        %5139 = vmatprep.subr.bf16.mxu0 0
        %5140 = vmatpush1.bf16.msra.mxu0 %v4943
        %5141 = vmatprep.subr.bf16.mxu0 0
        %5142 = vmatpush1.bf16.msra.mxu0 %v4944
        %5143 = vmatprep.subr.bf16.mxu0 0
        %5144 = vmatpush1.bf16.msra.mxu0 %v4945
        %5145 = vmatprep.subr.bf16.mxu0 0
        %5146 = vmatpush1.bf16.msra.mxu0 %v4946
        %5147 = vmatprep.subr.bf16.mxu0 0
        %5148 = vmatpush1.bf16.msra.mxu0 %v4947
        %5149 = vmatprep.subr.bf16.mxu0 0
        %5150 = vmatpush1.bf16.msra.mxu0 0
        %5151 = vmatprep.subr.bf16.mxu0 0
        %5152 = vmatpush1.bf16.msra.mxu0 0
        %5153 = vmatprep.subr.bf16.mxu0 0
        %5154 = vmatpush1.bf16.msra.mxu0 0
        %5155 = vmatprep.subr.bf16.mxu0 0
        %5156 = vmatpush1.bf16.msra.mxu0 0
        %5157 = vmatprep.subr.bf16.mxu0 0
        %5158 = vmatpush1.bf16.msra.mxu0 0
        %5159 = vmatprep.subr.bf16.mxu0 0
        %5160 = vmatpush1.bf16.msra.mxu0 0
        %5161 = vmatprep.subr.bf16.mxu0 0
        %5162 = vmatpush1.bf16.msra.mxu0 0
        %5163 = vmatprep.subr.bf16.mxu0 0
        %5164 = vmatpush1.bf16.msra.mxu0 0
        %5165 = vmatprep.mubr.bf16.mxu0 0
        %5166 = vmatmul.mubr.bf16.gmra.mrb[0].mxu0 %v3080
        %v5167 = vpop.f32.mrb[0].mxu0
        %v5168 = vadd.f32 %v5007, %v5167
        %v5169 = vpop.f32.mrb[0].mxu0
        %v5170 = vpop.f32.mrb[0].mxu0
        %v5171 = vadd.f32 %v5010, %v5170
        %v5172 = vpop.f32.mrb[0].mxu0
        %5173 = vmatprep.mubr.bf16.mxu0 0
        %5174 = vmatmul.mubr.bf16.gmra.mrb[0].mxu0 %v3121
        %v5175 = vpop.f32.mrb[0].mxu0
        %v5176 = vadd.f32 %v5015, %v5175
        %v5177 = vpop.f32.mrb[0].mxu0
        %v5178 = vpop.f32.mrb[0].mxu0
        %v5179 = vadd.f32 %v5018, %v5178
        %v5180 = vpop.f32.mrb[0].mxu0
        %5181 = vmatprep.mubr.bf16.mxu0 0
        %5182 = vmatmul.mubr.bf16.gmra.mrb[0].mxu0 %v3162
        %v5183 = vpop.f32.mrb[0].mxu0
        %v5184 = vadd.f32 %v5023, %v5183
        %v5185 = vpop.f32.mrb[0].mxu0
        %v5186 = vpop.f32.mrb[0].mxu0
        %v5187 = vadd.f32 %v5026, %v5186
        %v5188 = vpop.f32.mrb[0].mxu0
        %5189 = vmatprep.mubr.bf16.mxu0 0
        %5190 = vmatmul.mubr.bf16.gmra.mrb[0].mxu0 %v3203
        %v5191 = vpop.f32.mrb[0].mxu0
        %v5192 = vadd.f32 %v5031, %v5191
        %v5193 = vpop.f32.mrb[0].mxu0
        %v5194 = vpop.f32.mrb[0].mxu0
        %v5195 = vadd.f32 %v5034, %v5194
        %v5196 = vpop.f32.mrb[0].mxu0
        %5197 = vmatprep.mubr.bf16.mxu0 0
        %5198 = vmatmul.mubr.bf16.gmra.mrb[0].mxu0 %v3244
        %v5199 = vpop.f32.mrb[0].mxu0
        %v5200 = vadd.f32 %v5039, %v5199
        %v5201 = vpop.f32.mrb[0].mxu0
        %v5202 = vpop.f32.mrb[0].mxu0
        %v5203 = vadd.f32 %v5042, %v5202
        %v5204 = vpop.f32.mrb[0].mxu0
        %5205 = vmatprep.mubr.bf16.mxu0 0
        %5206 = vmatmul.mubr.bf16.gmra.mrb[0].mxu0 %v3285
        %v5207 = vpop.f32.mrb[0].mxu0
        %v5208 = vadd.f32 %v5047, %v5207
        %v5209 = vpop.f32.mrb[0].mxu0
        %v5210 = vpop.f32.mrb[0].mxu0
        %v5211 = vadd.f32 %v5050, %v5210
        %v5212 = vpop.f32.mrb[0].mxu0
        %5213 = vmatprep.mubr.bf16.mxu0 0
        %5214 = vmatmul.mubr.bf16.gmra.mrb[0].mxu0 %v3326
        %v5215 = vpop.f32.mrb[0].mxu0
        %v5216 = vadd.f32 %v5055, %v5215
        %v5217 = vpop.f32.mrb[0].mxu0
        %v5218 = vpop.f32.mrb[0].mxu0
        %v5219 = vadd.f32 %v5058, %v5218
        %v5220 = vpop.f32.mrb[0].mxu0
        %5221 = vmatprep.mubr.bf16.mxu0 0
        %5222 = vmatmul.mubr.bf16.gmra.mrb[0].mxu0 %v3367
        %v5223 = vpop.f32.mrb[0].mxu0
        %v5224 = vadd.f32 %v5063, %v5223
        %v5225 = vpop.f32.mrb[0].mxu0
        %v5226 = vpop.f32.mrb[0].mxu0
        %v5227 = vadd.f32 %v5066, %v5226
        %v5228 = vpop.f32.mrb[0].mxu0
        %5229 = vmatprep.mubr.bf16.mxu0 0
        %5230 = vmatmul.mubr.bf16.gmra.mrb[0].mxu0 %v3408
        %v5231 = vpop.f32.mrb[0].mxu0
        %v5232 = vadd.f32 %v5071, %v5231
        %v5233 = vpop.f32.mrb[0].mxu0
        %v5234 = vpop.f32.mrb[0].mxu0
        %v5235 = vadd.f32 %v5074, %v5234
        %v5236 = vpop.f32.mrb[0].mxu0
        %5237 = vmatprep.mubr.bf16.mxu0 0
        %5238 = vmatmul.mubr.bf16.gmra.mrb[0].mxu0 %v3449
        %v5239 = vpop.f32.mrb[0].mxu0
        %v5240 = vadd.f32 %v5079, %v5239
        %v5241 = vpop.f32.mrb[0].mxu0
        %v5242 = vpop.f32.mrb[0].mxu0
        %v5243 = vadd.f32 %v5082, %v5242
        %v5244 = vpop.f32.mrb[0].mxu0
        %5245 = vmatprep.mubr.bf16.mxu0 0
        %5246 = vmatmul.mubr.bf16.gmra.mrb[0].mxu0 %v3490
        %v5247 = vpop.f32.mrb[0].mxu0
        %v5248 = vadd.f32 %v5087, %v5247
        %v5249 = vpop.f32.mrb[0].mxu0
        %v5250 = vpop.f32.mrb[0].mxu0
        %v5251 = vadd.f32 %v5090, %v5250
        %v5252 = vpop.f32.mrb[0].mxu0
        %5253 = vmatprep.mubr.bf16.mxu0 0
        %5254 = vmatmul.mubr.bf16.gmra.mrb[0].mxu0 %v3531
        %v5255 = vpop.f32.mrb[0].mxu0
        %v5256 = vadd.f32 %v5095, %v5255
        %v5257 = vpop.f32.mrb[0].mxu0
        %v5258 = vpop.f32.mrb[0].mxu0
        %v5259 = vadd.f32 %v5098, %v5258
        %v5260 = vpop.f32.mrb[0].mxu0
        %5261 = vmatprep.mubr.bf16.mxu0 0
        %5262 = vmatmul.mubr.bf16.gmra.mrb[0].mxu0 %v3572
        %v5263 = vpop.f32.mrb[0].mxu0
        %v5264 = vadd.f32 %v5103, %v5263
        %v5265 = vpop.f32.mrb[0].mxu0
        %v5266 = vpop.f32.mrb[0].mxu0
        %v5267 = vadd.f32 %v5106, %v5266
        %v5268 = vpop.f32.mrb[0].mxu0
        %5269 = vmatprep.mubr.bf16.mxu0 0
        %5270 = vmatmul.mubr.bf16.gmra.mrb[0].mxu0 %v3613
        %v5271 = vpop.f32.mrb[0].mxu0
        %v5272 = vadd.f32 %v5111, %v5271
        %v5273 = vpop.f32.mrb[0].mxu0
        %v5274 = vpop.f32.mrb[0].mxu0
        %v5275 = vadd.f32 %v5114, %v5274
        %v5276 = vpop.f32.mrb[0].mxu0
        %5277 = vmatprep.mubr.bf16.mxu0 0
        %5278 = vmatmul.mubr.bf16.gmra.mrb[0].mxu0 %v3750
        %v5279 = vpop.f32.mrb[0].mxu0
        %v5280 = vadd.f32 %v5119, %v5279
        %v5281 = vpop.f32.mrb[0].mxu0
        %v5282 = vpop.f32.mrb[0].mxu0
        %v5283 = vadd.f32 %v5122, %v5282
        %v5284 = vpop.f32.mrb[0].mxu0
        %5285 = vmatprep.mubr.bf16.mxu0 0
        %5286 = vmatmul.mubr.bf16.gmra.mrb[0].mxu0 %v4775
        %v5287 = vpop.f32.mrb[0].mxu0
        %v5288 = vadd.f32 %v5127, %v5287
        %v5289 = vpop.f32.mrb[0].mxu0
        %v5290 = vpop.f32.mrb[0].mxu0
        %v5291 = vadd.f32 %v5130, %v5290
        %v5292 = vpop.f32.mrb[0].mxu0
        %5293 = vdwg.mxu0
        %v5294 = vadd.f32 %v4609, %v5168
        %v5295 = vadd.f32 %v4612, %v5171
        %v5296 = vadd.f32 %v4617, %v5176
        %v5297 = vadd.f32 %v4620, %v5179
        %v5298 = vadd.f32 %v4625, %v5184
        %v5299 = vadd.f32 %v4628, %v5187
        %v5300 = vadd.f32 %v4633, %v5192
        %v5301 = vadd.f32 %v4636, %v5195
        %v5302 = vadd.f32 %v4641, %v5200
        %v5303 = vadd.f32 %v4644, %v5203
        %v5304 = vadd.f32 %v4649, %v5208
        %v5305 = vadd.f32 %v4652, %v5211
        %v5306 = vadd.f32 %v4657, %v5216
        %v5307 = vadd.f32 %v4660, %v5219
        %v5308 = vadd.f32 %v4665, %v5224
        %v5309 = vadd.f32 %v4668, %v5227
        %v5310 = vadd.f32 %v4673, %v5232
        %v5311 = vadd.f32 %v4676, %v5235
        %v5312 = vadd.f32 %v4681, %v5240
        %v5313 = vadd.f32 %v4684, %v5243
        %v5314 = vadd.f32 %v4689, %v5248
        %v5315 = vadd.f32 %v4692, %v5251
        %v5316 = vadd.f32 %v4697, %v5256
        %v5317 = vadd.f32 %v4700, %v5259
        %v5318 = vadd.f32 %v4705, %v5264
        %v5319 = vadd.f32 %v4708, %v5267
        %v5320 = vadd.f32 %v4713, %v5272
        %v5321 = vadd.f32 %v4716, %v5275
        %v5322 = vadd.f32 %v4721, %v5280
        %v5323 = vadd.f32 %v4724, %v5283
        %v5324 = vadd.f32 %v4729, %v5288
        %v5325 = vadd.f32 %v4732, %v5291
        %v5326 = vld [vmem:[%s4] sm:$0x1]
        %v5328 = vlaneseq
        %v5329 = vshrl.u32 %v5328, 7
        %v5330 = vsub.s32 0, %v5329
        %v5331 = vrot.slane %v5326, %v5330
        %v5333 = vadd.f32 %v5294, %v5331
        %v5334 = vadd.f32 %v5295, %v5331
        %v5335 = vadd.f32 %v5296, %v5331
        %v5336 = vadd.f32 %v5297, %v5331
        %v5337 = vadd.f32 %v5298, %v5331
        %v5338 = vadd.f32 %v5299, %v5331
        %v5339 = vadd.f32 %v5300, %v5331
        %v5340 = vadd.f32 %v5301, %v5331
        %v5341 = vadd.f32 %v5302, %v5331
        %v5342 = vadd.f32 %v5303, %v5331
        %v5343 = vadd.f32 %v5304, %v5331
        %v5344 = vadd.f32 %v5305, %v5331
        %v5345 = vadd.f32 %v5306, %v5331
        %v5346 = vadd.f32 %v5307, %v5331
        %v5347 = vadd.f32 %v5308, %v5331
        %v5348 = vadd.f32 %v5309, %v5331
        %v5349 = vadd.f32 %v5310, %v5331
        %v5350 = vadd.f32 %v5311, %v5331
        %v5351 = vadd.f32 %v5312, %v5331
        %v5352 = vadd.f32 %v5313, %v5331
        %v5353 = vadd.f32 %v5314, %v5331
        %v5354 = vadd.f32 %v5315, %v5331
        %v5355 = vadd.f32 %v5316, %v5331
        %v5356 = vadd.f32 %v5317, %v5331
        %v5357 = vadd.f32 %v5318, %v5331
        %v5358 = vadd.f32 %v5319, %v5331
        %v5359 = vadd.f32 %v5320, %v5331
        %v5360 = vadd.f32 %v5321, %v5331
        %v5361 = vadd.f32 %v5322, %v5331
        %v5362 = vadd.f32 %v5323, %v5331
        %v5363 = vadd.f32 %v5324, %v5331
        %v5364 = vadd.f32 %v5325, %v5331
        %v5365 = vld [vmem:[#allocation9] sm:$0xf]
        %v5366 = vld [vmem:[#allocation9 + $0x4] sm:$0xf]
        %v5367 = vld [vmem:[#allocation9 + $0x8] sm:$0xf]
        %v5368 = vld [vmem:[#allocation9 + $0xc] sm:$0xf]
        %v5369 = vld [vmem:[#allocation9 + $0x10] sm:$0xf]
        %v5370 = vld [vmem:[#allocation9 + $0x14] sm:$0xf]
        %v5371 = vld [vmem:[#allocation9 + $0x18] sm:$0xf]
        %v5372 = vld [vmem:[#allocation9 + $0x1c] sm:$0xf]
        %v5373 = vld [vmem:[#allocation9 + $0x20] sm:$0xf]
        %v5374 = vld [vmem:[#allocation9 + $0x24] sm:$0xf]
        %v5375 = vld [vmem:[#allocation9 + $0x28] sm:$0xf]
        %v5376 = vld [vmem:[#allocation9 + $0x2c] sm:$0xf]
        %v5377 = vld [vmem:[#allocation9 + $0x30] sm:$0xf]
        %v5378 = vld [vmem:[#allocation9 + $0x34] sm:$0xf]
        %v5379 = vld [vmem:[#allocation9 + $0x38] sm:$0xf]
        %v5380 = vld [vmem:[#allocation9 + $0x3c] sm:$0xf]
        %v5381 = vld [vmem:[%s6] sm:$0x1]
        %v5383 = vlaneseq
        %v5384 = vshrl.u32 %v5383, 7
        %v5385 = vsub.s32 0, %v5384
        %v5386 = vrot.slane %v5381, %v5385
        %v5404 = vunpack.c.l.b16 %v5365
        %v5405 = vunpack.c.l.b16 %v5366
        %v5406 = vunpack.c.l.b16 %v5367
        %v5407 = vunpack.c.l.b16 %v5368
        %v5408 = vunpack.c.l.b16 %v5369
        %v5409 = vunpack.c.l.b16 %v5370
        %v5410 = vunpack.c.l.b16 %v5371
        %v5411 = vunpack.c.l.b16 %v5372
        %v5412 = vunpack.c.l.b16 %v5373
        %v5413 = vunpack.c.l.b16 %v5374
        %v5414 = vunpack.c.l.b16 %v5375
        %v5415 = vunpack.c.l.b16 %v5376
        %v5416 = vunpack.c.l.b16 %v5377
        %v5417 = vunpack.c.l.b16 %v5378
        %v5418 = vunpack.c.l.b16 %v5379
        %v5419 = vunpack.c.l.b16 %v5380
        %v5420 = vpack.c.b16 %v5405, %v5404
        %v5421 = vpack.c.b16 %v5407, %v5406
        %v5422 = vpack.c.b16 %v5409, %v5408
        %v5423 = vpack.c.b16 %v5411, %v5410
        %v5424 = vpack.c.b16 %v5413, %v5412
        %v5425 = vpack.c.b16 %v5415, %v5414
        %v5426 = vpack.c.b16 %v5417, %v5416
        %v5427 = vpack.c.b16 %v5419, %v5418
        %5436 = vmatprep.subr.bf16.mxu0 0
        %5437 = vmatpush1.bf16.msra.mxu0 %v5420
        %5438 = vmatprep.subr.bf16.mxu0 0
        %5439 = vmatpush1.bf16.msra.mxu0 %v5421
        %5440 = vmatprep.subr.bf16.mxu0 0
        %5441 = vmatpush1.bf16.msra.mxu0 %v5422
        %5442 = vmatprep.subr.bf16.mxu0 0
        %5443 = vmatpush1.bf16.msra.mxu0 %v5423
        %5444 = vmatprep.subr.bf16.mxu0 0
        %5445 = vmatpush1.bf16.msra.mxu0 %v5424
        %5446 = vmatprep.subr.bf16.mxu0 0
        %5447 = vmatpush1.bf16.msra.mxu0 %v5425
        %5448 = vmatprep.subr.bf16.mxu0 0
        %5449 = vmatpush1.bf16.msra.mxu0 %v5426
        %5450 = vmatprep.subr.bf16.mxu0 0
        %5451 = vmatpush1.bf16.msra.mxu0 %v5427
        %5452 = vmatprep.subr.bf16.mxu0 0
        %5453 = vmatpush1.bf16.msra.mxu0 0
        %5454 = vmatprep.subr.bf16.mxu0 0
        %5455 = vmatpush1.bf16.msra.mxu0 0
        %5456 = vmatprep.subr.bf16.mxu0 0
        %5457 = vmatpush1.bf16.msra.mxu0 0
        %5458 = vmatprep.subr.bf16.mxu0 0
        %5459 = vmatpush1.bf16.msra.mxu0 0
        %5460 = vmatprep.subr.bf16.mxu0 0
        %5461 = vmatpush1.bf16.msra.mxu0 0
        %5462 = vmatprep.subr.bf16.mxu0 0
        %5463 = vmatpush1.bf16.msra.mxu0 0
        %5464 = vmatprep.subr.bf16.mxu0 0
        %5465 = vmatpush1.bf16.msra.mxu0 0
        %5466 = vmatprep.subr.bf16.mxu0 0
        %5467 = vmatpush1.bf16.msra.mxu0 0
        %5468 = vmatprep.mubr.bf16.mxu0 0
        %5469 = vmatmul.mubr.bf16.gmra.mrb[0].mxu0 %v497
        %v5470 = vpop.f32.mrb[0].mxu0
        %v5471 = vadd.f32 %v5386, %v5470
        %v5472 = vpop.f32.mrb[0].mxu0
        %v5473 = vpop.f32.mrb[0].mxu0
        %v5474 = vadd.f32 %v5386, %v5473
        %v5475 = vpop.f32.mrb[0].mxu0
        %5476 = vmatprep.mubr.bf16.mxu0 0
        %5477 = vmatmul.mubr.bf16.gmra.mrb[0].mxu0 %v509
        %v5478 = vpop.f32.mrb[0].mxu0
        %v5479 = vadd.f32 %v5386, %v5478
        %v5480 = vpop.f32.mrb[0].mxu0
        %v5481 = vpop.f32.mrb[0].mxu0
        %v5482 = vadd.f32 %v5386, %v5481
        %v5483 = vpop.f32.mrb[0].mxu0
        %5484 = vmatprep.mubr.bf16.mxu0 0
        %5485 = vmatmul.mubr.bf16.gmra.mrb[0].mxu0 %v521
        %v5486 = vpop.f32.mrb[0].mxu0
        %v5487 = vadd.f32 %v5386, %v5486
        %v5488 = vpop.f32.mrb[0].mxu0
        %v5489 = vpop.f32.mrb[0].mxu0
        %v5490 = vadd.f32 %v5386, %v5489
        %v5491 = vpop.f32.mrb[0].mxu0
        %5492 = vmatprep.mubr.bf16.mxu0 0
        %5493 = vmatmul.mubr.bf16.gmra.mrb[0].mxu0 %v533
        %v5494 = vpop.f32.mrb[0].mxu0
        %v5495 = vadd.f32 %v5386, %v5494
        %v5496 = vpop.f32.mrb[0].mxu0
        %v5497 = vpop.f32.mrb[0].mxu0
        %v5498 = vadd.f32 %v5386, %v5497
        %v5499 = vpop.f32.mrb[0].mxu0
        %5500 = vmatprep.mubr.bf16.mxu0 0
        %5501 = vmatmul.mubr.bf16.gmra.mrb[0].mxu0 %v545
        %v5502 = vpop.f32.mrb[0].mxu0
        %v5503 = vadd.f32 %v5386, %v5502
        %v5504 = vpop.f32.mrb[0].mxu0
        %v5505 = vpop.f32.mrb[0].mxu0
        %v5506 = vadd.f32 %v5386, %v5505
        %v5507 = vpop.f32.mrb[0].mxu0
        %5508 = vmatprep.mubr.bf16.mxu0 0
        %5509 = vmatmul.mubr.bf16.gmra.mrb[0].mxu0 %v557
        %v5510 = vpop.f32.mrb[0].mxu0
        %v5511 = vadd.f32 %v5386, %v5510
        %v5512 = vpop.f32.mrb[0].mxu0
        %v5513 = vpop.f32.mrb[0].mxu0
        %v5514 = vadd.f32 %v5386, %v5513
        %v5515 = vpop.f32.mrb[0].mxu0
        %5516 = vmatprep.mubr.bf16.mxu0 0
        %5517 = vmatmul.mubr.bf16.gmra.mrb[0].mxu0 %v569
        %v5518 = vpop.f32.mrb[0].mxu0
        %v5519 = vadd.f32 %v5386, %v5518
        %v5520 = vpop.f32.mrb[0].mxu0
        %v5521 = vpop.f32.mrb[0].mxu0
        %v5522 = vadd.f32 %v5386, %v5521
        %v5523 = vpop.f32.mrb[0].mxu0
        %5524 = vmatprep.mubr.bf16.mxu0 0
        %5525 = vmatmul.mubr.bf16.gmra.mrb[0].mxu0 %v581
        %v5526 = vpop.f32.mrb[0].mxu0
        %v5527 = vadd.f32 %v5386, %v5526
        %v5528 = vpop.f32.mrb[0].mxu0
        %v5529 = vpop.f32.mrb[0].mxu0
        %v5530 = vadd.f32 %v5386, %v5529
        %v5531 = vpop.f32.mrb[0].mxu0
        %5532 = vmatprep.mubr.bf16.mxu0 0
        %5533 = vmatmul.mubr.bf16.gmra.mrb[0].mxu0 %v593
        %v5534 = vpop.f32.mrb[0].mxu0
        %v5535 = vadd.f32 %v5386, %v5534
        %v5536 = vpop.f32.mrb[0].mxu0
        %v5537 = vpop.f32.mrb[0].mxu0
        %v5538 = vadd.f32 %v5386, %v5537
        %v5539 = vpop.f32.mrb[0].mxu0
        %5540 = vmatprep.mubr.bf16.mxu0 0
        %5541 = vmatmul.mubr.bf16.gmra.mrb[0].mxu0 %v605
        %v5542 = vpop.f32.mrb[0].mxu0
        %v5543 = vadd.f32 %v5386, %v5542
        %v5544 = vpop.f32.mrb[0].mxu0
        %v5545 = vpop.f32.mrb[0].mxu0
        %v5546 = vadd.f32 %v5386, %v5545
        %v5547 = vpop.f32.mrb[0].mxu0
        %5548 = vmatprep.mubr.bf16.mxu0 0
        %5549 = vmatmul.mubr.bf16.gmra.mrb[0].mxu0 %v617
        %v5550 = vpop.f32.mrb[0].mxu0
        %v5551 = vadd.f32 %v5386, %v5550
        %v5552 = vpop.f32.mrb[0].mxu0
        %v5553 = vpop.f32.mrb[0].mxu0
        %v5554 = vadd.f32 %v5386, %v5553
        %v5555 = vpop.f32.mrb[0].mxu0
        %5556 = vmatprep.mubr.bf16.mxu0 0
        %5557 = vmatmul.mubr.bf16.gmra.mrb[0].mxu0 %v629
        %v5558 = vpop.f32.mrb[0].mxu0
        %v5559 = vadd.f32 %v5386, %v5558
        %v5560 = vpop.f32.mrb[0].mxu0
        %v5561 = vpop.f32.mrb[0].mxu0
        %v5562 = vadd.f32 %v5386, %v5561
        %v5563 = vpop.f32.mrb[0].mxu0
        %5564 = vmatprep.mubr.bf16.mxu0 0
        %5565 = vmatmul.mubr.bf16.gmra.mrb[0].mxu0 %v641
        %v5566 = vpop.f32.mrb[0].mxu0
        %v5567 = vadd.f32 %v5386, %v5566
        %v5568 = vpop.f32.mrb[0].mxu0
        %v5569 = vpop.f32.mrb[0].mxu0
        %v5570 = vadd.f32 %v5386, %v5569
        %v5571 = vpop.f32.mrb[0].mxu0
        %5572 = vmatprep.mubr.bf16.mxu0 0
        %5573 = vmatmul.mubr.bf16.gmra.mrb[0].mxu0 %v653
        %v5574 = vpop.f32.mrb[0].mxu0
        %v5575 = vadd.f32 %v5386, %v5574
        %v5576 = vpop.f32.mrb[0].mxu0
        %v5577 = vpop.f32.mrb[0].mxu0
        %v5578 = vadd.f32 %v5386, %v5577
        %v5579 = vpop.f32.mrb[0].mxu0
        %5580 = vmatprep.mubr.bf16.mxu0 0
        %5581 = vmatmul.mubr.bf16.gmra.mrb[0].mxu0 %v665
        %v5582 = vpop.f32.mrb[0].mxu0
        %v5583 = vadd.f32 %v5386, %v5582
        %v5584 = vpop.f32.mrb[0].mxu0
        %v5585 = vpop.f32.mrb[0].mxu0
        %v5586 = vadd.f32 %v5386, %v5585
        %v5587 = vpop.f32.mrb[0].mxu0
        %5588 = vmatprep.mubr.bf16.mxu0 0
        %5589 = vmatmul.mubr.bf16.gmra.mrb[0].mxu0 %v677
        %v5590 = vpop.f32.mrb[0].mxu0
        %v5591 = vadd.f32 %v5386, %v5590
        %v5592 = vpop.f32.mrb[0].mxu0
        %v5593 = vpop.f32.mrb[0].mxu0
        %v5594 = vadd.f32 %v5386, %v5593
        %v5595 = vpop.f32.mrb[0].mxu0
        %5596 = vdwg.mxu0
        %v5597 = vadd.f32 %v5333, %v5471
        %v5598 = vadd.f32 %v5334, %v5474
        %v5599 = vadd.f32 %v5335, %v5479
        %v5600 = vadd.f32 %v5336, %v5482
        %v5601 = vadd.f32 %v5337, %v5487
        %v5602 = vadd.f32 %v5338, %v5490
        %v5603 = vadd.f32 %v5339, %v5495
        %v5604 = vadd.f32 %v5340, %v5498
        %v5605 = vadd.f32 %v5341, %v5503
        %v5606 = vadd.f32 %v5342, %v5506
        %v5607 = vadd.f32 %v5343, %v5511
        %v5608 = vadd.f32 %v5344, %v5514
        %v5609 = vadd.f32 %v5345, %v5519
        %v5610 = vadd.f32 %v5346, %v5522
        %v5611 = vadd.f32 %v5347, %v5527
        %v5612 = vadd.f32 %v5348, %v5530
        %v5613 = vadd.f32 %v5349, %v5535
        %v5614 = vadd.f32 %v5350, %v5538
        %v5615 = vadd.f32 %v5351, %v5543
        %v5616 = vadd.f32 %v5352, %v5546
        %v5617 = vadd.f32 %v5353, %v5551
        %v5618 = vadd.f32 %v5354, %v5554
        %v5619 = vadd.f32 %v5355, %v5559
        %v5620 = vadd.f32 %v5356, %v5562
        %v5621 = vadd.f32 %v5357, %v5567
        %v5622 = vadd.f32 %v5358, %v5570
        %v5623 = vadd.f32 %v5359, %v5575
        %v5624 = vadd.f32 %v5360, %v5578
        %v5625 = vadd.f32 %v5361, %v5583
        %v5626 = vadd.f32 %v5362, %v5586
        %v5627 = vadd.f32 %v5363, %v5591
        %v5628 = vadd.f32 %v5364, %v5594
        %v5629 = vmax.f32 %v5597, 0.0
        %v5630 = vmax.f32 %v5598, 0.0
        %v5631 = vmax.f32 %v5599, 0.0
        %v5632 = vmax.f32 %v5600, 0.0
        %v5633 = vmax.f32 %v5601, 0.0
        %v5634 = vmax.f32 %v5602, 0.0
        %v5635 = vmax.f32 %v5603, 0.0
        %v5636 = vmax.f32 %v5604, 0.0
        %v5637 = vmax.f32 %v5605, 0.0
        %v5638 = vmax.f32 %v5606, 0.0
        %v5639 = vmax.f32 %v5607, 0.0
        %v5640 = vmax.f32 %v5608, 0.0
        %v5641 = vmax.f32 %v5609, 0.0
        %v5642 = vmax.f32 %v5610, 0.0
        %v5643 = vmax.f32 %v5611, 0.0
        %v5644 = vmax.f32 %v5612, 0.0
        %v5645 = vmax.f32 %v5613, 0.0
        %v5646 = vmax.f32 %v5614, 0.0
        %v5647 = vmax.f32 %v5615, 0.0
        %v5648 = vmax.f32 %v5616, 0.0
        %v5649 = vmax.f32 %v5617, 0.0
        %v5650 = vmax.f32 %v5618, 0.0
        %v5651 = vmax.f32 %v5619, 0.0
        %v5652 = vmax.f32 %v5620, 0.0
        %v5653 = vmax.f32 %v5621, 0.0
        %v5654 = vmax.f32 %v5622, 0.0
        %v5655 = vmax.f32 %v5623, 0.0
        %v5656 = vmax.f32 %v5624, 0.0
        %v5657 = vmax.f32 %v5625, 0.0
        %v5658 = vmax.f32 %v5626, 0.0
        %v5659 = vmax.f32 %v5627, 0.0
        %v5660 = vmax.f32 %v5628, 0.0
        %5661 = vst [vmem:[%s340] sm:$0xff] %v5629
        %5662 = vst [vmem:[%s340 + $0x8] sm:$0xff] %v5630
        %5663 = vst [vmem:[%s340 + $0x10] sm:$0xff] %v5631
        %5664 = vst [vmem:[%s340 + $0x18] sm:$0xff] %v5632
        %5665 = vst [vmem:[%s340 + $0x20] sm:$0xff] %v5633
        %5666 = vst [vmem:[%s340 + $0x28] sm:$0xff] %v5634
        %5667 = vst [vmem:[%s340 + $0x30] sm:$0xff] %v5635
        %5668 = vst [vmem:[%s340 + $0x38] sm:$0xff] %v5636
        %5669 = vst [vmem:[%s340 + $0x40] sm:$0xff] %v5637
        %5670 = vst [vmem:[%s340 + $0x48] sm:$0xff] %v5638
        %5671 = vst [vmem:[%s340 + $0x50] sm:$0xff] %v5639
        %5672 = vst [vmem:[%s340 + $0x58] sm:$0xff] %v5640
        %5673 = vst [vmem:[%s340 + $0x60] sm:$0xff] %v5641
        %5674 = vst [vmem:[%s340 + $0x68] sm:$0xff] %v5642
        %5675 = vst [vmem:[%s340 + $0x70] sm:$0xff] %v5643
        %5676 = vst [vmem:[%s340 + $0x78] sm:$0xff] %v5644
        %5677 = vst [vmem:[%s340 + $0x80] sm:$0xff] %v5645
        %5678 = vst [vmem:[%s340 + $0x88] sm:$0xff] %v5646
        %5679 = vst [vmem:[%s340 + $0x90] sm:$0xff] %v5647
        %5680 = vst [vmem:[%s340 + $0x98] sm:$0xff] %v5648
        %5681 = vst [vmem:[%s340 + $0xa0] sm:$0xff] %v5649
        %5682 = vst [vmem:[%s340 + $0xa8] sm:$0xff] %v5650
        %5683 = vst [vmem:[%s340 + $0xb0] sm:$0xff] %v5651
        %5684 = vst [vmem:[%s340 + $0xb8] sm:$0xff] %v5652
        %5685 = vst [vmem:[%s340 + $0xc0] sm:$0xff] %v5653
        %5686 = vst [vmem:[%s340 + $0xc8] sm:$0xff] %v5654
        %5687 = vst [vmem:[%s340 + $0xd0] sm:$0xff] %v5655
        %5688 = vst [vmem:[%s340 + $0xd8] sm:$0xff] %v5656
        %5689 = vst [vmem:[%s340 + $0xe0] sm:$0xff] %v5657
        %5690 = vst [vmem:[%s340 + $0xe8] sm:$0xff] %v5658
        %5691 = vst [vmem:[%s340 + $0xf0] sm:$0xff] %v5659
        %5692 = vst [vmem:[%s340 + $0xf8] sm:$0xff] %v5660
        %s5693 = sand.u32 %s186, 1
        %s5694 = scalar_lea.sflag [#allocation5], %s5693
        %s5695 = sand.u32 %s186, 1
        %s5696 = smul.addr %s5695, 256
        %s5697 = scalar_lea.vmem [#allocation11], %s5696
        // Predicated region
        $region65: #{tpu_custom_call.1} parent=47 // pred_check
          %p5698 = pneg %p196
        $region66: #{tpu_custom_call.1} parent=47 // pred_check_branch
          %5700 = sbr.rel (%p5698) target = $region68
        $region67: #{tpu_custom_call.1} parent=47 // pred_region
          %s5702 = ssub.s32 4096, 4096
          %5703 = vsyncadd %s5694, %s5702
          %s5704 = smul.addr %s26, 32
          %s5705 = smul.addr %s5704, 128
          %s5706 = scalar_lea.hbm %s7, %s5705
          %s5707 = sshll.u32 %s5697, 4
          %s5708 = int_to_ptr.vmem [resolvable:$true] %s5707
          %5713 = dma.vmem_to_hbm [thread:$0]  %s5708, 4096, %s5706, %s5694, 128, 128, 8
        $region68: #{tpu_custom_call.1} parent=47 // pred_fallthru
          _
      $region48: #{tpu_custom_call.1} parent=5 // pred_fallthru
        _
      %p5714 = scmp.le.s32.totalorder 2, %s21
      // Predicated region
      $region69: #{tpu_custom_call.1} parent=5 // pred_check
        %p5715 = pneg %p5714
      $region70: #{tpu_custom_call.1} parent=5 // pred_check_branch
        %5717 = sbr.rel (%p5715) target = $region72
      $region71: #{tpu_custom_call.1} parent=5 // pred_region
        %s5718 = ssub.s32 %s21, 2
        // Predicated region
        $region73: #{tpu_custom_call.1} parent=71 // pred_check
          %p5719 = pneg %p202
        $region74: #{tpu_custom_call.1} parent=71 // pred_check_branch
          %5721 = sbr.rel (%p5719) target = $region76
        $region75: #{tpu_custom_call.1} parent=71 // pred_region
          %s5722 = sand.u32 %s187, 1
          %s5723 = scalar_lea.sflag [#allocation5], %s5722
          %s5724 = sand.u32 %s187, 1
          %s5725 = smul.addr %s5724, 256
          %s5726 = scalar_lea.vmem [#allocation11], %s5725
          %5727 = dma.done %s5723, 4096
        $region76: #{tpu_custom_call.1} parent=71 // pred_fallthru
          _
      $region72: #{tpu_custom_call.1} parent=5 // pred_fallthru
        _
    $region6: #{tpu_custom_call.1} parent=1 // loop_footer
      %s25 = sadd.s32 1, %s21
    $region7: #{tpu_custom_call.1} parent=1 // loop_footer_branch
      %20 = sbr.rel target = $region3
    $region8: #{tpu_custom_call.1} parent=1 // loop_exit
      _
    %5728 = vsyncpa [#allocation4], 1
    %s5729 = scalar_lea.sflag [#allocation4], 1
    %5730 = vsyncpa %s5729, 1
    %5731 = vsyncpa [#allocation7], 1
    %5732 = vsyncpa [#allocation10], 1
    %5733 = vsyncpa [#allocation5], 1
    %s5734 = scalar_lea.sflag [#allocation5], 1
    %5735 = vsyncpa %s5734, 1

</llo_original>
